<compile_context>
chip_gen: v5e
topology: v5e:2x2
jax: 0.10.0
libtpu: 0.0.40
codegen_flags: <defaults>
</compile_context>

<pallas_src>
import functools

import jax
import jax.numpy as jnp
from jax.experimental import pallas as pl
from jax.experimental.pallas import tpu as pltpu

D_IN, D_HID, D_OUT = 768, 1024, 512


def mlp_kernel(x_ref, w1_ref, b1_ref, w2_ref, b2_ref, o_ref):
    # Fused fc1 -> relu -> fc2 -> relu on one batch tile.
    # bf16 operands into the MXU, f32 accumulation, f32 epilogue.
    x = x_ref[...].astype(jnp.bfloat16)                        # (TB, 768)
    h = jnp.dot(x, w1_ref[...], preferred_element_type=jnp.float32)
    h = jnp.maximum(h + b1_ref[...], 0.0)                      # (TB, 1024) f32
    y = jnp.dot(h.astype(jnp.bfloat16), w2_ref[...],
                preferred_element_type=jnp.float32)
    y = jnp.maximum(y + b2_ref[...], 0.0)                      # (TB, 512) f32
    o_ref[...] = y.astype(o_ref.dtype)


def _round_up(n, m):
    return -(-n // m) * m


def _vmem_limit_bytes(tb, x_itemsize, out_itemsize):
    # Double-buffered streamed tiles + resident bf16 weights + f32 scratch
    # for the (tb, 1024) intermediate, plus headroom.  Never below the 32 MiB
    # default scoped limit, and well under v7x's 64 MiB per-core VMEM.
    weights = 2 * 2 * (D_IN * D_HID + D_HID * D_OUT)   # bf16, double-buffered
    biases = 2 * 4 * (D_HID + D_OUT)
    x_tiles = 2 * tb * D_IN * x_itemsize
    o_tiles = 2 * tb * D_OUT * out_itemsize
    scratch = 4 * tb * D_HID * 4                       # h (f32) + bf16 copies
    est = weights + biases + x_tiles + o_tiles + scratch + (8 << 20)
    return max(est, 32 << 20)


@functools.partial(jax.jit, static_argnames=("tb", "out_dtype"))
def _mlp_pallas(x, w1, b1, w2, b2, *, tb, out_dtype):
    B = x.shape[0]
    assert B % tb == 0
    grid = (B // tb,)

    flops = 2 * B * (D_IN * D_HID + D_HID * D_OUT)
    bytes_accessed = (
        x.size * x.dtype.itemsize
        + w1.size * w1.dtype.itemsize
        + w2.size * w2.dtype.itemsize
        + b1.size * b1.dtype.itemsize
        + b2.size * b2.dtype.itemsize
        + B * D_OUT * jnp.dtype(out_dtype).itemsize
    )

    return pl.pallas_call(
        mlp_kernel,
        out_shape=jax.ShapeDtypeStruct((B, D_OUT), out_dtype),
        grid_spec=pltpu.PrefetchScalarGridSpec(
            num_scalar_prefetch=0,
            grid=grid,
            in_specs=[
                pl.BlockSpec((tb, D_IN), lambda i: (i, 0)),      # x tile (streamed)
                pl.BlockSpec((D_IN, D_HID), lambda i: (0, 0)),   # W1 (resident, bf16)
                pl.BlockSpec((1, D_HID), lambda i: (0, 0)),      # b1 (f32)
                pl.BlockSpec((D_HID, D_OUT), lambda i: (0, 0)),  # W2 (resident, bf16)
                pl.BlockSpec((1, D_OUT), lambda i: (0, 0)),      # b2 (f32)
            ],
            out_specs=pl.BlockSpec((tb, D_OUT), lambda i: (i, 0)),
        ),
        compiler_params=pltpu.CompilerParams(
            dimension_semantics=("parallel",),
            vmem_limit_bytes=_vmem_limit_bytes(
                tb, x.dtype.itemsize, jnp.dtype(out_dtype).itemsize),
        ),
        cost_estimate=pl.CostEstimate(
            flops=flops, transcendentals=0, bytes_accessed=bytes_accessed),
    )(x, w1, b1, w2, b2)


def textual_mlp_wo_cls_head(x, w1, b1, w2, b2, *, tb=None, out_dtype=jnp.float32):
    """relu(relu(x @ w1 + b1) @ w2 + b2) with w1/w2 stored as (in, out)."""
    B = x.shape[0]
    if tb is None:
        # Tiny batches: one un-tiled block (no per-step pipeline overhead).
        # Large batches: 256-row tiles (multiple of 128/256 for the MXU) with
        # >= 2 grid steps so both v7x TensorCores get work.
        tb = _round_up(max(B, 8), 8) if B <= 256 else 256
    padded_b = _round_up(B, tb)
    if padded_b != B:
        x = jnp.pad(x, ((0, padded_b - B), (0, 0)))
    out = _mlp_pallas(
        x.astype(jnp.float32),
        w1.astype(jnp.bfloat16),
        jnp.asarray(b1, jnp.float32).reshape(1, D_HID),
        w2.astype(jnp.bfloat16),
        jnp.asarray(b2, jnp.float32).reshape(1, D_OUT),
        tb=tb,
        out_dtype=out_dtype,
    )
    return out[:B]


def init_params(key):
    # Deterministic synthetic init (PyTorch-Linear-style uniform bounds).
    k1, k2, k3, k4 = jax.random.split(key, 4)
    bound1 = 1.0 / (D_IN ** 0.5)
    bound2 = 1.0 / (D_HID ** 0.5)
    w1 = jax.random.uniform(k1, (D_IN, D_HID), jnp.float32, -bound1, bound1)
    b1 = jax.random.uniform(k2, (D_HID,), jnp.float32, -bound1, bound1)
    w2 = jax.random.uniform(k3, (D_HID, D_OUT), jnp.float32, -bound2, bound2)
    b2 = jax.random.uniform(k4, (D_OUT,), jnp.float32, -bound2, bound2)
    return w1, b1, w2, b2


def _reference_f32(x, w1, b1, w2, b2):
    h = jnp.maximum(x @ w1 + b1.reshape(1, -1), 0.0)
    return jnp.maximum(h @ w2 + b2.reshape(1, -1), 0.0)


def _reference_bf16(x, w1, b1, w2, b2):
    # Same bf16-operand / f32-accumulate path the kernel uses.
    h = jnp.dot(x.astype(jnp.bfloat16), w1.astype(jnp.bfloat16),
                preferred_element_type=jnp.float32) + b1.reshape(1, -1)
    h = jnp.maximum(h, 0.0)
    y = jnp.dot(h.astype(jnp.bfloat16), w2.astype(jnp.bfloat16),
                preferred_element_type=jnp.float32) + b2.reshape(1, -1)
    return jnp.maximum(y, 0.0)


if __name__ == "__main__":
    key = jax.random.PRNGKey(0)
    kx, kp = jax.random.split(key)
    w1, b1, w2, b2 = init_params(kp)

    # Small batch: single un-tiled block (grid of length 1, no tiling overhead).
    x_small = jax.random.normal(kx, (8, D_IN), jnp.float32)
    out_small = jax.block_until_ready(
        textual_mlp_wo_cls_head(x_small, w1, b1, w2, b2))
    assert out_small.shape == (8, D_OUT)
    assert out_small.dtype == jnp.float32
    assert jnp.allclose(out_small, _reference_bf16(x_small, w1, b1, w2, b2),
                        atol=1e-2, rtol=1e-2)
    assert jnp.allclose(out_small, _reference_f32(x_small, w1, b1, w2, b2),
                        atol=1e-1, rtol=1e-1)

    # Ragged larger batch: 256-row tiles, zero-padded batch, 2 parallel
    # grid steps (exercises the megacore-friendly production path).
    x_big = jax.random.normal(kx, (300, D_IN), jnp.float32)
    out_big = jax.block_until_ready(
        textual_mlp_wo_cls_head(x_big, w1, b1, w2, b2))
    assert out_big.shape == (300, D_OUT)
    assert jnp.allclose(out_big, _reference_bf16(x_big, w1, b1, w2, b2),
                        atol=1e-2, rtol=1e-2)

    print("KERNEL_OK")
</pallas_src>

<mosaic_0001>
module attributes {stable_mosaic.version = 11 : i64} {
  func.func @mlp_kernel(%arg0: i32, %arg1: memref<8x768xf32, #tpu.memory_space<vmem>>, %arg2: memref<768x1024xbf16, #tpu.memory_space<vmem>>, %arg3: memref<1x1024xf32, #tpu.memory_space<vmem>>, %arg4: memref<1024x512xbf16, #tpu.memory_space<vmem>>, %arg5: memref<1x512xf32, #tpu.memory_space<vmem>>, %arg6: memref<8x512xf32, #tpu.memory_space<vmem>>) attributes {dimension_semantics = [#tpu.dimension_semantics<parallel>], iteration_bounds = array<i64: 1>, scalar_prefetch = 0 : i64, scratch_operands = 0 : i64, tpu.core_type = #tpu.core_type<tc>, window_params = [{transform_indices = @transform_0, window_bounds = array<i64: 8, 768>}, {pipeline_mode = #tpu.pipeline_mode<synchronous>, transform_indices = @transform_1, window_bounds = array<i64: 768, 1024>}, {pipeline_mode = #tpu.pipeline_mode<synchronous>, transform_indices = @transform_2, window_bounds = array<i64: 1, 1024>}, {pipeline_mode = #tpu.pipeline_mode<synchronous>, transform_indices = @transform_3, window_bounds = array<i64: 1024, 512>}, {pipeline_mode = #tpu.pipeline_mode<synchronous>, transform_indices = @transform_4, window_bounds = array<i64: 1, 512>}, {transform_indices = @transform_5, window_bounds = array<i64: 8, 512>}]} {
    %c0 = arith.constant 0 : index
    %c0_0 = arith.constant 0 : index
    %0 = vector.load %arg1[%c0, %c0_0] : memref<8x768xf32, #tpu.memory_space<vmem>>, vector<8x768xf32>
    %1 = arith.truncf %0 : vector<8x768xf32> to vector<8x768xbf16>
    %c0_1 = arith.constant 0 : index
    %c0_2 = arith.constant 0 : index
    %2 = vector.load %arg2[%c0_1, %c0_2] : memref<768x1024xbf16, #tpu.memory_space<vmem>>, vector<768x1024xbf16>
    %cst = arith.constant dense<0.000000e+00> : vector<8x1024xf32>
    %3 = tpu.matmul %1, %2, %cst {dimension_numbers = #tpu.dot_dimension_numbers<[1], [0], [0], [1], [0, 0, 1, 1], [], []>} : vector<8x768xbf16>, vector<768x1024xbf16>, vector<8x1024xf32> -> vector<8x1024xf32>
    %c0_3 = arith.constant 0 : index
    %c0_4 = arith.constant 0 : index
    %4 = vector.load %arg3[%c0_3, %c0_4] : memref<1x1024xf32, #tpu.memory_space<vmem>>, vector<1x1024xf32>
    %5 = vector.broadcast %4 : vector<1x1024xf32> to vector<8x1024xf32>
    %6 = arith.addf %3, %5 : vector<8x1024xf32>
    %cst_5 = arith.constant 0.000000e+00 : f32
    %7 = vector.broadcast %cst_5 : f32 to vector<8x1024xf32>
    %8 = arith.maximumf %6, %7 : vector<8x1024xf32>
    %9 = arith.truncf %8 : vector<8x1024xf32> to vector<8x1024xbf16>
    %c0_6 = arith.constant 0 : index
    %c0_7 = arith.constant 0 : index
    %10 = vector.load %arg4[%c0_6, %c0_7] : memref<1024x512xbf16, #tpu.memory_space<vmem>>, vector<1024x512xbf16>
    %cst_8 = arith.constant dense<0.000000e+00> : vector<8x512xf32>
    %11 = tpu.matmul %9, %10, %cst_8 {dimension_numbers = #tpu.dot_dimension_numbers<[1], [0], [0], [1], [0, 0, 1, 1], [], []>} : vector<8x1024xbf16>, vector<1024x512xbf16>, vector<8x512xf32> -> vector<8x512xf32>
    %c0_9 = arith.constant 0 : index
    %c0_10 = arith.constant 0 : index
    %12 = vector.load %arg5[%c0_9, %c0_10] : memref<1x512xf32, #tpu.memory_space<vmem>>, vector<1x512xf32>
    %13 = vector.broadcast %12 : vector<1x512xf32> to vector<8x512xf32>
    %14 = arith.addf %11, %13 : vector<8x512xf32>
    %cst_11 = arith.constant 0.000000e+00 : f32
    %15 = vector.broadcast %cst_11 : f32 to vector<8x512xf32>
    %16 = arith.maximumf %14, %15 : vector<8x512xf32>
    %c0_12 = arith.constant 0 : index
    %c0_13 = arith.constant 0 : index
    %17 = vector.load %arg6[%c0_12, %c0_13] : memref<8x512xf32, #tpu.memory_space<vmem>>, vector<8x512xf32>
    tpu.vector_store %arg6[%c0_12, %c0_13], %16 {strides = array<i32>} : memref<8x512xf32, #tpu.memory_space<vmem>>, vector<8x512xf32>,
    return
  }
  func.func @transform_0(%arg0: i32) -> (i32, i32) {
    %c0_i32 = arith.constant 0 : i32
    %c0_i32_0 = arith.constant 0 : i32
    return %arg0, %c0_i32 : i32, i32
  }
  func.func @transform_1(%arg0: i32) -> (i32, i32) {
    %c0_i32 = arith.constant 0 : i32
    %c0_i32_0 = arith.constant 0 : i32
    %c0_i32_1 = arith.constant 0 : i32
    return %c0_i32, %c0_i32_0 : i32, i32
  }
  func.func @transform_2(%arg0: i32) -> (i32, i32) {
    %c0_i32 = arith.constant 0 : i32
    %c0_i32_0 = arith.constant 0 : i32
    %c0_i32_1 = arith.constant 0 : i32
    return %c0_i32, %c0_i32_0 : i32, i32
  }
  func.func @transform_3(%arg0: i32) -> (i32, i32) {
    %c0_i32 = arith.constant 0 : i32
    %c0_i32_0 = arith.constant 0 : i32
    %c0_i32_1 = arith.constant 0 : i32
    return %c0_i32, %c0_i32_0 : i32, i32
  }
  func.func @transform_4(%arg0: i32) -> (i32, i32) {
    %c0_i32 = arith.constant 0 : i32
    %c0_i32_0 = arith.constant 0 : i32
    %c0_i32_1 = arith.constant 0 : i32
    return %c0_i32, %c0_i32_0 : i32, i32
  }
  func.func @transform_5(%arg0: i32) -> (i32, i32) {
    %c0_i32 = arith.constant 0 : i32
    %c0_i32_0 = arith.constant 0 : i32
    return %arg0, %c0_i32 : i32, i32
  }
}

</mosaic_0001>

<llo_original>
// kernel: _mlp_pallas.1
$region0: #{_mlp_pallas.1}
  #allocation0 [shape = 'u32[]', space=smem, size = 0x4, offset = 0x4, fixed_abs, tag = 'smem constant byte address 0x4 - core index']
  #allocation1 [shape = 'u32[72,128]{1,0:T(1,128)}', space=vmem, size = 0x9000, scoped, tag = 'internal scratch']
  %s0 = inlined_call_operand.hbm [shape: f32[8,768], index: 0, kind: input, shape index: {}]
  %s1 = inlined_call_operand.hbm [shape: bf16[768,1024], index: 1, kind: input, shape index: {}]
  %s2 = inlined_call_operand.hbm [shape: f32[1,1024], index: 2, kind: input, shape index: {}]
  %s3 = inlined_call_operand.hbm [shape: bf16[1024,512], index: 3, kind: input, shape index: {}]
  %s4 = inlined_call_operand.hbm [shape: f32[1,512], index: 4, kind: input, shape index: {}]
  %s5 = inlined_call_operand.hbm [shape: f32[8,512], index: 5, kind: output, shape index: {}]
  %s6 = sld [smem:[#allocation0]]
  $region50: #{_mlp_pallas.1} parent=0
    _
  %s8 = ssub.s32 1, %s6
  %s9 = scalar_select 0, %s8, %s6
  $region1: #{_mlp_pallas.1} parent=0
    #allocation2 [shape = 'u8[24576]{0}', space=vmem, size = 0x6000, scoped, tag = 'input window, operand 0, single buffered']
    #allocation3 [shape = 's32[1]{0}', space=sflag, size = 0x4, scoped, tag = 'scoped memory for _mlp_pallas.1']
    #allocation4 [shape = 's32[1]{0}', space=sflag, size = 0x4, scoped, tag = 'scoped memory for _mlp_pallas.1']
    #allocation5 [shape = 'u8[1572864]{0}', space=vmem, size = 0x180000, scoped, tag = 'input window, operand 1, single buffered']
    #allocation6 [shape = 's32[1]{0}', space=sflag, size = 0x4, scoped, tag = 'scoped memory for _mlp_pallas.1']
    #allocation7 [shape = 'u8[4096]{0}', space=vmem, size = 0x1000, scoped, tag = 'input window, operand 2, single buffered']
    #allocation8 [shape = 'u8[1048576]{0}', space=vmem, size = 0x100000, scoped, tag = 'input window, operand 3, single buffered']
    #allocation9 [shape = 's32[1]{0}', space=sflag, size = 0x4, scoped, tag = 'scoped memory for _mlp_pallas.1']
    #allocation10 [shape = 'u8[2048]{0}', space=vmem, size = 0x800, scoped, tag = 'input window, operand 4, single buffered']
    #allocation11 [shape = 'u8[16384]{0}', space=vmem, size = 0x4000, scoped, tag = 'output window, operand 0, single buffered']
    %10 = vsyncpa [#allocation3], 0
    %11 = vsyncpa [#allocation6], 0
    %12 = vsyncpa [#allocation9], 0
    %13 = vsyncpa [#allocation4], 0
    // Predicated region
    $region2: #{_mlp_pallas.1} parent=1 // pred_check
      _
    $region3: #{_mlp_pallas.1} parent=1 // pred_check_branch
      %15 = sbr.rel (0) target = $region5
    $region4: #{_mlp_pallas.1} parent=1 // pred_region
      %17 = vsyncadd [#allocation3], 0
      %s19 = sshll.u32 %s0, 4
      %s20 = int_to_ptr.hbm [resolvable:$true] %s19
      %s21 = sshll.u32 [#allocation2], 4
      %s22 = int_to_ptr.vmem [resolvable:$true] %s21
      %24 = dma.hbm_to_vmem [thread:$0]  %s20, 768, %s22, [#allocation3]
    $region5: #{_mlp_pallas.1} parent=1 // pred_fallthru
      _
    // Predicated region
    $region6: #{_mlp_pallas.1} parent=1 // pred_check
      _
    $region7: #{_mlp_pallas.1} parent=1 // pred_check_branch
      %26 = sbr.rel (0) target = $region9
    $region8: #{_mlp_pallas.1} parent=1 // pred_region
      %28 = vsyncadd [#allocation6], 0
      %s29 = sshll.u32 %s1, 4
      %s30 = int_to_ptr.hbm [resolvable:$true] %s29
      %s31 = sshll.u32 [#allocation5], 4
      %s32 = int_to_ptr.vmem [resolvable:$true] %s31
      %37 = dma.hbm_to_vmem [thread:$0]  %s30, 49152, %s32, [#allocation6], 512, 512, 32
    $region9: #{_mlp_pallas.1} parent=1 // pred_fallthru
      _
    // Predicated region
    $region10: #{_mlp_pallas.1} parent=1 // pred_check
      _
    $region11: #{_mlp_pallas.1} parent=1 // pred_check_branch
      %39 = sbr.rel (0) target = $region13
    $region12: #{_mlp_pallas.1} parent=1 // pred_region
      %41 = vsyncadd [#allocation6], 0
      %s43 = sshll.u32 %s2, 4
      %s44 = int_to_ptr.hbm [resolvable:$true] %s43
      %s45 = sshll.u32 [#allocation7], 4
      %s46 = int_to_ptr.vmem [resolvable:$true] %s45
      %48 = dma.hbm_to_vmem [thread:$0]  %s44, 128, %s46, [#allocation6]
    $region13: #{_mlp_pallas.1} parent=1 // pred_fallthru
      _
    // Predicated region
    $region14: #{_mlp_pallas.1} parent=1 // pred_check
      _
    $region15: #{_mlp_pallas.1} parent=1 // pred_check_branch
      %50 = sbr.rel (0) target = $region17
    $region16: #{_mlp_pallas.1} parent=1 // pred_region
      %52 = vsyncadd [#allocation9], 0
      %s53 = sshll.u32 %s3, 4
      %s54 = int_to_ptr.hbm [resolvable:$true] %s53
      %s55 = sshll.u32 [#allocation8], 4
      %s56 = int_to_ptr.vmem [resolvable:$true] %s55
      %61 = dma.hbm_to_vmem [thread:$0]  %s54, 32768, %s56, [#allocation9], 256, 256, 16
    $region17: #{_mlp_pallas.1} parent=1 // pred_fallthru
      _
    // Predicated region
    $region18: #{_mlp_pallas.1} parent=1 // pred_check
      _
    $region19: #{_mlp_pallas.1} parent=1 // pred_check_branch
      %63 = sbr.rel (0) target = $region21
    $region20: #{_mlp_pallas.1} parent=1 // pred_region
      %65 = vsyncadd [#allocation9], 0
      %s67 = sshll.u32 %s4, 4
      %s68 = int_to_ptr.hbm [resolvable:$true] %s67
      %s69 = sshll.u32 [#allocation10], 4
      %s70 = int_to_ptr.vmem [resolvable:$true] %s69
      %72 = dma.hbm_to_vmem [thread:$0]  %s68, 64, %s70, [#allocation9]
    $region21: #{_mlp_pallas.1} parent=1 // pred_fallthru
      _
    // Predicated region
    $region22: #{_mlp_pallas.1} parent=1 // pred_check
      _
    $region23: #{_mlp_pallas.1} parent=1 // pred_check_branch
      %74 = sbr.rel (0) target = $region25
    $region24: #{_mlp_pallas.1} parent=1 // pred_region
      %76 = dma.done [#allocation3], 768
    $region25: #{_mlp_pallas.1} parent=1 // pred_fallthru
      _
    // Predicated region
    $region26: #{_mlp_pallas.1} parent=1 // pred_check
      _
    $region27: #{_mlp_pallas.1} parent=1 // pred_check_branch
      %78 = sbr.rel (0) target = $region29
    $region28: #{_mlp_pallas.1} parent=1 // pred_region
      %80 = dma.done [#allocation6], 49152
    $region29: #{_mlp_pallas.1} parent=1 // pred_fallthru
      _
    // Predicated region
    $region30: #{_mlp_pallas.1} parent=1 // pred_check
      _
    $region31: #{_mlp_pallas.1} parent=1 // pred_check_branch
      %82 = sbr.rel (0) target = $region33
    $region32: #{_mlp_pallas.1} parent=1 // pred_region
      %84 = dma.done [#allocation6], 128
    $region33: #{_mlp_pallas.1} parent=1 // pred_fallthru
      _
    // Predicated region
    $region34: #{_mlp_pallas.1} parent=1 // pred_check
      _
    $region35: #{_mlp_pallas.1} parent=1 // pred_check_branch
      %86 = sbr.rel (0) target = $region37
    $region36: #{_mlp_pallas.1} parent=1 // pred_region
      %88 = dma.done [#allocation9], 32768
    $region37: #{_mlp_pallas.1} parent=1 // pred_fallthru
      _
    // Predicated region
    $region38: #{_mlp_pallas.1} parent=1 // pred_check
      _
    $region39: #{_mlp_pallas.1} parent=1 // pred_check_branch
      %90 = sbr.rel (0) target = $region41
    $region40: #{_mlp_pallas.1} parent=1 // pred_region
      %92 = dma.done [#allocation9], 64
    $region41: #{_mlp_pallas.1} parent=1 // pred_fallthru
      _
    %v93 = vld [vmem:[#allocation2] sm:$0xff]
    %v94 = vld [vmem:[#allocation2 + $0x8] sm:$0xff]
    %v95 = vld [vmem:[#allocation2 + $0x10] sm:$0xff]
    %v96 = vld [vmem:[#allocation2 + $0x18] sm:$0xff]
    %v97 = vld [vmem:[#allocation2 + $0x20] sm:$0xff]
    %v98 = vld [vmem:[#allocation2 + $0x28] sm:$0xff]
    %v99 = vpack.c.bf16 %v93, %v93
    %v100 = vpack.c.bf16 %v94, %v94
    %v101 = vpack.c.bf16 %v95, %v95
    %v102 = vpack.c.bf16 %v96, %v96
    %v103 = vpack.c.bf16 %v97, %v97
    %v104 = vpack.c.bf16 %v98, %v98
    %v105 = vld [vmem:[#allocation5] sm:$0xff]
    %v106 = vld [vmem:[#allocation5 + $0x8] sm:$0xff]
    %v107 = vld [vmem:[#allocation5 + $0x10] sm:$0xff]
    %v108 = vld [vmem:[#allocation5 + $0x18] sm:$0xff]
    %v109 = vld [vmem:[#allocation5 + $0x20] sm:$0xff]
    %v110 = vld [vmem:[#allocation5 + $0x28] sm:$0xff]
    %v111 = vld [vmem:[#allocation5 + $0x30] sm:$0xff]
    %v112 = vld [vmem:[#allocation5 + $0x38] sm:$0xff]
    %v113 = vld [vmem:[#allocation5 + $0x40] sm:$0xff]
    %v114 = vld [vmem:[#allocation5 + $0x48] sm:$0xff]
    %v115 = vld [vmem:[#allocation5 + $0x50] sm:$0xff]
    %v116 = vld [vmem:[#allocation5 + $0x58] sm:$0xff]
    %v117 = vld [vmem:[#allocation5 + $0x60] sm:$0xff]
    %v118 = vld [vmem:[#allocation5 + $0x68] sm:$0xff]
    %v119 = vld [vmem:[#allocation5 + $0x70] sm:$0xff]
    %v120 = vld [vmem:[#allocation5 + $0x78] sm:$0xff]
    %v121 = vld [vmem:[#allocation5 + $0x80] sm:$0xff]
    %v122 = vld [vmem:[#allocation5 + $0x88] sm:$0xff]
    %v123 = vld [vmem:[#allocation5 + $0x90] sm:$0xff]
    %v124 = vld [vmem:[#allocation5 + $0x98] sm:$0xff]
    %v125 = vld [vmem:[#allocation5 + $0xa0] sm:$0xff]
    %v126 = vld [vmem:[#allocation5 + $0xa8] sm:$0xff]
    %v127 = vld [vmem:[#allocation5 + $0xb0] sm:$0xff]
    %v128 = vld [vmem:[#allocation5 + $0xb8] sm:$0xff]
    %v129 = vld [vmem:[#allocation5 + $0xc0] sm:$0xff]
    %v130 = vld [vmem:[#allocation5 + $0xc8] sm:$0xff]
    %v131 = vld [vmem:[#allocation5 + $0xd0] sm:$0xff]
    %v132 = vld [vmem:[#allocation5 + $0xd8] sm:$0xff]
    %v133 = vld [vmem:[#allocation5 + $0xe0] sm:$0xff]
    %v134 = vld [vmem:[#allocation5 + $0xe8] sm:$0xff]
    %v135 = vld [vmem:[#allocation5 + $0xf0] sm:$0xff]
    %v136 = vld [vmem:[#allocation5 + $0xf8] sm:$0xff]
    %v137 = vld [vmem:[#allocation5 + $0x100] sm:$0xff]
    %v138 = vld [vmem:[#allocation5 + $0x108] sm:$0xff]
    %v139 = vld [vmem:[#allocation5 + $0x110] sm:$0xff]
    %v140 = vld [vmem:[#allocation5 + $0x118] sm:$0xff]
    %v141 = vld [vmem:[#allocation5 + $0x120] sm:$0xff]
    %v142 = vld [vmem:[#allocation5 + $0x128] sm:$0xff]
    %v143 = vld [vmem:[#allocation5 + $0x130] sm:$0xff]
    %v144 = vld [vmem:[#allocation5 + $0x138] sm:$0xff]
    %v145 = vld [vmem:[#allocation5 + $0x140] sm:$0xff]
    %v146 = vld [vmem:[#allocation5 + $0x148] sm:$0xff]
    %v147 = vld [vmem:[#allocation5 + $0x150] sm:$0xff]
    %v148 = vld [vmem:[#allocation5 + $0x158] sm:$0xff]
    %v149 = vld [vmem:[#allocation5 + $0x160] sm:$0xff]
    %v150 = vld [vmem:[#allocation5 + $0x168] sm:$0xff]
    %v151 = vld [vmem:[#allocation5 + $0x170] sm:$0xff]
    %v152 = vld [vmem:[#allocation5 + $0x178] sm:$0xff]
    %v153 = vld [vmem:[#allocation5 + $0x180] sm:$0xff]
    %v154 = vld [vmem:[#allocation5 + $0x188] sm:$0xff]
    %v155 = vld [vmem:[#allocation5 + $0x190] sm:$0xff]
    %v156 = vld [vmem:[#allocation5 + $0x198] sm:$0xff]
    %v157 = vld [vmem:[#allocation5 + $0x1a0] sm:$0xff]
    %v158 = vld [vmem:[#allocation5 + $0x1a8] sm:$0xff]
    %v159 = vld [vmem:[#allocation5 + $0x1b0] sm:$0xff]
    %v160 = vld [vmem:[#allocation5 + $0x1b8] sm:$0xff]
    %v161 = vld [vmem:[#allocation5 + $0x1c0] sm:$0xff]
    %v162 = vld [vmem:[#allocation5 + $0x1c8] sm:$0xff]
    %v163 = vld [vmem:[#allocation5 + $0x1d0] sm:$0xff]
    %v164 = vld [vmem:[#allocation5 + $0x1d8] sm:$0xff]
    %v165 = vld [vmem:[#allocation5 + $0x1e0] sm:$0xff]
    %v166 = vld [vmem:[#allocation5 + $0x1e8] sm:$0xff]
    %v167 = vld [vmem:[#allocation5 + $0x1f0] sm:$0xff]
    %v168 = vld [vmem:[#allocation5 + $0x1f8] sm:$0xff]
    %v169 = vld [vmem:[#allocation5 + $0x200] sm:$0xff]
    %v170 = vld [vmem:[#allocation5 + $0x208] sm:$0xff]
    %v171 = vld [vmem:[#allocation5 + $0x210] sm:$0xff]
    %v172 = vld [vmem:[#allocation5 + $0x218] sm:$0xff]
    %v173 = vld [vmem:[#allocation5 + $0x220] sm:$0xff]
    %v174 = vld [vmem:[#allocation5 + $0x228] sm:$0xff]
    %v175 = vld [vmem:[#allocation5 + $0x230] sm:$0xff]
    %v176 = vld [vmem:[#allocation5 + $0x238] sm:$0xff]
    %v177 = vld [vmem:[#allocation5 + $0x240] sm:$0xff]
    %v178 = vld [vmem:[#allocation5 + $0x248] sm:$0xff]
    %v179 = vld [vmem:[#allocation5 + $0x250] sm:$0xff]
    %v180 = vld [vmem:[#allocation5 + $0x258] sm:$0xff]
    %v181 = vld [vmem:[#allocation5 + $0x260] sm:$0xff]
    %v182 = vld [vmem:[#allocation5 + $0x268] sm:$0xff]
    %v183 = vld [vmem:[#allocation5 + $0x270] sm:$0xff]
    %v184 = vld [vmem:[#allocation5 + $0x278] sm:$0xff]
    %v185 = vld [vmem:[#allocation5 + $0x280] sm:$0xff]
    %v186 = vld [vmem:[#allocation5 + $0x288] sm:$0xff]
    %v187 = vld [vmem:[#allocation5 + $0x290] sm:$0xff]
    %v188 = vld [vmem:[#allocation5 + $0x298] sm:$0xff]
    %v189 = vld [vmem:[#allocation5 + $0x2a0] sm:$0xff]
    %v190 = vld [vmem:[#allocation5 + $0x2a8] sm:$0xff]
    %v191 = vld [vmem:[#allocation5 + $0x2b0] sm:$0xff]
    %v192 = vld [vmem:[#allocation5 + $0x2b8] sm:$0xff]
    %v193 = vld [vmem:[#allocation5 + $0x2c0] sm:$0xff]
    %v194 = vld [vmem:[#allocation5 + $0x2c8] sm:$0xff]
    %v195 = vld [vmem:[#allocation5 + $0x2d0] sm:$0xff]
    %v196 = vld [vmem:[#allocation5 + $0x2d8] sm:$0xff]
    %v197 = vld [vmem:[#allocation5 + $0x2e0] sm:$0xff]
    %v198 = vld [vmem:[#allocation5 + $0x2e8] sm:$0xff]
    %v199 = vld [vmem:[#allocation5 + $0x2f0] sm:$0xff]
    %v200 = vld [vmem:[#allocation5 + $0x2f8] sm:$0xff]
    %v201 = vld [vmem:[#allocation5 + $0x300] sm:$0xff]
    %v202 = vld [vmem:[#allocation5 + $0x308] sm:$0xff]
    %v203 = vld [vmem:[#allocation5 + $0x310] sm:$0xff]
    %v204 = vld [vmem:[#allocation5 + $0x318] sm:$0xff]
    %v205 = vld [vmem:[#allocation5 + $0x320] sm:$0xff]
    %v206 = vld [vmem:[#allocation5 + $0x328] sm:$0xff]
    %v207 = vld [vmem:[#allocation5 + $0x330] sm:$0xff]
    %v208 = vld [vmem:[#allocation5 + $0x338] sm:$0xff]
    %v209 = vld [vmem:[#allocation5 + $0x340] sm:$0xff]
    %v210 = vld [vmem:[#allocation5 + $0x348] sm:$0xff]
    %v211 = vld [vmem:[#allocation5 + $0x350] sm:$0xff]
    %v212 = vld [vmem:[#allocation5 + $0x358] sm:$0xff]
    %v213 = vld [vmem:[#allocation5 + $0x360] sm:$0xff]
    %v214 = vld [vmem:[#allocation5 + $0x368] sm:$0xff]
    %v215 = vld [vmem:[#allocation5 + $0x370] sm:$0xff]
    %v216 = vld [vmem:[#allocation5 + $0x378] sm:$0xff]
    %v217 = vld [vmem:[#allocation5 + $0x380] sm:$0xff]
    %v218 = vld [vmem:[#allocation5 + $0x388] sm:$0xff]
    %v219 = vld [vmem:[#allocation5 + $0x390] sm:$0xff]
    %v220 = vld [vmem:[#allocation5 + $0x398] sm:$0xff]
    %v221 = vld [vmem:[#allocation5 + $0x3a0] sm:$0xff]
    %v222 = vld [vmem:[#allocation5 + $0x3a8] sm:$0xff]
    %v223 = vld [vmem:[#allocation5 + $0x3b0] sm:$0xff]
    %v224 = vld [vmem:[#allocation5 + $0x3b8] sm:$0xff]
    %v225 = vld [vmem:[#allocation5 + $0x3c0] sm:$0xff]
    %v226 = vld [vmem:[#allocation5 + $0x3c8] sm:$0xff]
    %v227 = vld [vmem:[#allocation5 + $0x3d0] sm:$0xff]
    %v228 = vld [vmem:[#allocation5 + $0x3d8] sm:$0xff]
    %v229 = vld [vmem:[#allocation5 + $0x3e0] sm:$0xff]
    %v230 = vld [vmem:[#allocation5 + $0x3e8] sm:$0xff]
    %v231 = vld [vmem:[#allocation5 + $0x3f0] sm:$0xff]
    %v232 = vld [vmem:[#allocation5 + $0x3f8] sm:$0xff]
    %v233 = vld [vmem:[#allocation5 + $0x400] sm:$0xff]
    %v234 = vld [vmem:[#allocation5 + $0x408] sm:$0xff]
    %v235 = vld [vmem:[#allocation5 + $0x410] sm:$0xff]
    %v236 = vld [vmem:[#allocation5 + $0x418] sm:$0xff]
    %v237 = vld [vmem:[#allocation5 + $0x420] sm:$0xff]
    %v238 = vld [vmem:[#allocation5 + $0x428] sm:$0xff]
    %v239 = vld [vmem:[#allocation5 + $0x430] sm:$0xff]
    %v240 = vld [vmem:[#allocation5 + $0x438] sm:$0xff]
    %v241 = vld [vmem:[#allocation5 + $0x440] sm:$0xff]
    %v242 = vld [vmem:[#allocation5 + $0x448] sm:$0xff]
    %v243 = vld [vmem:[#allocation5 + $0x450] sm:$0xff]
    %v244 = vld [vmem:[#allocation5 + $0x458] sm:$0xff]
    %v245 = vld [vmem:[#allocation5 + $0x460] sm:$0xff]
    %v246 = vld [vmem:[#allocation5 + $0x468] sm:$0xff]
    %v247 = vld [vmem:[#allocation5 + $0x470] sm:$0xff]
    %v248 = vld [vmem:[#allocation5 + $0x478] sm:$0xff]
    %v249 = vld [vmem:[#allocation5 + $0x480] sm:$0xff]
    %v250 = vld [vmem:[#allocation5 + $0x488] sm:$0xff]
    %v251 = vld [vmem:[#allocation5 + $0x490] sm:$0xff]
    %v252 = vld [vmem:[#allocation5 + $0x498] sm:$0xff]
    %v253 = vld [vmem:[#allocation5 + $0x4a0] sm:$0xff]
    %v254 = vld [vmem:[#allocation5 + $0x4a8] sm:$0xff]
    %v255 = vld [vmem:[#allocation5 + $0x4b0] sm:$0xff]
    %v256 = vld [vmem:[#allocation5 + $0x4b8] sm:$0xff]
    %v257 = vld [vmem:[#allocation5 + $0x4c0] sm:$0xff]
    %v258 = vld [vmem:[#allocation5 + $0x4c8] sm:$0xff]
    %v259 = vld [vmem:[#allocation5 + $0x4d0] sm:$0xff]
    %v260 = vld [vmem:[#allocation5 + $0x4d8] sm:$0xff]
    %v261 = vld [vmem:[#allocation5 + $0x4e0] sm:$0xff]
    %v262 = vld [vmem:[#allocation5 + $0x4e8] sm:$0xff]
    %v263 = vld [vmem:[#allocation5 + $0x4f0] sm:$0xff]
    %v264 = vld [vmem:[#allocation5 + $0x4f8] sm:$0xff]
    %v265 = vld [vmem:[#allocation5 + $0x500] sm:$0xff]
    %v266 = vld [vmem:[#allocation5 + $0x508] sm:$0xff]
    %v267 = vld [vmem:[#allocation5 + $0x510] sm:$0xff]
    %v268 = vld [vmem:[#allocation5 + $0x518] sm:$0xff]
    %v269 = vld [vmem:[#allocation5 + $0x520] sm:$0xff]
    %v270 = vld [vmem:[#allocation5 + $0x528] sm:$0xff]
    %v271 = vld [vmem:[#allocation5 + $0x530] sm:$0xff]
    %v272 = vld [vmem:[#allocation5 + $0x538] sm:$0xff]
    %v273 = vld [vmem:[#allocation5 + $0x540] sm:$0xff]
    %v274 = vld [vmem:[#allocation5 + $0x548] sm:$0xff]
    %v275 = vld [vmem:[#allocation5 + $0x550] sm:$0xff]
    %v276 = vld [vmem:[#allocation5 + $0x558] sm:$0xff]
    %v277 = vld [vmem:[#allocation5 + $0x560] sm:$0xff]
    %v278 = vld [vmem:[#allocation5 + $0x568] sm:$0xff]
    %v279 = vld [vmem:[#allocation5 + $0x570] sm:$0xff]
    %v280 = vld [vmem:[#allocation5 + $0x578] sm:$0xff]
    %v281 = vld [vmem:[#allocation5 + $0x580] sm:$0xff]
    %v282 = vld [vmem:[#allocation5 + $0x588] sm:$0xff]
    %v283 = vld [vmem:[#allocation5 + $0x590] sm:$0xff]
    %v284 = vld [vmem:[#allocation5 + $0x598] sm:$0xff]
    %v285 = vld [vmem:[#allocation5 + $0x5a0] sm:$0xff]
    %v286 = vld [vmem:[#allocation5 + $0x5a8] sm:$0xff]
    %v287 = vld [vmem:[#allocation5 + $0x5b0] sm:$0xff]
    %v288 = vld [vmem:[#allocation5 + $0x5b8] sm:$0xff]
    %v289 = vld [vmem:[#allocation5 + $0x5c0] sm:$0xff]
    %v290 = vld [vmem:[#allocation5 + $0x5c8] sm:$0xff]
    %v291 = vld [vmem:[#allocation5 + $0x5d0] sm:$0xff]
    %v292 = vld [vmem:[#allocation5 + $0x5d8] sm:$0xff]
    %v293 = vld [vmem:[#allocation5 + $0x5e0] sm:$0xff]
    %v294 = vld [vmem:[#allocation5 + $0x5e8] sm:$0xff]
    %v295 = vld [vmem:[#allocation5 + $0x5f0] sm:$0xff]
    %v296 = vld [vmem:[#allocation5 + $0x5f8] sm:$0xff]
    %v297 = vld [vmem:[#allocation5 + $0x600] sm:$0xff]
    %v298 = vld [vmem:[#allocation5 + $0x608] sm:$0xff]
    %v299 = vld [vmem:[#allocation5 + $0x610] sm:$0xff]
    %v300 = vld [vmem:[#allocation5 + $0x618] sm:$0xff]
    %v301 = vld [vmem:[#allocation5 + $0x620] sm:$0xff]
    %v302 = vld [vmem:[#allocation5 + $0x628] sm:$0xff]
    %v303 = vld [vmem:[#allocation5 + $0x630] sm:$0xff]
    %v304 = vld [vmem:[#allocation5 + $0x638] sm:$0xff]
    %v305 = vld [vmem:[#allocation5 + $0x640] sm:$0xff]
    %v306 = vld [vmem:[#allocation5 + $0x648] sm:$0xff]
    %v307 = vld [vmem:[#allocation5 + $0x650] sm:$0xff]
    %v308 = vld [vmem:[#allocation5 + $0x658] sm:$0xff]
    %v309 = vld [vmem:[#allocation5 + $0x660] sm:$0xff]
    %v310 = vld [vmem:[#allocation5 + $0x668] sm:$0xff]
    %v311 = vld [vmem:[#allocation5 + $0x670] sm:$0xff]
    %v312 = vld [vmem:[#allocation5 + $0x678] sm:$0xff]
    %v313 = vld [vmem:[#allocation5 + $0x680] sm:$0xff]
    %v314 = vld [vmem:[#allocation5 + $0x688] sm:$0xff]
    %v315 = vld [vmem:[#allocation5 + $0x690] sm:$0xff]
    %v316 = vld [vmem:[#allocation5 + $0x698] sm:$0xff]
    %v317 = vld [vmem:[#allocation5 + $0x6a0] sm:$0xff]
    %v318 = vld [vmem:[#allocation5 + $0x6a8] sm:$0xff]
    %v319 = vld [vmem:[#allocation5 + $0x6b0] sm:$0xff]
    %v320 = vld [vmem:[#allocation5 + $0x6b8] sm:$0xff]
    %v321 = vld [vmem:[#allocation5 + $0x6c0] sm:$0xff]
    %v322 = vld [vmem:[#allocation5 + $0x6c8] sm:$0xff]
    %v323 = vld [vmem:[#allocation5 + $0x6d0] sm:$0xff]
    %v324 = vld [vmem:[#allocation5 + $0x6d8] sm:$0xff]
    %v325 = vld [vmem:[#allocation5 + $0x6e0] sm:$0xff]
    %v326 = vld [vmem:[#allocation5 + $0x6e8] sm:$0xff]
    %v327 = vld [vmem:[#allocation5 + $0x6f0] sm:$0xff]
    %v328 = vld [vmem:[#allocation5 + $0x6f8] sm:$0xff]
    %v329 = vld [vmem:[#allocation5 + $0x700] sm:$0xff]
    %v330 = vld [vmem:[#allocation5 + $0x708] sm:$0xff]
    %v331 = vld [vmem:[#allocation5 + $0x710] sm:$0xff]
    %v332 = vld [vmem:[#allocation5 + $0x718] sm:$0xff]
    %v333 = vld [vmem:[#allocation5 + $0x720] sm:$0xff]
    %v334 = vld [vmem:[#allocation5 + $0x728] sm:$0xff]
    %v335 = vld [vmem:[#allocation5 + $0x730] sm:$0xff]
    %v336 = vld [vmem:[#allocation5 + $0x738] sm:$0xff]
    %v337 = vld [vmem:[#allocation5 + $0x740] sm:$0xff]
    %v338 = vld [vmem:[#allocation5 + $0x748] sm:$0xff]
    %v339 = vld [vmem:[#allocation5 + $0x750] sm:$0xff]
    %v340 = vld [vmem:[#allocation5 + $0x758] sm:$0xff]
    %v341 = vld [vmem:[#allocation5 + $0x760] sm:$0xff]
    %v342 = vld [vmem:[#allocation5 + $0x768] sm:$0xff]
    %v343 = vld [vmem:[#allocation5 + $0x770] sm:$0xff]
    %v344 = vld [vmem:[#allocation5 + $0x778] sm:$0xff]
    %v345 = vld [vmem:[#allocation5 + $0x780] sm:$0xff]
    %v346 = vld [vmem:[#allocation5 + $0x788] sm:$0xff]
    %v347 = vld [vmem:[#allocation5 + $0x790] sm:$0xff]
    %v348 = vld [vmem:[#allocation5 + $0x798] sm:$0xff]
    %v349 = vld [vmem:[#allocation5 + $0x7a0] sm:$0xff]
    %v350 = vld [vmem:[#allocation5 + $0x7a8] sm:$0xff]
    %v351 = vld [vmem:[#allocation5 + $0x7b0] sm:$0xff]
    %v352 = vld [vmem:[#allocation5 + $0x7b8] sm:$0xff]
    %v353 = vld [vmem:[#allocation5 + $0x7c0] sm:$0xff]
    %v354 = vld [vmem:[#allocation5 + $0x7c8] sm:$0xff]
    %v355 = vld [vmem:[#allocation5 + $0x7d0] sm:$0xff]
    %v356 = vld [vmem:[#allocation5 + $0x7d8] sm:$0xff]
    %v357 = vld [vmem:[#allocation5 + $0x7e0] sm:$0xff]
    %v358 = vld [vmem:[#allocation5 + $0x7e8] sm:$0xff]
    %v359 = vld [vmem:[#allocation5 + $0x7f0] sm:$0xff]
    %v360 = vld [vmem:[#allocation5 + $0x7f8] sm:$0xff]
    %v361 = vld [vmem:[#allocation5 + $0x800] sm:$0xff]
    %v362 = vld [vmem:[#allocation5 + $0x808] sm:$0xff]
    %v363 = vld [vmem:[#allocation5 + $0x810] sm:$0xff]
    %v364 = vld [vmem:[#allocation5 + $0x818] sm:$0xff]
    %v365 = vld [vmem:[#allocation5 + $0x820] sm:$0xff]
    %v366 = vld [vmem:[#allocation5 + $0x828] sm:$0xff]
    %v367 = vld [vmem:[#allocation5 + $0x830] sm:$0xff]
    %v368 = vld [vmem:[#allocation5 + $0x838] sm:$0xff]
    %v369 = vld [vmem:[#allocation5 + $0x840] sm:$0xff]
    %v370 = vld [vmem:[#allocation5 + $0x848] sm:$0xff]
    %v371 = vld [vmem:[#allocation5 + $0x850] sm:$0xff]
    %v372 = vld [vmem:[#allocation5 + $0x858] sm:$0xff]
    %v373 = vld [vmem:[#allocation5 + $0x860] sm:$0xff]
    %v374 = vld [vmem:[#allocation5 + $0x868] sm:$0xff]
    %v375 = vld [vmem:[#allocation5 + $0x870] sm:$0xff]
    %v376 = vld [vmem:[#allocation5 + $0x878] sm:$0xff]
    %v377 = vld [vmem:[#allocation5 + $0x880] sm:$0xff]
    %v378 = vld [vmem:[#allocation5 + $0x888] sm:$0xff]
    %v379 = vld [vmem:[#allocation5 + $0x890] sm:$0xff]
    %v380 = vld [vmem:[#allocation5 + $0x898] sm:$0xff]
    %v381 = vld [vmem:[#allocation5 + $0x8a0] sm:$0xff]
    %v382 = vld [vmem:[#allocation5 + $0x8a8] sm:$0xff]
    %v383 = vld [vmem:[#allocation5 + $0x8b0] sm:$0xff]
    %v384 = vld [vmem:[#allocation5 + $0x8b8] sm:$0xff]
    %v385 = vld [vmem:[#allocation5 + $0x8c0] sm:$0xff]
    %v386 = vld [vmem:[#allocation5 + $0x8c8] sm:$0xff]
    %v387 = vld [vmem:[#allocation5 + $0x8d0] sm:$0xff]
    %v388 = vld [vmem:[#allocation5 + $0x8d8] sm:$0xff]
    %v389 = vld [vmem:[#allocation5 + $0x8e0] sm:$0xff]
    %v390 = vld [vmem:[#allocation5 + $0x8e8] sm:$0xff]
    %v391 = vld [vmem:[#allocation5 + $0x8f0] sm:$0xff]
    %v392 = vld [vmem:[#allocation5 + $0x8f8] sm:$0xff]
    %v393 = vld [vmem:[#allocation5 + $0x900] sm:$0xff]
    %v394 = vld [vmem:[#allocation5 + $0x908] sm:$0xff]
    %v395 = vld [vmem:[#allocation5 + $0x910] sm:$0xff]
    %v396 = vld [vmem:[#allocation5 + $0x918] sm:$0xff]
    %v397 = vld [vmem:[#allocation5 + $0x920] sm:$0xff]
    %v398 = vld [vmem:[#allocation5 + $0x928] sm:$0xff]
    %v399 = vld [vmem:[#allocation5 + $0x930] sm:$0xff]
    %v400 = vld [vmem:[#allocation5 + $0x938] sm:$0xff]
    %v401 = vld [vmem:[#allocation5 + $0x940] sm:$0xff]
    %v402 = vld [vmem:[#allocation5 + $0x948] sm:$0xff]
    %v403 = vld [vmem:[#allocation5 + $0x950] sm:$0xff]
    %v404 = vld [vmem:[#allocation5 + $0x958] sm:$0xff]
    %v405 = vld [vmem:[#allocation5 + $0x960] sm:$0xff]
    %v406 = vld [vmem:[#allocation5 + $0x968] sm:$0xff]
    %v407 = vld [vmem:[#allocation5 + $0x970] sm:$0xff]
    %v408 = vld [vmem:[#allocation5 + $0x978] sm:$0xff]
    %v409 = vld [vmem:[#allocation5 + $0x980] sm:$0xff]
    %v410 = vld [vmem:[#allocation5 + $0x988] sm:$0xff]
    %v411 = vld [vmem:[#allocation5 + $0x990] sm:$0xff]
    %v412 = vld [vmem:[#allocation5 + $0x998] sm:$0xff]
    %v413 = vld [vmem:[#allocation5 + $0x9a0] sm:$0xff]
    %v414 = vld [vmem:[#allocation5 + $0x9a8] sm:$0xff]
    %v415 = vld [vmem:[#allocation5 + $0x9b0] sm:$0xff]
    %v416 = vld [vmem:[#allocation5 + $0x9b8] sm:$0xff]
    %v417 = vld [vmem:[#allocation5 + $0x9c0] sm:$0xff]
    %v418 = vld [vmem:[#allocation5 + $0x9c8] sm:$0xff]
    %v419 = vld [vmem:[#allocation5 + $0x9d0] sm:$0xff]
    %v420 = vld [vmem:[#allocation5 + $0x9d8] sm:$0xff]
    %v421 = vld [vmem:[#allocation5 + $0x9e0] sm:$0xff]
    %v422 = vld [vmem:[#allocation5 + $0x9e8] sm:$0xff]
    %v423 = vld [vmem:[#allocation5 + $0x9f0] sm:$0xff]
    %v424 = vld [vmem:[#allocation5 + $0x9f8] sm:$0xff]
    %v425 = vld [vmem:[#allocation5 + $0xa00] sm:$0xff]
    %v426 = vld [vmem:[#allocation5 + $0xa08] sm:$0xff]
    %v427 = vld [vmem:[#allocation5 + $0xa10] sm:$0xff]
    %v428 = vld [vmem:[#allocation5 + $0xa18] sm:$0xff]
    %v429 = vld [vmem:[#allocation5 + $0xa20] sm:$0xff]
    %v430 = vld [vmem:[#allocation5 + $0xa28] sm:$0xff]
    %v431 = vld [vmem:[#allocation5 + $0xa30] sm:$0xff]
    %v432 = vld [vmem:[#allocation5 + $0xa38] sm:$0xff]
    %v433 = vld [vmem:[#allocation5 + $0xa40] sm:$0xff]
    %v434 = vld [vmem:[#allocation5 + $0xa48] sm:$0xff]
    %v435 = vld [vmem:[#allocation5 + $0xa50] sm:$0xff]
    %v436 = vld [vmem:[#allocation5 + $0xa58] sm:$0xff]
    %v437 = vld [vmem:[#allocation5 + $0xa60] sm:$0xff]
    %v438 = vld [vmem:[#allocation5 + $0xa68] sm:$0xff]
    %v439 = vld [vmem:[#allocation5 + $0xa70] sm:$0xff]
    %v440 = vld [vmem:[#allocation5 + $0xa78] sm:$0xff]
    %v441 = vld [vmem:[#allocation5 + $0xa80] sm:$0xff]
    %v442 = vld [vmem:[#allocation5 + $0xa88] sm:$0xff]
    %v443 = vld [vmem:[#allocation5 + $0xa90] sm:$0xff]
    %v444 = vld [vmem:[#allocation5 + $0xa98] sm:$0xff]
    %v445 = vld [vmem:[#allocation5 + $0xaa0] sm:$0xff]
    %v446 = vld [vmem:[#allocation5 + $0xaa8] sm:$0xff]
    %v447 = vld [vmem:[#allocation5 + $0xab0] sm:$0xff]
    %v448 = vld [vmem:[#allocation5 + $0xab8] sm:$0xff]
    %v449 = vld [vmem:[#allocation5 + $0xac0] sm:$0xff]
    %v450 = vld [vmem:[#allocation5 + $0xac8] sm:$0xff]
    %v451 = vld [vmem:[#allocation5 + $0xad0] sm:$0xff]
    %v452 = vld [vmem:[#allocation5 + $0xad8] sm:$0xff]
    %v453 = vld [vmem:[#allocation5 + $0xae0] sm:$0xff]
    %v454 = vld [vmem:[#allocation5 + $0xae8] sm:$0xff]
    %v455 = vld [vmem:[#allocation5 + $0xaf0] sm:$0xff]
    %v456 = vld [vmem:[#allocation5 + $0xaf8] sm:$0xff]
    %v457 = vld [vmem:[#allocation5 + $0xb00] sm:$0xff]
    %v458 = vld [vmem:[#allocation5 + $0xb08] sm:$0xff]
    %v459 = vld [vmem:[#allocation5 + $0xb10] sm:$0xff]
    %v460 = vld [vmem:[#allocation5 + $0xb18] sm:$0xff]
    %v461 = vld [vmem:[#allocation5 + $0xb20] sm:$0xff]
    %v462 = vld [vmem:[#allocation5 + $0xb28] sm:$0xff]
    %v463 = vld [vmem:[#allocation5 + $0xb30] sm:$0xff]
    %v464 = vld [vmem:[#allocation5 + $0xb38] sm:$0xff]
    %v465 = vld [vmem:[#allocation5 + $0xb40] sm:$0xff]
    %v466 = vld [vmem:[#allocation5 + $0xb48] sm:$0xff]
    %v467 = vld [vmem:[#allocation5 + $0xb50] sm:$0xff]
    %v468 = vld [vmem:[#allocation5 + $0xb58] sm:$0xff]
    %v469 = vld [vmem:[#allocation5 + $0xb60] sm:$0xff]
    %v470 = vld [vmem:[#allocation5 + $0xb68] sm:$0xff]
    %v471 = vld [vmem:[#allocation5 + $0xb70] sm:$0xff]
    %v472 = vld [vmem:[#allocation5 + $0xb78] sm:$0xff]
    %v473 = vld [vmem:[#allocation5 + $0xb80] sm:$0xff]
    %v474 = vld [vmem:[#allocation5 + $0xb88] sm:$0xff]
    %v475 = vld [vmem:[#allocation5 + $0xb90] sm:$0xff]
    %v476 = vld [vmem:[#allocation5 + $0xb98] sm:$0xff]
    %v477 = vld [vmem:[#allocation5 + $0xba0] sm:$0xff]
    %v478 = vld [vmem:[#allocation5 + $0xba8] sm:$0xff]
    %v479 = vld [vmem:[#allocation5 + $0xbb0] sm:$0xff]
    %v480 = vld [vmem:[#allocation5 + $0xbb8] sm:$0xff]
    %v481 = vld [vmem:[#allocation5 + $0xbc0] sm:$0xff]
    %v482 = vld [vmem:[#allocation5 + $0xbc8] sm:$0xff]
    %v483 = vld [vmem:[#allocation5 + $0xbd0] sm:$0xff]
    %v484 = vld [vmem:[#allocation5 + $0xbd8] sm:$0xff]
    %v485 = vld [vmem:[#allocation5 + $0xbe0] sm:$0xff]
    %v486 = vld [vmem:[#allocation5 + $0xbe8] sm:$0xff]
    %v487 = vld [vmem:[#allocation5 + $0xbf0] sm:$0xff]
    %v488 = vld [vmem:[#allocation5 + $0xbf8] sm:$0xff]
    %v489 = vld [vmem:[#allocation7] sm:$0xff]
    %v491 = vperm.slane %v489, 0
    %v492 = vperm.slane %v489, 1
    %v493 = vperm.slane %v489, 2
    %v494 = vperm.slane %v489, 3
    %v495 = vperm.slane %v489, 4
    %v496 = vperm.slane %v489, 5
    %v497 = vperm.slane %v489, 6
    %v498 = vperm.slane %v489, 7
    %v891 = vunpack.c.l.b16 %v105
    %v892 = vunpack.c.h.b16 %v105
    %v893 = vunpack.c.l.b16 %v106
    %v894 = vunpack.c.h.b16 %v106
    %v895 = vunpack.c.l.b16 %v107
    %v896 = vunpack.c.h.b16 %v107
    %v897 = vunpack.c.l.b16 %v108
    %v898 = vunpack.c.h.b16 %v108
    %v899 = vunpack.c.l.b16 %v109
    %v900 = vunpack.c.h.b16 %v109
    %v901 = vunpack.c.l.b16 %v110
    %v902 = vunpack.c.h.b16 %v110
    %v903 = vunpack.c.l.b16 %v111
    %v904 = vunpack.c.h.b16 %v111
    %v905 = vunpack.c.l.b16 %v112
    %v906 = vunpack.c.h.b16 %v112
    %v907 = vunpack.c.l.b16 %v113
    %v908 = vunpack.c.h.b16 %v113
    %v909 = vunpack.c.l.b16 %v114
    %v910 = vunpack.c.h.b16 %v114
    %v911 = vunpack.c.l.b16 %v115
    %v912 = vunpack.c.h.b16 %v115
    %v913 = vunpack.c.l.b16 %v116
    %v914 = vunpack.c.h.b16 %v116
    %v915 = vunpack.c.l.b16 %v117
    %v916 = vunpack.c.h.b16 %v117
    %v917 = vunpack.c.l.b16 %v118
    %v918 = vunpack.c.h.b16 %v118
    %v919 = vunpack.c.l.b16 %v119
    %v920 = vunpack.c.h.b16 %v119
    %v921 = vunpack.c.l.b16 %v120
    %v922 = vunpack.c.h.b16 %v120
    %v923 = vunpack.c.l.b16 %v121
    %v924 = vunpack.c.h.b16 %v121
    %v925 = vunpack.c.l.b16 %v122
    %v926 = vunpack.c.h.b16 %v122
    %v927 = vunpack.c.l.b16 %v123
    %v928 = vunpack.c.h.b16 %v123
    %v929 = vunpack.c.l.b16 %v124
    %v930 = vunpack.c.h.b16 %v124
    %v931 = vunpack.c.l.b16 %v125
    %v932 = vunpack.c.h.b16 %v125
    %v933 = vunpack.c.l.b16 %v126
    %v934 = vunpack.c.h.b16 %v126
    %v935 = vunpack.c.l.b16 %v127
    %v936 = vunpack.c.h.b16 %v127
    %v937 = vunpack.c.l.b16 %v128
    %v938 = vunpack.c.h.b16 %v128
    %v939 = vunpack.c.l.b16 %v129
    %v940 = vunpack.c.h.b16 %v129
    %v941 = vunpack.c.l.b16 %v130
    %v942 = vunpack.c.h.b16 %v130
    %v943 = vunpack.c.l.b16 %v131
    %v944 = vunpack.c.h.b16 %v131
    %v945 = vunpack.c.l.b16 %v132
    %v946 = vunpack.c.h.b16 %v132
    %v947 = vunpack.c.l.b16 %v133
    %v948 = vunpack.c.h.b16 %v133
    %v949 = vunpack.c.l.b16 %v134
    %v950 = vunpack.c.h.b16 %v134
    %v951 = vunpack.c.l.b16 %v135
    %v952 = vunpack.c.h.b16 %v135
    %v953 = vunpack.c.l.b16 %v136
    %v954 = vunpack.c.h.b16 %v136
    %v955 = vunpack.c.l.b16 %v137
    %v956 = vunpack.c.h.b16 %v137
    %v957 = vunpack.c.l.b16 %v138
    %v958 = vunpack.c.h.b16 %v138
    %v959 = vunpack.c.l.b16 %v139
    %v960 = vunpack.c.h.b16 %v139
    %v961 = vunpack.c.l.b16 %v140
    %v962 = vunpack.c.h.b16 %v140
    %v963 = vunpack.c.l.b16 %v141
    %v964 = vunpack.c.h.b16 %v141
    %v965 = vunpack.c.l.b16 %v142
    %v966 = vunpack.c.h.b16 %v142
    %v967 = vunpack.c.l.b16 %v143
    %v968 = vunpack.c.h.b16 %v143
    %v969 = vunpack.c.l.b16 %v144
    %v970 = vunpack.c.h.b16 %v144
    %v971 = vunpack.c.l.b16 %v145
    %v972 = vunpack.c.h.b16 %v145
    %v973 = vunpack.c.l.b16 %v146
    %v974 = vunpack.c.h.b16 %v146
    %v975 = vunpack.c.l.b16 %v147
    %v976 = vunpack.c.h.b16 %v147
    %v977 = vunpack.c.l.b16 %v148
    %v978 = vunpack.c.h.b16 %v148
    %v979 = vunpack.c.l.b16 %v149
    %v980 = vunpack.c.h.b16 %v149
    %v981 = vunpack.c.l.b16 %v150
    %v982 = vunpack.c.h.b16 %v150
    %v983 = vunpack.c.l.b16 %v151
    %v984 = vunpack.c.h.b16 %v151
    %v985 = vunpack.c.l.b16 %v152
    %v986 = vunpack.c.h.b16 %v152
    %v987 = vunpack.c.l.b16 %v153
    %v988 = vunpack.c.h.b16 %v153
    %v989 = vunpack.c.l.b16 %v154
    %v990 = vunpack.c.h.b16 %v154
    %v991 = vunpack.c.l.b16 %v155
    %v992 = vunpack.c.h.b16 %v155
    %v993 = vunpack.c.l.b16 %v156
    %v994 = vunpack.c.h.b16 %v156
    %v995 = vunpack.c.l.b16 %v157
    %v996 = vunpack.c.h.b16 %v157
    %v997 = vunpack.c.l.b16 %v158
    %v998 = vunpack.c.h.b16 %v158
    %v999 = vunpack.c.l.b16 %v159
    %v1000 = vunpack.c.h.b16 %v159
    %v1001 = vunpack.c.l.b16 %v160
    %v1002 = vunpack.c.h.b16 %v160
    %v1003 = vunpack.c.l.b16 %v161
    %v1004 = vunpack.c.h.b16 %v161
    %v1005 = vunpack.c.l.b16 %v162
    %v1006 = vunpack.c.h.b16 %v162
    %v1007 = vunpack.c.l.b16 %v163
    %v1008 = vunpack.c.h.b16 %v163
    %v1009 = vunpack.c.l.b16 %v164
    %v1010 = vunpack.c.h.b16 %v164
    %v1011 = vunpack.c.l.b16 %v165
    %v1012 = vunpack.c.h.b16 %v165
    %v1013 = vunpack.c.l.b16 %v166
    %v1014 = vunpack.c.h.b16 %v166
    %v1015 = vunpack.c.l.b16 %v167
    %v1016 = vunpack.c.h.b16 %v167
    %v1017 = vunpack.c.l.b16 %v168
    %v1018 = vunpack.c.h.b16 %v168
    %v1019 = vunpack.c.l.b16 %v169
    %v1020 = vunpack.c.h.b16 %v169
    %v1021 = vunpack.c.l.b16 %v170
    %v1022 = vunpack.c.h.b16 %v170
    %v1023 = vunpack.c.l.b16 %v171
    %v1024 = vunpack.c.h.b16 %v171
    %v1025 = vunpack.c.l.b16 %v172
    %v1026 = vunpack.c.h.b16 %v172
    %v1027 = vunpack.c.l.b16 %v173
    %v1028 = vunpack.c.h.b16 %v173
    %v1029 = vunpack.c.l.b16 %v174
    %v1030 = vunpack.c.h.b16 %v174
    %v1031 = vunpack.c.l.b16 %v175
    %v1032 = vunpack.c.h.b16 %v175
    %v1033 = vunpack.c.l.b16 %v176
    %v1034 = vunpack.c.h.b16 %v176
    %v1035 = vunpack.c.l.b16 %v177
    %v1036 = vunpack.c.h.b16 %v177
    %v1037 = vunpack.c.l.b16 %v178
    %v1038 = vunpack.c.h.b16 %v178
    %v1039 = vunpack.c.l.b16 %v179
    %v1040 = vunpack.c.h.b16 %v179
    %v1041 = vunpack.c.l.b16 %v180
    %v1042 = vunpack.c.h.b16 %v180
    %v1043 = vunpack.c.l.b16 %v181
    %v1044 = vunpack.c.h.b16 %v181
    %v1045 = vunpack.c.l.b16 %v182
    %v1046 = vunpack.c.h.b16 %v182
    %v1047 = vunpack.c.l.b16 %v183
    %v1048 = vunpack.c.h.b16 %v183
    %v1049 = vunpack.c.l.b16 %v184
    %v1050 = vunpack.c.h.b16 %v184
    %v1051 = vunpack.c.l.b16 %v185
    %v1052 = vunpack.c.h.b16 %v185
    %v1053 = vunpack.c.l.b16 %v186
    %v1054 = vunpack.c.h.b16 %v186
    %v1055 = vunpack.c.l.b16 %v187
    %v1056 = vunpack.c.h.b16 %v187
    %v1057 = vunpack.c.l.b16 %v188
    %v1058 = vunpack.c.h.b16 %v188
    %v1059 = vunpack.c.l.b16 %v189
    %v1060 = vunpack.c.h.b16 %v189
    %v1061 = vunpack.c.l.b16 %v190
    %v1062 = vunpack.c.h.b16 %v190
    %v1063 = vunpack.c.l.b16 %v191
    %v1064 = vunpack.c.h.b16 %v191
    %v1065 = vunpack.c.l.b16 %v192
    %v1066 = vunpack.c.h.b16 %v192
    %v1067 = vunpack.c.l.b16 %v193
    %v1068 = vunpack.c.h.b16 %v193
    %v1069 = vunpack.c.l.b16 %v194
    %v1070 = vunpack.c.h.b16 %v194
    %v1071 = vunpack.c.l.b16 %v195
    %v1072 = vunpack.c.h.b16 %v195
    %v1073 = vunpack.c.l.b16 %v196
    %v1074 = vunpack.c.h.b16 %v196
    %v1075 = vunpack.c.l.b16 %v197
    %v1076 = vunpack.c.h.b16 %v197
    %v1077 = vunpack.c.l.b16 %v198
    %v1078 = vunpack.c.h.b16 %v198
    %v1079 = vunpack.c.l.b16 %v199
    %v1080 = vunpack.c.h.b16 %v199
    %v1081 = vunpack.c.l.b16 %v200
    %v1082 = vunpack.c.h.b16 %v200
    %v1083 = vunpack.c.l.b16 %v201
    %v1084 = vunpack.c.h.b16 %v201
    %v1085 = vunpack.c.l.b16 %v202
    %v1086 = vunpack.c.h.b16 %v202
    %v1087 = vunpack.c.l.b16 %v203
    %v1088 = vunpack.c.h.b16 %v203
    %v1089 = vunpack.c.l.b16 %v204
    %v1090 = vunpack.c.h.b16 %v204
    %v1091 = vunpack.c.l.b16 %v205
    %v1092 = vunpack.c.h.b16 %v205
    %v1093 = vunpack.c.l.b16 %v206
    %v1094 = vunpack.c.h.b16 %v206
    %v1095 = vunpack.c.l.b16 %v207
    %v1096 = vunpack.c.h.b16 %v207
    %v1097 = vunpack.c.l.b16 %v208
    %v1098 = vunpack.c.h.b16 %v208
    %v1099 = vunpack.c.l.b16 %v209
    %v1100 = vunpack.c.h.b16 %v209
    %v1101 = vunpack.c.l.b16 %v210
    %v1102 = vunpack.c.h.b16 %v210
    %v1103 = vunpack.c.l.b16 %v211
    %v1104 = vunpack.c.h.b16 %v211
    %v1105 = vunpack.c.l.b16 %v212
    %v1106 = vunpack.c.h.b16 %v212
    %v1107 = vunpack.c.l.b16 %v213
    %v1108 = vunpack.c.h.b16 %v213
    %v1109 = vunpack.c.l.b16 %v214
    %v1110 = vunpack.c.h.b16 %v214
    %v1111 = vunpack.c.l.b16 %v215
    %v1112 = vunpack.c.h.b16 %v215
    %v1113 = vunpack.c.l.b16 %v216
    %v1114 = vunpack.c.h.b16 %v216
    %v1115 = vunpack.c.l.b16 %v217
    %v1116 = vunpack.c.h.b16 %v217
    %v1117 = vunpack.c.l.b16 %v218
    %v1118 = vunpack.c.h.b16 %v218
    %v1119 = vunpack.c.l.b16 %v219
    %v1120 = vunpack.c.h.b16 %v219
    %v1121 = vunpack.c.l.b16 %v220
    %v1122 = vunpack.c.h.b16 %v220
    %v1123 = vunpack.c.l.b16 %v221
    %v1124 = vunpack.c.h.b16 %v221
    %v1125 = vunpack.c.l.b16 %v222
    %v1126 = vunpack.c.h.b16 %v222
    %v1127 = vunpack.c.l.b16 %v223
    %v1128 = vunpack.c.h.b16 %v223
    %v1129 = vunpack.c.l.b16 %v224
    %v1130 = vunpack.c.h.b16 %v224
    %v1131 = vunpack.c.l.b16 %v225
    %v1132 = vunpack.c.h.b16 %v225
    %v1133 = vunpack.c.l.b16 %v226
    %v1134 = vunpack.c.h.b16 %v226
    %v1135 = vunpack.c.l.b16 %v227
    %v1136 = vunpack.c.h.b16 %v227
    %v1137 = vunpack.c.l.b16 %v228
    %v1138 = vunpack.c.h.b16 %v228
    %v1139 = vunpack.c.l.b16 %v229
    %v1140 = vunpack.c.h.b16 %v229
    %v1141 = vunpack.c.l.b16 %v230
    %v1142 = vunpack.c.h.b16 %v230
    %v1143 = vunpack.c.l.b16 %v231
    %v1144 = vunpack.c.h.b16 %v231
    %v1145 = vunpack.c.l.b16 %v232
    %v1146 = vunpack.c.h.b16 %v232
    %v1147 = vunpack.c.l.b16 %v233
    %v1148 = vunpack.c.h.b16 %v233
    %v1149 = vunpack.c.l.b16 %v234
    %v1150 = vunpack.c.h.b16 %v234
    %v1151 = vunpack.c.l.b16 %v235
    %v1152 = vunpack.c.h.b16 %v235
    %v1153 = vunpack.c.l.b16 %v236
    %v1154 = vunpack.c.h.b16 %v236
    %v1155 = vunpack.c.l.b16 %v237
    %v1156 = vunpack.c.h.b16 %v237
    %v1157 = vunpack.c.l.b16 %v238
    %v1158 = vunpack.c.h.b16 %v238
    %v1159 = vunpack.c.l.b16 %v239
    %v1160 = vunpack.c.h.b16 %v239
    %v1161 = vunpack.c.l.b16 %v240
    %v1162 = vunpack.c.h.b16 %v240
    %v1163 = vunpack.c.l.b16 %v241
    %v1164 = vunpack.c.h.b16 %v241
    %v1165 = vunpack.c.l.b16 %v242
    %v1166 = vunpack.c.h.b16 %v242
    %v1167 = vunpack.c.l.b16 %v243
    %v1168 = vunpack.c.h.b16 %v243
    %v1169 = vunpack.c.l.b16 %v244
    %v1170 = vunpack.c.h.b16 %v244
    %v1171 = vunpack.c.l.b16 %v245
    %v1172 = vunpack.c.h.b16 %v245
    %v1173 = vunpack.c.l.b16 %v246
    %v1174 = vunpack.c.h.b16 %v246
    %v1175 = vunpack.c.l.b16 %v247
    %v1176 = vunpack.c.h.b16 %v247
    %v1177 = vunpack.c.l.b16 %v248
    %v1178 = vunpack.c.h.b16 %v248
    %v1179 = vunpack.c.l.b16 %v249
    %v1180 = vunpack.c.h.b16 %v249
    %v1181 = vunpack.c.l.b16 %v250
    %v1182 = vunpack.c.h.b16 %v250
    %v1183 = vunpack.c.l.b16 %v251
    %v1184 = vunpack.c.h.b16 %v251
    %v1185 = vunpack.c.l.b16 %v252
    %v1186 = vunpack.c.h.b16 %v252
    %v1187 = vunpack.c.l.b16 %v253
    %v1188 = vunpack.c.h.b16 %v253
    %v1189 = vunpack.c.l.b16 %v254
    %v1190 = vunpack.c.h.b16 %v254
    %v1191 = vunpack.c.l.b16 %v255
    %v1192 = vunpack.c.h.b16 %v255
    %v1193 = vunpack.c.l.b16 %v256
    %v1194 = vunpack.c.h.b16 %v256
    %v1195 = vunpack.c.l.b16 %v257
    %v1196 = vunpack.c.h.b16 %v257
    %v1197 = vunpack.c.l.b16 %v258
    %v1198 = vunpack.c.h.b16 %v258
    %v1199 = vunpack.c.l.b16 %v259
    %v1200 = vunpack.c.h.b16 %v259
    %v1201 = vunpack.c.l.b16 %v260
    %v1202 = vunpack.c.h.b16 %v260
    %v1203 = vunpack.c.l.b16 %v261
    %v1204 = vunpack.c.h.b16 %v261
    %v1205 = vunpack.c.l.b16 %v262
    %v1206 = vunpack.c.h.b16 %v262
    %v1207 = vunpack.c.l.b16 %v263
    %v1208 = vunpack.c.h.b16 %v263
    %v1209 = vunpack.c.l.b16 %v264
    %v1210 = vunpack.c.h.b16 %v264
    %v1211 = vunpack.c.l.b16 %v265
    %v1212 = vunpack.c.h.b16 %v265
    %v1213 = vunpack.c.l.b16 %v266
    %v1214 = vunpack.c.h.b16 %v266
    %v1215 = vunpack.c.l.b16 %v267
    %v1216 = vunpack.c.h.b16 %v267
    %v1217 = vunpack.c.l.b16 %v268
    %v1218 = vunpack.c.h.b16 %v268
    %v1219 = vunpack.c.l.b16 %v269
    %v1220 = vunpack.c.h.b16 %v269
    %v1221 = vunpack.c.l.b16 %v270
    %v1222 = vunpack.c.h.b16 %v270
    %v1223 = vunpack.c.l.b16 %v271
    %v1224 = vunpack.c.h.b16 %v271
    %v1225 = vunpack.c.l.b16 %v272
    %v1226 = vunpack.c.h.b16 %v272
    %v1227 = vunpack.c.l.b16 %v273
    %v1228 = vunpack.c.h.b16 %v273
    %v1229 = vunpack.c.l.b16 %v274
    %v1230 = vunpack.c.h.b16 %v274
    %v1231 = vunpack.c.l.b16 %v275
    %v1232 = vunpack.c.h.b16 %v275
    %v1233 = vunpack.c.l.b16 %v276
    %v1234 = vunpack.c.h.b16 %v276
    %v1235 = vunpack.c.l.b16 %v277
    %v1236 = vunpack.c.h.b16 %v277
    %v1237 = vunpack.c.l.b16 %v278
    %v1238 = vunpack.c.h.b16 %v278
    %v1239 = vunpack.c.l.b16 %v279
    %v1240 = vunpack.c.h.b16 %v279
    %v1241 = vunpack.c.l.b16 %v280
    %v1242 = vunpack.c.h.b16 %v280
    %v1243 = vunpack.c.l.b16 %v281
    %v1244 = vunpack.c.h.b16 %v281
    %v1245 = vunpack.c.l.b16 %v282
    %v1246 = vunpack.c.h.b16 %v282
    %v1247 = vunpack.c.l.b16 %v283
    %v1248 = vunpack.c.h.b16 %v283
    %v1249 = vunpack.c.l.b16 %v284
    %v1250 = vunpack.c.h.b16 %v284
    %v1251 = vunpack.c.l.b16 %v285
    %v1252 = vunpack.c.h.b16 %v285
    %v1253 = vunpack.c.l.b16 %v286
    %v1254 = vunpack.c.h.b16 %v286
    %v1255 = vunpack.c.l.b16 %v287
    %v1256 = vunpack.c.h.b16 %v287
    %v1257 = vunpack.c.l.b16 %v288
    %v1258 = vunpack.c.h.b16 %v288
    %v1259 = vunpack.c.l.b16 %v289
    %v1260 = vunpack.c.h.b16 %v289
    %v1261 = vunpack.c.l.b16 %v290
    %v1262 = vunpack.c.h.b16 %v290
    %v1263 = vunpack.c.l.b16 %v291
    %v1264 = vunpack.c.h.b16 %v291
    %v1265 = vunpack.c.l.b16 %v292
    %v1266 = vunpack.c.h.b16 %v292
    %v1267 = vunpack.c.l.b16 %v293
    %v1268 = vunpack.c.h.b16 %v293
    %v1269 = vunpack.c.l.b16 %v294
    %v1270 = vunpack.c.h.b16 %v294
    %v1271 = vunpack.c.l.b16 %v295
    %v1272 = vunpack.c.h.b16 %v295
    %v1273 = vunpack.c.l.b16 %v296
    %v1274 = vunpack.c.h.b16 %v296
    %v1275 = vunpack.c.l.b16 %v297
    %v1276 = vunpack.c.h.b16 %v297
    %v1277 = vunpack.c.l.b16 %v298
    %v1278 = vunpack.c.h.b16 %v298
    %v1279 = vunpack.c.l.b16 %v299
    %v1280 = vunpack.c.h.b16 %v299
    %v1281 = vunpack.c.l.b16 %v300
    %v1282 = vunpack.c.h.b16 %v300
    %v1283 = vunpack.c.l.b16 %v301
    %v1284 = vunpack.c.h.b16 %v301
    %v1285 = vunpack.c.l.b16 %v302
    %v1286 = vunpack.c.h.b16 %v302
    %v1287 = vunpack.c.l.b16 %v303
    %v1288 = vunpack.c.h.b16 %v303
    %v1289 = vunpack.c.l.b16 %v304
    %v1290 = vunpack.c.h.b16 %v304
    %v1291 = vunpack.c.l.b16 %v305
    %v1292 = vunpack.c.h.b16 %v305
    %v1293 = vunpack.c.l.b16 %v306
    %v1294 = vunpack.c.h.b16 %v306
    %v1295 = vunpack.c.l.b16 %v307
    %v1296 = vunpack.c.h.b16 %v307
    %v1297 = vunpack.c.l.b16 %v308
    %v1298 = vunpack.c.h.b16 %v308
    %v1299 = vunpack.c.l.b16 %v309
    %v1300 = vunpack.c.h.b16 %v309
    %v1301 = vunpack.c.l.b16 %v310
    %v1302 = vunpack.c.h.b16 %v310
    %v1303 = vunpack.c.l.b16 %v311
    %v1304 = vunpack.c.h.b16 %v311
    %v1305 = vunpack.c.l.b16 %v312
    %v1306 = vunpack.c.h.b16 %v312
    %v1307 = vunpack.c.l.b16 %v313
    %v1308 = vunpack.c.h.b16 %v313
    %v1309 = vunpack.c.l.b16 %v314
    %v1310 = vunpack.c.h.b16 %v314
    %v1311 = vunpack.c.l.b16 %v315
    %v1312 = vunpack.c.h.b16 %v315
    %v1313 = vunpack.c.l.b16 %v316
    %v1314 = vunpack.c.h.b16 %v316
    %v1315 = vunpack.c.l.b16 %v317
    %v1316 = vunpack.c.h.b16 %v317
    %v1317 = vunpack.c.l.b16 %v318
    %v1318 = vunpack.c.h.b16 %v318
    %v1319 = vunpack.c.l.b16 %v319
    %v1320 = vunpack.c.h.b16 %v319
    %v1321 = vunpack.c.l.b16 %v320
    %v1322 = vunpack.c.h.b16 %v320
    %v1323 = vunpack.c.l.b16 %v321
    %v1324 = vunpack.c.h.b16 %v321
    %v1325 = vunpack.c.l.b16 %v322
    %v1326 = vunpack.c.h.b16 %v322
    %v1327 = vunpack.c.l.b16 %v323
    %v1328 = vunpack.c.h.b16 %v323
    %v1329 = vunpack.c.l.b16 %v324
    %v1330 = vunpack.c.h.b16 %v324
    %v1331 = vunpack.c.l.b16 %v325
    %v1332 = vunpack.c.h.b16 %v325
    %v1333 = vunpack.c.l.b16 %v326
    %v1334 = vunpack.c.h.b16 %v326
    %v1335 = vunpack.c.l.b16 %v327
    %v1336 = vunpack.c.h.b16 %v327
    %v1337 = vunpack.c.l.b16 %v328
    %v1338 = vunpack.c.h.b16 %v328
    %v1339 = vunpack.c.l.b16 %v329
    %v1340 = vunpack.c.h.b16 %v329
    %v1341 = vunpack.c.l.b16 %v330
    %v1342 = vunpack.c.h.b16 %v330
    %v1343 = vunpack.c.l.b16 %v331
    %v1344 = vunpack.c.h.b16 %v331
    %v1345 = vunpack.c.l.b16 %v332
    %v1346 = vunpack.c.h.b16 %v332
    %v1347 = vunpack.c.l.b16 %v333
    %v1348 = vunpack.c.h.b16 %v333
    %v1349 = vunpack.c.l.b16 %v334
    %v1350 = vunpack.c.h.b16 %v334
    %v1351 = vunpack.c.l.b16 %v335
    %v1352 = vunpack.c.h.b16 %v335
    %v1353 = vunpack.c.l.b16 %v336
    %v1354 = vunpack.c.h.b16 %v336
    %v1355 = vunpack.c.l.b16 %v337
    %v1356 = vunpack.c.h.b16 %v337
    %v1357 = vunpack.c.l.b16 %v338
    %v1358 = vunpack.c.h.b16 %v338
    %v1359 = vunpack.c.l.b16 %v339
    %v1360 = vunpack.c.h.b16 %v339
    %v1361 = vunpack.c.l.b16 %v340
    %v1362 = vunpack.c.h.b16 %v340
    %v1363 = vunpack.c.l.b16 %v341
    %v1364 = vunpack.c.h.b16 %v341
    %v1365 = vunpack.c.l.b16 %v342
    %v1366 = vunpack.c.h.b16 %v342
    %v1367 = vunpack.c.l.b16 %v343
    %v1368 = vunpack.c.h.b16 %v343
    %v1369 = vunpack.c.l.b16 %v344
    %v1370 = vunpack.c.h.b16 %v344
    %v1371 = vunpack.c.l.b16 %v345
    %v1372 = vunpack.c.h.b16 %v345
    %v1373 = vunpack.c.l.b16 %v346
    %v1374 = vunpack.c.h.b16 %v346
    %v1375 = vunpack.c.l.b16 %v347
    %v1376 = vunpack.c.h.b16 %v347
    %v1377 = vunpack.c.l.b16 %v348
    %v1378 = vunpack.c.h.b16 %v348
    %v1379 = vunpack.c.l.b16 %v349
    %v1380 = vunpack.c.h.b16 %v349
    %v1381 = vunpack.c.l.b16 %v350
    %v1382 = vunpack.c.h.b16 %v350
    %v1383 = vunpack.c.l.b16 %v351
    %v1384 = vunpack.c.h.b16 %v351
    %v1385 = vunpack.c.l.b16 %v352
    %v1386 = vunpack.c.h.b16 %v352
    %v1387 = vunpack.c.l.b16 %v353
    %v1388 = vunpack.c.h.b16 %v353
    %v1389 = vunpack.c.l.b16 %v354
    %v1390 = vunpack.c.h.b16 %v354
    %v1391 = vunpack.c.l.b16 %v355
    %v1392 = vunpack.c.h.b16 %v355
    %v1393 = vunpack.c.l.b16 %v356
    %v1394 = vunpack.c.h.b16 %v356
    %v1395 = vunpack.c.l.b16 %v357
    %v1396 = vunpack.c.h.b16 %v357
    %v1397 = vunpack.c.l.b16 %v358
    %v1398 = vunpack.c.h.b16 %v358
    %v1399 = vunpack.c.l.b16 %v359
    %v1400 = vunpack.c.h.b16 %v359
    %v1401 = vunpack.c.l.b16 %v360
    %v1402 = vunpack.c.h.b16 %v360
    %v1403 = vunpack.c.l.b16 %v361
    %v1404 = vunpack.c.h.b16 %v361
    %v1405 = vunpack.c.l.b16 %v362
    %v1406 = vunpack.c.h.b16 %v362
    %v1407 = vunpack.c.l.b16 %v363
    %v1408 = vunpack.c.h.b16 %v363
    %v1409 = vunpack.c.l.b16 %v364
    %v1410 = vunpack.c.h.b16 %v364
    %v1411 = vunpack.c.l.b16 %v365
    %v1412 = vunpack.c.h.b16 %v365
    %v1413 = vunpack.c.l.b16 %v366
    %v1414 = vunpack.c.h.b16 %v366
    %v1415 = vunpack.c.l.b16 %v367
    %v1416 = vunpack.c.h.b16 %v367
    %v1417 = vunpack.c.l.b16 %v368
    %v1418 = vunpack.c.h.b16 %v368
    %v1419 = vunpack.c.l.b16 %v369
    %v1420 = vunpack.c.h.b16 %v369
    %v1421 = vunpack.c.l.b16 %v370
    %v1422 = vunpack.c.h.b16 %v370
    %v1423 = vunpack.c.l.b16 %v371
    %v1424 = vunpack.c.h.b16 %v371
    %v1425 = vunpack.c.l.b16 %v372
    %v1426 = vunpack.c.h.b16 %v372
    %v1427 = vunpack.c.l.b16 %v373
    %v1428 = vunpack.c.h.b16 %v373
    %v1429 = vunpack.c.l.b16 %v374
    %v1430 = vunpack.c.h.b16 %v374
    %v1431 = vunpack.c.l.b16 %v375
    %v1432 = vunpack.c.h.b16 %v375
    %v1433 = vunpack.c.l.b16 %v376
    %v1434 = vunpack.c.h.b16 %v376
    %v1435 = vunpack.c.l.b16 %v377
    %v1436 = vunpack.c.h.b16 %v377
    %v1437 = vunpack.c.l.b16 %v378
    %v1438 = vunpack.c.h.b16 %v378
    %v1439 = vunpack.c.l.b16 %v379
    %v1440 = vunpack.c.h.b16 %v379
    %v1441 = vunpack.c.l.b16 %v380
    %v1442 = vunpack.c.h.b16 %v380
    %v1443 = vunpack.c.l.b16 %v381
    %v1444 = vunpack.c.h.b16 %v381
    %v1445 = vunpack.c.l.b16 %v382
    %v1446 = vunpack.c.h.b16 %v382
    %v1447 = vunpack.c.l.b16 %v383
    %v1448 = vunpack.c.h.b16 %v383
    %v1449 = vunpack.c.l.b16 %v384
    %v1450 = vunpack.c.h.b16 %v384
    %v1451 = vunpack.c.l.b16 %v385
    %v1452 = vunpack.c.h.b16 %v385
    %v1453 = vunpack.c.l.b16 %v386
    %v1454 = vunpack.c.h.b16 %v386
    %v1455 = vunpack.c.l.b16 %v387
    %v1456 = vunpack.c.h.b16 %v387
    %v1457 = vunpack.c.l.b16 %v388
    %v1458 = vunpack.c.h.b16 %v388
    %v1459 = vunpack.c.l.b16 %v389
    %v1460 = vunpack.c.h.b16 %v389
    %v1461 = vunpack.c.l.b16 %v390
    %v1462 = vunpack.c.h.b16 %v390
    %v1463 = vunpack.c.l.b16 %v391
    %v1464 = vunpack.c.h.b16 %v391
    %v1465 = vunpack.c.l.b16 %v392
    %v1466 = vunpack.c.h.b16 %v392
    %v1467 = vunpack.c.l.b16 %v393
    %v1468 = vunpack.c.h.b16 %v393
    %v1469 = vunpack.c.l.b16 %v394
    %v1470 = vunpack.c.h.b16 %v394
    %v1471 = vunpack.c.l.b16 %v395
    %v1472 = vunpack.c.h.b16 %v395
    %v1473 = vunpack.c.l.b16 %v396
    %v1474 = vunpack.c.h.b16 %v396
    %v1475 = vunpack.c.l.b16 %v397
    %v1476 = vunpack.c.h.b16 %v397
    %v1477 = vunpack.c.l.b16 %v398
    %v1478 = vunpack.c.h.b16 %v398
    %v1479 = vunpack.c.l.b16 %v399
    %v1480 = vunpack.c.h.b16 %v399
    %v1481 = vunpack.c.l.b16 %v400
    %v1482 = vunpack.c.h.b16 %v400
    %v1483 = vunpack.c.l.b16 %v401
    %v1484 = vunpack.c.h.b16 %v401
    %v1485 = vunpack.c.l.b16 %v402
    %v1486 = vunpack.c.h.b16 %v402
    %v1487 = vunpack.c.l.b16 %v403
    %v1488 = vunpack.c.h.b16 %v403
    %v1489 = vunpack.c.l.b16 %v404
    %v1490 = vunpack.c.h.b16 %v404
    %v1491 = vunpack.c.l.b16 %v405
    %v1492 = vunpack.c.h.b16 %v405
    %v1493 = vunpack.c.l.b16 %v406
    %v1494 = vunpack.c.h.b16 %v406
    %v1495 = vunpack.c.l.b16 %v407
    %v1496 = vunpack.c.h.b16 %v407
    %v1497 = vunpack.c.l.b16 %v408
    %v1498 = vunpack.c.h.b16 %v408
    %v1499 = vunpack.c.l.b16 %v409
    %v1500 = vunpack.c.h.b16 %v409
    %v1501 = vunpack.c.l.b16 %v410
    %v1502 = vunpack.c.h.b16 %v410
    %v1503 = vunpack.c.l.b16 %v411
    %v1504 = vunpack.c.h.b16 %v411
    %v1505 = vunpack.c.l.b16 %v412
    %v1506 = vunpack.c.h.b16 %v412
    %v1507 = vunpack.c.l.b16 %v413
    %v1508 = vunpack.c.h.b16 %v413
    %v1509 = vunpack.c.l.b16 %v414
    %v1510 = vunpack.c.h.b16 %v414
    %v1511 = vunpack.c.l.b16 %v415
    %v1512 = vunpack.c.h.b16 %v415
    %v1513 = vunpack.c.l.b16 %v416
    %v1514 = vunpack.c.h.b16 %v416
    %v1515 = vunpack.c.l.b16 %v417
    %v1516 = vunpack.c.h.b16 %v417
    %v1517 = vunpack.c.l.b16 %v418
    %v1518 = vunpack.c.h.b16 %v418
    %v1519 = vunpack.c.l.b16 %v419
    %v1520 = vunpack.c.h.b16 %v419
    %v1521 = vunpack.c.l.b16 %v420
    %v1522 = vunpack.c.h.b16 %v420
    %v1523 = vunpack.c.l.b16 %v421
    %v1524 = vunpack.c.h.b16 %v421
    %v1525 = vunpack.c.l.b16 %v422
    %v1526 = vunpack.c.h.b16 %v422
    %v1527 = vunpack.c.l.b16 %v423
    %v1528 = vunpack.c.h.b16 %v423
    %v1529 = vunpack.c.l.b16 %v424
    %v1530 = vunpack.c.h.b16 %v424
    %v1531 = vunpack.c.l.b16 %v425
    %v1532 = vunpack.c.h.b16 %v425
    %v1533 = vunpack.c.l.b16 %v426
    %v1534 = vunpack.c.h.b16 %v426
    %v1535 = vunpack.c.l.b16 %v427
    %v1536 = vunpack.c.h.b16 %v427
    %v1537 = vunpack.c.l.b16 %v428
    %v1538 = vunpack.c.h.b16 %v428
    %v1539 = vunpack.c.l.b16 %v429
    %v1540 = vunpack.c.h.b16 %v429
    %v1541 = vunpack.c.l.b16 %v430
    %v1542 = vunpack.c.h.b16 %v430
    %v1543 = vunpack.c.l.b16 %v431
    %v1544 = vunpack.c.h.b16 %v431
    %v1545 = vunpack.c.l.b16 %v432
    %v1546 = vunpack.c.h.b16 %v432
    %v1547 = vunpack.c.l.b16 %v433
    %v1548 = vunpack.c.h.b16 %v433
    %v1549 = vunpack.c.l.b16 %v434
    %v1550 = vunpack.c.h.b16 %v434
    %v1551 = vunpack.c.l.b16 %v435
    %v1552 = vunpack.c.h.b16 %v435
    %v1553 = vunpack.c.l.b16 %v436
    %v1554 = vunpack.c.h.b16 %v436
    %v1555 = vunpack.c.l.b16 %v437
    %v1556 = vunpack.c.h.b16 %v437
    %v1557 = vunpack.c.l.b16 %v438
    %v1558 = vunpack.c.h.b16 %v438
    %v1559 = vunpack.c.l.b16 %v439
    %v1560 = vunpack.c.h.b16 %v439
    %v1561 = vunpack.c.l.b16 %v440
    %v1562 = vunpack.c.h.b16 %v440
    %v1563 = vunpack.c.l.b16 %v441
    %v1564 = vunpack.c.h.b16 %v441
    %v1565 = vunpack.c.l.b16 %v442
    %v1566 = vunpack.c.h.b16 %v442
    %v1567 = vunpack.c.l.b16 %v443
    %v1568 = vunpack.c.h.b16 %v443
    %v1569 = vunpack.c.l.b16 %v444
    %v1570 = vunpack.c.h.b16 %v444
    %v1571 = vunpack.c.l.b16 %v445
    %v1572 = vunpack.c.h.b16 %v445
    %v1573 = vunpack.c.l.b16 %v446
    %v1574 = vunpack.c.h.b16 %v446
    %v1575 = vunpack.c.l.b16 %v447
    %v1576 = vunpack.c.h.b16 %v447
    %v1577 = vunpack.c.l.b16 %v448
    %v1578 = vunpack.c.h.b16 %v448
    %v1579 = vunpack.c.l.b16 %v449
    %v1580 = vunpack.c.h.b16 %v449
    %v1581 = vunpack.c.l.b16 %v450
    %v1582 = vunpack.c.h.b16 %v450
    %v1583 = vunpack.c.l.b16 %v451
    %v1584 = vunpack.c.h.b16 %v451
    %v1585 = vunpack.c.l.b16 %v452
    %v1586 = vunpack.c.h.b16 %v452
    %v1587 = vunpack.c.l.b16 %v453
    %v1588 = vunpack.c.h.b16 %v453
    %v1589 = vunpack.c.l.b16 %v454
    %v1590 = vunpack.c.h.b16 %v454
    %v1591 = vunpack.c.l.b16 %v455
    %v1592 = vunpack.c.h.b16 %v455
    %v1593 = vunpack.c.l.b16 %v456
    %v1594 = vunpack.c.h.b16 %v456
    %v1595 = vunpack.c.l.b16 %v457
    %v1596 = vunpack.c.h.b16 %v457
    %v1597 = vunpack.c.l.b16 %v458
    %v1598 = vunpack.c.h.b16 %v458
    %v1599 = vunpack.c.l.b16 %v459
    %v1600 = vunpack.c.h.b16 %v459
    %v1601 = vunpack.c.l.b16 %v460
    %v1602 = vunpack.c.h.b16 %v460
    %v1603 = vunpack.c.l.b16 %v461
    %v1604 = vunpack.c.h.b16 %v461
    %v1605 = vunpack.c.l.b16 %v462
    %v1606 = vunpack.c.h.b16 %v462
    %v1607 = vunpack.c.l.b16 %v463
    %v1608 = vunpack.c.h.b16 %v463
    %v1609 = vunpack.c.l.b16 %v464
    %v1610 = vunpack.c.h.b16 %v464
    %v1611 = vunpack.c.l.b16 %v465
    %v1612 = vunpack.c.h.b16 %v465
    %v1613 = vunpack.c.l.b16 %v466
    %v1614 = vunpack.c.h.b16 %v466
    %v1615 = vunpack.c.l.b16 %v467
    %v1616 = vunpack.c.h.b16 %v467
    %v1617 = vunpack.c.l.b16 %v468
    %v1618 = vunpack.c.h.b16 %v468
    %v1619 = vunpack.c.l.b16 %v469
    %v1620 = vunpack.c.h.b16 %v469
    %v1621 = vunpack.c.l.b16 %v470
    %v1622 = vunpack.c.h.b16 %v470
    %v1623 = vunpack.c.l.b16 %v471
    %v1624 = vunpack.c.h.b16 %v471
    %v1625 = vunpack.c.l.b16 %v472
    %v1626 = vunpack.c.h.b16 %v472
    %v1627 = vunpack.c.l.b16 %v473
    %v1628 = vunpack.c.h.b16 %v473
    %v1629 = vunpack.c.l.b16 %v474
    %v1630 = vunpack.c.h.b16 %v474
    %v1631 = vunpack.c.l.b16 %v475
    %v1632 = vunpack.c.h.b16 %v475
    %v1633 = vunpack.c.l.b16 %v476
    %v1634 = vunpack.c.h.b16 %v476
    %v1635 = vunpack.c.l.b16 %v477
    %v1636 = vunpack.c.h.b16 %v477
    %v1637 = vunpack.c.l.b16 %v478
    %v1638 = vunpack.c.h.b16 %v478
    %v1639 = vunpack.c.l.b16 %v479
    %v1640 = vunpack.c.h.b16 %v479
    %v1641 = vunpack.c.l.b16 %v480
    %v1642 = vunpack.c.h.b16 %v480
    %v1643 = vunpack.c.l.b16 %v481
    %v1644 = vunpack.c.h.b16 %v481
    %v1645 = vunpack.c.l.b16 %v482
    %v1646 = vunpack.c.h.b16 %v482
    %v1647 = vunpack.c.l.b16 %v483
    %v1648 = vunpack.c.h.b16 %v483
    %v1649 = vunpack.c.l.b16 %v484
    %v1650 = vunpack.c.h.b16 %v484
    %v1651 = vunpack.c.l.b16 %v485
    %v1652 = vunpack.c.h.b16 %v485
    %v1653 = vunpack.c.l.b16 %v486
    %v1654 = vunpack.c.h.b16 %v486
    %v1655 = vunpack.c.l.b16 %v487
    %v1656 = vunpack.c.h.b16 %v487
    %v1657 = vunpack.c.l.b16 %v488
    %v1658 = vunpack.c.h.b16 %v488
    %v1659 = vpack.c.b16 %v899, %v891
    %v1660 = vpack.c.b16 %v900, %v892
    %v1661 = vpack.c.b16 %v901, %v893
    %v1662 = vpack.c.b16 %v902, %v894
    %v1663 = vpack.c.b16 %v903, %v895
    %v1664 = vpack.c.b16 %v904, %v896
    %v1665 = vpack.c.b16 %v905, %v897
    %v1666 = vpack.c.b16 %v906, %v898
    %v1667 = vpack.c.b16 %v915, %v907
    %v1668 = vpack.c.b16 %v916, %v908
    %v1669 = vpack.c.b16 %v917, %v909
    %v1670 = vpack.c.b16 %v918, %v910
    %v1671 = vpack.c.b16 %v919, %v911
    %v1672 = vpack.c.b16 %v920, %v912
    %v1673 = vpack.c.b16 %v921, %v913
    %v1674 = vpack.c.b16 %v922, %v914
    %v1675 = vpack.c.b16 %v931, %v923
    %v1676 = vpack.c.b16 %v932, %v924
    %v1677 = vpack.c.b16 %v933, %v925
    %v1678 = vpack.c.b16 %v934, %v926
    %v1679 = vpack.c.b16 %v935, %v927
    %v1680 = vpack.c.b16 %v936, %v928
    %v1681 = vpack.c.b16 %v937, %v929
    %v1682 = vpack.c.b16 %v938, %v930
    %v1683 = vpack.c.b16 %v947, %v939
    %v1684 = vpack.c.b16 %v948, %v940
    %v1685 = vpack.c.b16 %v949, %v941
    %v1686 = vpack.c.b16 %v950, %v942
    %v1687 = vpack.c.b16 %v951, %v943
    %v1688 = vpack.c.b16 %v952, %v944
    %v1689 = vpack.c.b16 %v953, %v945
    %v1690 = vpack.c.b16 %v954, %v946
    %v1691 = vpack.c.b16 %v963, %v955
    %v1692 = vpack.c.b16 %v964, %v956
    %v1693 = vpack.c.b16 %v965, %v957
    %v1694 = vpack.c.b16 %v966, %v958
    %v1695 = vpack.c.b16 %v967, %v959
    %v1696 = vpack.c.b16 %v968, %v960
    %v1697 = vpack.c.b16 %v969, %v961
    %v1698 = vpack.c.b16 %v970, %v962
    %v1699 = vpack.c.b16 %v979, %v971
    %v1700 = vpack.c.b16 %v980, %v972
    %v1701 = vpack.c.b16 %v981, %v973
    %v1702 = vpack.c.b16 %v982, %v974
    %v1703 = vpack.c.b16 %v983, %v975
    %v1704 = vpack.c.b16 %v984, %v976
    %v1705 = vpack.c.b16 %v985, %v977
    %v1706 = vpack.c.b16 %v986, %v978
    %v1707 = vpack.c.b16 %v995, %v987
    %v1708 = vpack.c.b16 %v996, %v988
    %v1709 = vpack.c.b16 %v997, %v989
    %v1710 = vpack.c.b16 %v998, %v990
    %v1711 = vpack.c.b16 %v999, %v991
    %v1712 = vpack.c.b16 %v1000, %v992
    %v1713 = vpack.c.b16 %v1001, %v993
    %v1714 = vpack.c.b16 %v1002, %v994
    %v1715 = vpack.c.b16 %v1011, %v1003
    %v1716 = vpack.c.b16 %v1012, %v1004
    %v1717 = vpack.c.b16 %v1013, %v1005
    %v1718 = vpack.c.b16 %v1014, %v1006
    %v1719 = vpack.c.b16 %v1015, %v1007
    %v1720 = vpack.c.b16 %v1016, %v1008
    %v1721 = vpack.c.b16 %v1017, %v1009
    %v1722 = vpack.c.b16 %v1018, %v1010
    %v1723 = vpack.c.b16 %v1027, %v1019
    %v1724 = vpack.c.b16 %v1028, %v1020
    %v1725 = vpack.c.b16 %v1029, %v1021
    %v1726 = vpack.c.b16 %v1030, %v1022
    %v1727 = vpack.c.b16 %v1031, %v1023
    %v1728 = vpack.c.b16 %v1032, %v1024
    %v1729 = vpack.c.b16 %v1033, %v1025
    %v1730 = vpack.c.b16 %v1034, %v1026
    %v1731 = vpack.c.b16 %v1043, %v1035
    %v1732 = vpack.c.b16 %v1044, %v1036
    %v1733 = vpack.c.b16 %v1045, %v1037
    %v1734 = vpack.c.b16 %v1046, %v1038
    %v1735 = vpack.c.b16 %v1047, %v1039
    %v1736 = vpack.c.b16 %v1048, %v1040
    %v1737 = vpack.c.b16 %v1049, %v1041
    %v1738 = vpack.c.b16 %v1050, %v1042
    %v1739 = vpack.c.b16 %v1059, %v1051
    %v1740 = vpack.c.b16 %v1060, %v1052
    %v1741 = vpack.c.b16 %v1061, %v1053
    %v1742 = vpack.c.b16 %v1062, %v1054
    %v1743 = vpack.c.b16 %v1063, %v1055
    %v1744 = vpack.c.b16 %v1064, %v1056
    %v1745 = vpack.c.b16 %v1065, %v1057
    %v1746 = vpack.c.b16 %v1066, %v1058
    %v1747 = vpack.c.b16 %v1075, %v1067
    %v1748 = vpack.c.b16 %v1076, %v1068
    %v1749 = vpack.c.b16 %v1077, %v1069
    %v1750 = vpack.c.b16 %v1078, %v1070
    %v1751 = vpack.c.b16 %v1079, %v1071
    %v1752 = vpack.c.b16 %v1080, %v1072
    %v1753 = vpack.c.b16 %v1081, %v1073
    %v1754 = vpack.c.b16 %v1082, %v1074
    %v1755 = vpack.c.b16 %v1091, %v1083
    %v1756 = vpack.c.b16 %v1092, %v1084
    %v1757 = vpack.c.b16 %v1093, %v1085
    %v1758 = vpack.c.b16 %v1094, %v1086
    %v1759 = vpack.c.b16 %v1095, %v1087
    %v1760 = vpack.c.b16 %v1096, %v1088
    %v1761 = vpack.c.b16 %v1097, %v1089
    %v1762 = vpack.c.b16 %v1098, %v1090
    %v1763 = vpack.c.b16 %v1107, %v1099
    %v1764 = vpack.c.b16 %v1108, %v1100
    %v1765 = vpack.c.b16 %v1109, %v1101
    %v1766 = vpack.c.b16 %v1110, %v1102
    %v1767 = vpack.c.b16 %v1111, %v1103
    %v1768 = vpack.c.b16 %v1112, %v1104
    %v1769 = vpack.c.b16 %v1113, %v1105
    %v1770 = vpack.c.b16 %v1114, %v1106
    %v1771 = vpack.c.b16 %v1123, %v1115
    %v1772 = vpack.c.b16 %v1124, %v1116
    %v1773 = vpack.c.b16 %v1125, %v1117
    %v1774 = vpack.c.b16 %v1126, %v1118
    %v1775 = vpack.c.b16 %v1127, %v1119
    %v1776 = vpack.c.b16 %v1128, %v1120
    %v1777 = vpack.c.b16 %v1129, %v1121
    %v1778 = vpack.c.b16 %v1130, %v1122
    %v1779 = vpack.c.b16 %v1139, %v1131
    %v1780 = vpack.c.b16 %v1140, %v1132
    %v1781 = vpack.c.b16 %v1141, %v1133
    %v1782 = vpack.c.b16 %v1142, %v1134
    %v1783 = vpack.c.b16 %v1143, %v1135
    %v1784 = vpack.c.b16 %v1144, %v1136
    %v1785 = vpack.c.b16 %v1145, %v1137
    %v1786 = vpack.c.b16 %v1146, %v1138
    %v1787 = vpack.c.b16 %v1155, %v1147
    %v1788 = vpack.c.b16 %v1156, %v1148
    %v1789 = vpack.c.b16 %v1157, %v1149
    %v1790 = vpack.c.b16 %v1158, %v1150
    %v1791 = vpack.c.b16 %v1159, %v1151
    %v1792 = vpack.c.b16 %v1160, %v1152
    %v1793 = vpack.c.b16 %v1161, %v1153
    %v1794 = vpack.c.b16 %v1162, %v1154
    %v1795 = vpack.c.b16 %v1171, %v1163
    %v1796 = vpack.c.b16 %v1172, %v1164
    %v1797 = vpack.c.b16 %v1173, %v1165
    %v1798 = vpack.c.b16 %v1174, %v1166
    %v1799 = vpack.c.b16 %v1175, %v1167
    %v1800 = vpack.c.b16 %v1176, %v1168
    %v1801 = vpack.c.b16 %v1177, %v1169
    %v1802 = vpack.c.b16 %v1178, %v1170
    %v1803 = vpack.c.b16 %v1187, %v1179
    %v1804 = vpack.c.b16 %v1188, %v1180
    %v1805 = vpack.c.b16 %v1189, %v1181
    %v1806 = vpack.c.b16 %v1190, %v1182
    %v1807 = vpack.c.b16 %v1191, %v1183
    %v1808 = vpack.c.b16 %v1192, %v1184
    %v1809 = vpack.c.b16 %v1193, %v1185
    %v1810 = vpack.c.b16 %v1194, %v1186
    %v1811 = vpack.c.b16 %v1203, %v1195
    %v1812 = vpack.c.b16 %v1204, %v1196
    %v1813 = vpack.c.b16 %v1205, %v1197
    %v1814 = vpack.c.b16 %v1206, %v1198
    %v1815 = vpack.c.b16 %v1207, %v1199
    %v1816 = vpack.c.b16 %v1208, %v1200
    %v1817 = vpack.c.b16 %v1209, %v1201
    %v1818 = vpack.c.b16 %v1210, %v1202
    %v1819 = vpack.c.b16 %v1219, %v1211
    %v1820 = vpack.c.b16 %v1220, %v1212
    %v1821 = vpack.c.b16 %v1221, %v1213
    %v1822 = vpack.c.b16 %v1222, %v1214
    %v1823 = vpack.c.b16 %v1223, %v1215
    %v1824 = vpack.c.b16 %v1224, %v1216
    %v1825 = vpack.c.b16 %v1225, %v1217
    %v1826 = vpack.c.b16 %v1226, %v1218
    %v1827 = vpack.c.b16 %v1235, %v1227
    %v1828 = vpack.c.b16 %v1236, %v1228
    %v1829 = vpack.c.b16 %v1237, %v1229
    %v1830 = vpack.c.b16 %v1238, %v1230
    %v1831 = vpack.c.b16 %v1239, %v1231
    %v1832 = vpack.c.b16 %v1240, %v1232
    %v1833 = vpack.c.b16 %v1241, %v1233
    %v1834 = vpack.c.b16 %v1242, %v1234
    %v1835 = vpack.c.b16 %v1251, %v1243
    %v1836 = vpack.c.b16 %v1252, %v1244
    %v1837 = vpack.c.b16 %v1253, %v1245
    %v1838 = vpack.c.b16 %v1254, %v1246
    %v1839 = vpack.c.b16 %v1255, %v1247
    %v1840 = vpack.c.b16 %v1256, %v1248
    %v1841 = vpack.c.b16 %v1257, %v1249
    %v1842 = vpack.c.b16 %v1258, %v1250
    %v1843 = vpack.c.b16 %v1267, %v1259
    %v1844 = vpack.c.b16 %v1268, %v1260
    %v1845 = vpack.c.b16 %v1269, %v1261
    %v1846 = vpack.c.b16 %v1270, %v1262
    %v1847 = vpack.c.b16 %v1271, %v1263
    %v1848 = vpack.c.b16 %v1272, %v1264
    %v1849 = vpack.c.b16 %v1273, %v1265
    %v1850 = vpack.c.b16 %v1274, %v1266
    %v1851 = vpack.c.b16 %v1283, %v1275
    %v1852 = vpack.c.b16 %v1284, %v1276
    %v1853 = vpack.c.b16 %v1285, %v1277
    %v1854 = vpack.c.b16 %v1286, %v1278
    %v1855 = vpack.c.b16 %v1287, %v1279
    %v1856 = vpack.c.b16 %v1288, %v1280
    %v1857 = vpack.c.b16 %v1289, %v1281
    %v1858 = vpack.c.b16 %v1290, %v1282
    %v1859 = vpack.c.b16 %v1299, %v1291
    %v1860 = vpack.c.b16 %v1300, %v1292
    %v1861 = vpack.c.b16 %v1301, %v1293
    %v1862 = vpack.c.b16 %v1302, %v1294
    %v1863 = vpack.c.b16 %v1303, %v1295
    %v1864 = vpack.c.b16 %v1304, %v1296
    %v1865 = vpack.c.b16 %v1305, %v1297
    %v1866 = vpack.c.b16 %v1306, %v1298
    %v1867 = vpack.c.b16 %v1315, %v1307
    %v1868 = vpack.c.b16 %v1316, %v1308
    %v1869 = vpack.c.b16 %v1317, %v1309
    %v1870 = vpack.c.b16 %v1318, %v1310
    %v1871 = vpack.c.b16 %v1319, %v1311
    %v1872 = vpack.c.b16 %v1320, %v1312
    %v1873 = vpack.c.b16 %v1321, %v1313
    %v1874 = vpack.c.b16 %v1322, %v1314
    %v1875 = vpack.c.b16 %v1331, %v1323
    %v1876 = vpack.c.b16 %v1332, %v1324
    %v1877 = vpack.c.b16 %v1333, %v1325
    %v1878 = vpack.c.b16 %v1334, %v1326
    %v1879 = vpack.c.b16 %v1335, %v1327
    %v1880 = vpack.c.b16 %v1336, %v1328
    %v1881 = vpack.c.b16 %v1337, %v1329
    %v1882 = vpack.c.b16 %v1338, %v1330
    %v1883 = vpack.c.b16 %v1347, %v1339
    %v1884 = vpack.c.b16 %v1348, %v1340
    %v1885 = vpack.c.b16 %v1349, %v1341
    %v1886 = vpack.c.b16 %v1350, %v1342
    %v1887 = vpack.c.b16 %v1351, %v1343
    %v1888 = vpack.c.b16 %v1352, %v1344
    %v1889 = vpack.c.b16 %v1353, %v1345
    %v1890 = vpack.c.b16 %v1354, %v1346
    %v1891 = vpack.c.b16 %v1363, %v1355
    %v1892 = vpack.c.b16 %v1364, %v1356
    %v1893 = vpack.c.b16 %v1365, %v1357
    %v1894 = vpack.c.b16 %v1366, %v1358
    %v1895 = vpack.c.b16 %v1367, %v1359
    %v1896 = vpack.c.b16 %v1368, %v1360
    %v1897 = vpack.c.b16 %v1369, %v1361
    %v1898 = vpack.c.b16 %v1370, %v1362
    %v1899 = vpack.c.b16 %v1379, %v1371
    %v1900 = vpack.c.b16 %v1380, %v1372
    %v1901 = vpack.c.b16 %v1381, %v1373
    %v1902 = vpack.c.b16 %v1382, %v1374
    %v1903 = vpack.c.b16 %v1383, %v1375
    %v1904 = vpack.c.b16 %v1384, %v1376
    %v1905 = vpack.c.b16 %v1385, %v1377
    %v1906 = vpack.c.b16 %v1386, %v1378
    %v1907 = vpack.c.b16 %v1395, %v1387
    %v1908 = vpack.c.b16 %v1396, %v1388
    %v1909 = vpack.c.b16 %v1397, %v1389
    %v1910 = vpack.c.b16 %v1398, %v1390
    %v1911 = vpack.c.b16 %v1399, %v1391
    %v1912 = vpack.c.b16 %v1400, %v1392
    %v1913 = vpack.c.b16 %v1401, %v1393
    %v1914 = vpack.c.b16 %v1402, %v1394
    %v1915 = vpack.c.b16 %v1411, %v1403
    %v1916 = vpack.c.b16 %v1412, %v1404
    %v1917 = vpack.c.b16 %v1413, %v1405
    %v1918 = vpack.c.b16 %v1414, %v1406
    %v1919 = vpack.c.b16 %v1415, %v1407
    %v1920 = vpack.c.b16 %v1416, %v1408
    %v1921 = vpack.c.b16 %v1417, %v1409
    %v1922 = vpack.c.b16 %v1418, %v1410
    %v1923 = vpack.c.b16 %v1427, %v1419
    %v1924 = vpack.c.b16 %v1428, %v1420
    %v1925 = vpack.c.b16 %v1429, %v1421
    %v1926 = vpack.c.b16 %v1430, %v1422
    %v1927 = vpack.c.b16 %v1431, %v1423
    %v1928 = vpack.c.b16 %v1432, %v1424
    %v1929 = vpack.c.b16 %v1433, %v1425
    %v1930 = vpack.c.b16 %v1434, %v1426
    %v1931 = vpack.c.b16 %v1443, %v1435
    %v1932 = vpack.c.b16 %v1444, %v1436
    %v1933 = vpack.c.b16 %v1445, %v1437
    %v1934 = vpack.c.b16 %v1446, %v1438
    %v1935 = vpack.c.b16 %v1447, %v1439
    %v1936 = vpack.c.b16 %v1448, %v1440
    %v1937 = vpack.c.b16 %v1449, %v1441
    %v1938 = vpack.c.b16 %v1450, %v1442
    %v1939 = vpack.c.b16 %v1459, %v1451
    %v1940 = vpack.c.b16 %v1460, %v1452
    %v1941 = vpack.c.b16 %v1461, %v1453
    %v1942 = vpack.c.b16 %v1462, %v1454
    %v1943 = vpack.c.b16 %v1463, %v1455
    %v1944 = vpack.c.b16 %v1464, %v1456
    %v1945 = vpack.c.b16 %v1465, %v1457
    %v1946 = vpack.c.b16 %v1466, %v1458
    %v1947 = vpack.c.b16 %v1475, %v1467
    %v1948 = vpack.c.b16 %v1476, %v1468
    %v1949 = vpack.c.b16 %v1477, %v1469
    %v1950 = vpack.c.b16 %v1478, %v1470
    %v1951 = vpack.c.b16 %v1479, %v1471
    %v1952 = vpack.c.b16 %v1480, %v1472
    %v1953 = vpack.c.b16 %v1481, %v1473
    %v1954 = vpack.c.b16 %v1482, %v1474
    %v1955 = vpack.c.b16 %v1491, %v1483
    %v1956 = vpack.c.b16 %v1492, %v1484
    %v1957 = vpack.c.b16 %v1493, %v1485
    %v1958 = vpack.c.b16 %v1494, %v1486
    %v1959 = vpack.c.b16 %v1495, %v1487
    %v1960 = vpack.c.b16 %v1496, %v1488
    %v1961 = vpack.c.b16 %v1497, %v1489
    %v1962 = vpack.c.b16 %v1498, %v1490
    %v1963 = vpack.c.b16 %v1507, %v1499
    %v1964 = vpack.c.b16 %v1508, %v1500
    %v1965 = vpack.c.b16 %v1509, %v1501
    %v1966 = vpack.c.b16 %v1510, %v1502
    %v1967 = vpack.c.b16 %v1511, %v1503
    %v1968 = vpack.c.b16 %v1512, %v1504
    %v1969 = vpack.c.b16 %v1513, %v1505
    %v1970 = vpack.c.b16 %v1514, %v1506
    %v1971 = vpack.c.b16 %v1523, %v1515
    %v1972 = vpack.c.b16 %v1524, %v1516
    %v1973 = vpack.c.b16 %v1525, %v1517
    %v1974 = vpack.c.b16 %v1526, %v1518
    %v1975 = vpack.c.b16 %v1527, %v1519
    %v1976 = vpack.c.b16 %v1528, %v1520
    %v1977 = vpack.c.b16 %v1529, %v1521
    %v1978 = vpack.c.b16 %v1530, %v1522
    %v1979 = vpack.c.b16 %v1539, %v1531
    %v1980 = vpack.c.b16 %v1540, %v1532
    %v1981 = vpack.c.b16 %v1541, %v1533
    %v1982 = vpack.c.b16 %v1542, %v1534
    %v1983 = vpack.c.b16 %v1543, %v1535
    %v1984 = vpack.c.b16 %v1544, %v1536
    %v1985 = vpack.c.b16 %v1545, %v1537
    %v1986 = vpack.c.b16 %v1546, %v1538
    %v1987 = vpack.c.b16 %v1555, %v1547
    %v1988 = vpack.c.b16 %v1556, %v1548
    %v1989 = vpack.c.b16 %v1557, %v1549
    %v1990 = vpack.c.b16 %v1558, %v1550
    %v1991 = vpack.c.b16 %v1559, %v1551
    %v1992 = vpack.c.b16 %v1560, %v1552
    %v1993 = vpack.c.b16 %v1561, %v1553
    %v1994 = vpack.c.b16 %v1562, %v1554
    %v1995 = vpack.c.b16 %v1571, %v1563
    %v1996 = vpack.c.b16 %v1572, %v1564
    %v1997 = vpack.c.b16 %v1573, %v1565
    %v1998 = vpack.c.b16 %v1574, %v1566
    %v1999 = vpack.c.b16 %v1575, %v1567
    %v2000 = vpack.c.b16 %v1576, %v1568
    %v2001 = vpack.c.b16 %v1577, %v1569
    %v2002 = vpack.c.b16 %v1578, %v1570
    %v2003 = vpack.c.b16 %v1587, %v1579
    %v2004 = vpack.c.b16 %v1588, %v1580
    %v2005 = vpack.c.b16 %v1589, %v1581
    %v2006 = vpack.c.b16 %v1590, %v1582
    %v2007 = vpack.c.b16 %v1591, %v1583
    %v2008 = vpack.c.b16 %v1592, %v1584
    %v2009 = vpack.c.b16 %v1593, %v1585
    %v2010 = vpack.c.b16 %v1594, %v1586
    %v2011 = vpack.c.b16 %v1603, %v1595
    %v2012 = vpack.c.b16 %v1604, %v1596
    %v2013 = vpack.c.b16 %v1605, %v1597
    %v2014 = vpack.c.b16 %v1606, %v1598
    %v2015 = vpack.c.b16 %v1607, %v1599
    %v2016 = vpack.c.b16 %v1608, %v1600
    %v2017 = vpack.c.b16 %v1609, %v1601
    %v2018 = vpack.c.b16 %v1610, %v1602
    %v2019 = vpack.c.b16 %v1619, %v1611
    %v2020 = vpack.c.b16 %v1620, %v1612
    %v2021 = vpack.c.b16 %v1621, %v1613
    %v2022 = vpack.c.b16 %v1622, %v1614
    %v2023 = vpack.c.b16 %v1623, %v1615
    %v2024 = vpack.c.b16 %v1624, %v1616
    %v2025 = vpack.c.b16 %v1625, %v1617
    %v2026 = vpack.c.b16 %v1626, %v1618
    %v2027 = vpack.c.b16 %v1635, %v1627
    %v2028 = vpack.c.b16 %v1636, %v1628
    %v2029 = vpack.c.b16 %v1637, %v1629
    %v2030 = vpack.c.b16 %v1638, %v1630
    %v2031 = vpack.c.b16 %v1639, %v1631
    %v2032 = vpack.c.b16 %v1640, %v1632
    %v2033 = vpack.c.b16 %v1641, %v1633
    %v2034 = vpack.c.b16 %v1642, %v1634
    %v2035 = vpack.c.b16 %v1651, %v1643
    %v2036 = vpack.c.b16 %v1652, %v1644
    %v2037 = vpack.c.b16 %v1653, %v1645
    %v2038 = vpack.c.b16 %v1654, %v1646
    %v2039 = vpack.c.b16 %v1655, %v1647
    %v2040 = vpack.c.b16 %v1656, %v1648
    %v2041 = vpack.c.b16 %v1657, %v1649
    %v2042 = vpack.c.b16 %v1658, %v1650
    %2427 = vmatpush.bf16.msra.mxu0 %v1715
    %2428 = vmatpush.bf16.msra.mxu0 %v1707
    %2429 = vmatpush.bf16.msra.mxu0 %v1699
    %2430 = vmatpush.bf16.msra.mxu0 %v1691
    %2431 = vmatpush.bf16.msra.mxu0 %v1683
    %2432 = vmatpush.bf16.msra.mxu0 %v1675
    %2433 = vmatpush.bf16.msra.mxu0 %v1667
    %2434 = vmatpush.bf16.msra.mxu0 %v1659
    %2435 = vmatmul.bf16.gmra.mxu0 %v99
    %v2436 = vpop.f32.mrf.mxu0
    %v2437 = vadd.f32 %v491, %v2436
    %v2438 = vpop.f32.mrf.mxu0
    %2439 = vdwg.mxu0
    %2440 = vmatpush.bf16.msra.mxu0 %v1779
    %2441 = vmatpush.bf16.msra.mxu0 %v1771
    %2442 = vmatpush.bf16.msra.mxu0 %v1763
    %2443 = vmatpush.bf16.msra.mxu0 %v1755
    %2444 = vmatpush.bf16.msra.mxu0 %v1747
    %2445 = vmatpush.bf16.msra.mxu0 %v1739
    %2446 = vmatpush.bf16.msra.mxu0 %v1731
    %2447 = vmatpush.bf16.msra.mxu0 %v1723
    %2448 = vmatmul.bf16.gmra.mxu0 %v100
    %v2449 = vpop.f32.mrf.mxu0
    %v2450 = vadd.f32 %v2437, %v2449
    %v2451 = vpop.f32.mrf.mxu0
    %2452 = vdwg.mxu0
    %2453 = vmatpush.bf16.msra.mxu0 %v1843
    %2454 = vmatpush.bf16.msra.mxu0 %v1835
    %2455 = vmatpush.bf16.msra.mxu0 %v1827
    %2456 = vmatpush.bf16.msra.mxu0 %v1819
    %2457 = vmatpush.bf16.msra.mxu0 %v1811
    %2458 = vmatpush.bf16.msra.mxu0 %v1803
    %2459 = vmatpush.bf16.msra.mxu0 %v1795
    %2460 = vmatpush.bf16.msra.mxu0 %v1787
    %2461 = vmatmul.bf16.gmra.mxu0 %v101
    %v2462 = vpop.f32.mrf.mxu0
    %v2463 = vadd.f32 %v2450, %v2462
    %v2464 = vpop.f32.mrf.mxu0
    %2465 = vdwg.mxu0
    %2466 = vmatpush.bf16.msra.mxu0 %v1907
    %2467 = vmatpush.bf16.msra.mxu0 %v1899
    %2468 = vmatpush.bf16.msra.mxu0 %v1891
    %2469 = vmatpush.bf16.msra.mxu0 %v1883
    %2470 = vmatpush.bf16.msra.mxu0 %v1875
    %2471 = vmatpush.bf16.msra.mxu0 %v1867
    %2472 = vmatpush.bf16.msra.mxu0 %v1859
    %2473 = vmatpush.bf16.msra.mxu0 %v1851
    %2474 = vmatmul.bf16.gmra.mxu0 %v102
    %v2475 = vpop.f32.mrf.mxu0
    %v2476 = vadd.f32 %v2463, %v2475
    %v2477 = vpop.f32.mrf.mxu0
    %2478 = vdwg.mxu0
    %2479 = vmatpush.bf16.msra.mxu0 %v1971
    %2480 = vmatpush.bf16.msra.mxu0 %v1963
    %2481 = vmatpush.bf16.msra.mxu0 %v1955
    %2482 = vmatpush.bf16.msra.mxu0 %v1947
    %2483 = vmatpush.bf16.msra.mxu0 %v1939
    %2484 = vmatpush.bf16.msra.mxu0 %v1931
    %2485 = vmatpush.bf16.msra.mxu0 %v1923
    %2486 = vmatpush.bf16.msra.mxu0 %v1915
    %2487 = vmatmul.bf16.gmra.mxu0 %v103
    %v2488 = vpop.f32.mrf.mxu0
    %v2489 = vadd.f32 %v2476, %v2488
    %v2490 = vpop.f32.mrf.mxu0
    %2491 = vdwg.mxu0
    %2492 = vmatpush.bf16.msra.mxu0 %v2035
    %2493 = vmatpush.bf16.msra.mxu0 %v2027
    %2494 = vmatpush.bf16.msra.mxu0 %v2019
    %2495 = vmatpush.bf16.msra.mxu0 %v2011
    %2496 = vmatpush.bf16.msra.mxu0 %v2003
    %2497 = vmatpush.bf16.msra.mxu0 %v1995
    %2498 = vmatpush.bf16.msra.mxu0 %v1987
    %2499 = vmatpush.bf16.msra.mxu0 %v1979
    %2500 = vmatmul.bf16.gmra.mxu0 %v104
    %v2501 = vpop.f32.mrf.mxu0
    %v2502 = vadd.f32 %v2489, %v2501
    %v2503 = vpop.f32.mrf.mxu0
    %2504 = vdwg.mxu0
    %2505 = vmatpush.bf16.msra.mxu0 %v1716
    %2506 = vmatpush.bf16.msra.mxu0 %v1708
    %2507 = vmatpush.bf16.msra.mxu0 %v1700
    %2508 = vmatpush.bf16.msra.mxu0 %v1692
    %2509 = vmatpush.bf16.msra.mxu0 %v1684
    %2510 = vmatpush.bf16.msra.mxu0 %v1676
    %2511 = vmatpush.bf16.msra.mxu0 %v1668
    %2512 = vmatpush.bf16.msra.mxu0 %v1660
    %2513 = vmatmul.bf16.gmra.mxu0 %v99
    %v2514 = vpop.f32.mrf.mxu0
    %v2515 = vadd.f32 %v492, %v2514
    %v2516 = vpop.f32.mrf.mxu0
    %2517 = vdwg.mxu0
    %2518 = vmatpush.bf16.msra.mxu0 %v1780
    %2519 = vmatpush.bf16.msra.mxu0 %v1772
    %2520 = vmatpush.bf16.msra.mxu0 %v1764
    %2521 = vmatpush.bf16.msra.mxu0 %v1756
    %2522 = vmatpush.bf16.msra.mxu0 %v1748
    %2523 = vmatpush.bf16.msra.mxu0 %v1740
    %2524 = vmatpush.bf16.msra.mxu0 %v1732
    %2525 = vmatpush.bf16.msra.mxu0 %v1724
    %2526 = vmatmul.bf16.gmra.mxu0 %v100
    %v2527 = vpop.f32.mrf.mxu0
    %v2528 = vadd.f32 %v2515, %v2527
    %v2529 = vpop.f32.mrf.mxu0
    %2530 = vdwg.mxu0
    %2531 = vmatpush.bf16.msra.mxu0 %v1844
    %2532 = vmatpush.bf16.msra.mxu0 %v1836
    %2533 = vmatpush.bf16.msra.mxu0 %v1828
    %2534 = vmatpush.bf16.msra.mxu0 %v1820
    %2535 = vmatpush.bf16.msra.mxu0 %v1812
    %2536 = vmatpush.bf16.msra.mxu0 %v1804
    %2537 = vmatpush.bf16.msra.mxu0 %v1796
    %2538 = vmatpush.bf16.msra.mxu0 %v1788
    %2539 = vmatmul.bf16.gmra.mxu0 %v101
    %v2540 = vpop.f32.mrf.mxu0
    %v2541 = vadd.f32 %v2528, %v2540
    %v2542 = vpop.f32.mrf.mxu0
    %2543 = vdwg.mxu0
    %2544 = vmatpush.bf16.msra.mxu0 %v1908
    %2545 = vmatpush.bf16.msra.mxu0 %v1900
    %2546 = vmatpush.bf16.msra.mxu0 %v1892
    %2547 = vmatpush.bf16.msra.mxu0 %v1884
    %2548 = vmatpush.bf16.msra.mxu0 %v1876
    %2549 = vmatpush.bf16.msra.mxu0 %v1868
    %2550 = vmatpush.bf16.msra.mxu0 %v1860
    %2551 = vmatpush.bf16.msra.mxu0 %v1852
    %2552 = vmatmul.bf16.gmra.mxu0 %v102
    %v2553 = vpop.f32.mrf.mxu0
    %v2554 = vadd.f32 %v2541, %v2553
    %v2555 = vpop.f32.mrf.mxu0
    %2556 = vdwg.mxu0
    %2557 = vmatpush.bf16.msra.mxu0 %v1972
    %2558 = vmatpush.bf16.msra.mxu0 %v1964
    %2559 = vmatpush.bf16.msra.mxu0 %v1956
    %2560 = vmatpush.bf16.msra.mxu0 %v1948
    %2561 = vmatpush.bf16.msra.mxu0 %v1940
    %2562 = vmatpush.bf16.msra.mxu0 %v1932
    %2563 = vmatpush.bf16.msra.mxu0 %v1924
    %2564 = vmatpush.bf16.msra.mxu0 %v1916
    %2565 = vmatmul.bf16.gmra.mxu0 %v103
    %v2566 = vpop.f32.mrf.mxu0
    %v2567 = vadd.f32 %v2554, %v2566
    %v2568 = vpop.f32.mrf.mxu0
    %2569 = vdwg.mxu0
    %2570 = vmatpush.bf16.msra.mxu0 %v2036
    %2571 = vmatpush.bf16.msra.mxu0 %v2028
    %2572 = vmatpush.bf16.msra.mxu0 %v2020
    %2573 = vmatpush.bf16.msra.mxu0 %v2012
    %2574 = vmatpush.bf16.msra.mxu0 %v2004
    %2575 = vmatpush.bf16.msra.mxu0 %v1996
    %2576 = vmatpush.bf16.msra.mxu0 %v1988
    %2577 = vmatpush.bf16.msra.mxu0 %v1980
    %2578 = vmatmul.bf16.gmra.mxu0 %v104
    %v2579 = vpop.f32.mrf.mxu0
    %v2580 = vadd.f32 %v2567, %v2579
    %v2581 = vpop.f32.mrf.mxu0
    %2582 = vdwg.mxu0
    %2583 = vmatpush.bf16.msra.mxu0 %v1717
    %2584 = vmatpush.bf16.msra.mxu0 %v1709
    %2585 = vmatpush.bf16.msra.mxu0 %v1701
    %2586 = vmatpush.bf16.msra.mxu0 %v1693
    %2587 = vmatpush.bf16.msra.mxu0 %v1685
    %2588 = vmatpush.bf16.msra.mxu0 %v1677
    %2589 = vmatpush.bf16.msra.mxu0 %v1669
    %2590 = vmatpush.bf16.msra.mxu0 %v1661
    %2591 = vmatmul.bf16.gmra.mxu0 %v99
    %v2592 = vpop.f32.mrf.mxu0
    %v2593 = vadd.f32 %v493, %v2592
    %v2594 = vpop.f32.mrf.mxu0
    %2595 = vdwg.mxu0
    %2596 = vmatpush.bf16.msra.mxu0 %v1781
    %2597 = vmatpush.bf16.msra.mxu0 %v1773
    %2598 = vmatpush.bf16.msra.mxu0 %v1765
    %2599 = vmatpush.bf16.msra.mxu0 %v1757
    %2600 = vmatpush.bf16.msra.mxu0 %v1749
    %2601 = vmatpush.bf16.msra.mxu0 %v1741
    %2602 = vmatpush.bf16.msra.mxu0 %v1733
    %2603 = vmatpush.bf16.msra.mxu0 %v1725
    %2604 = vmatmul.bf16.gmra.mxu0 %v100
    %v2605 = vpop.f32.mrf.mxu0
    %v2606 = vadd.f32 %v2593, %v2605
    %v2607 = vpop.f32.mrf.mxu0
    %2608 = vdwg.mxu0
    %2609 = vmatpush.bf16.msra.mxu0 %v1845
    %2610 = vmatpush.bf16.msra.mxu0 %v1837
    %2611 = vmatpush.bf16.msra.mxu0 %v1829
    %2612 = vmatpush.bf16.msra.mxu0 %v1821
    %2613 = vmatpush.bf16.msra.mxu0 %v1813
    %2614 = vmatpush.bf16.msra.mxu0 %v1805
    %2615 = vmatpush.bf16.msra.mxu0 %v1797
    %2616 = vmatpush.bf16.msra.mxu0 %v1789
    %2617 = vmatmul.bf16.gmra.mxu0 %v101
    %v2618 = vpop.f32.mrf.mxu0
    %v2619 = vadd.f32 %v2606, %v2618
    %v2620 = vpop.f32.mrf.mxu0
    %2621 = vdwg.mxu0
    %2622 = vmatpush.bf16.msra.mxu0 %v1909
    %2623 = vmatpush.bf16.msra.mxu0 %v1901
    %2624 = vmatpush.bf16.msra.mxu0 %v1893
    %2625 = vmatpush.bf16.msra.mxu0 %v1885
    %2626 = vmatpush.bf16.msra.mxu0 %v1877
    %2627 = vmatpush.bf16.msra.mxu0 %v1869
    %2628 = vmatpush.bf16.msra.mxu0 %v1861
    %2629 = vmatpush.bf16.msra.mxu0 %v1853
    %2630 = vmatmul.bf16.gmra.mxu0 %v102
    %v2631 = vpop.f32.mrf.mxu0
    %v2632 = vadd.f32 %v2619, %v2631
    %v2633 = vpop.f32.mrf.mxu0
    %2634 = vdwg.mxu0
    %2635 = vmatpush.bf16.msra.mxu0 %v1973
    %2636 = vmatpush.bf16.msra.mxu0 %v1965
    %2637 = vmatpush.bf16.msra.mxu0 %v1957
    %2638 = vmatpush.bf16.msra.mxu0 %v1949
    %2639 = vmatpush.bf16.msra.mxu0 %v1941
    %2640 = vmatpush.bf16.msra.mxu0 %v1933
    %2641 = vmatpush.bf16.msra.mxu0 %v1925
    %2642 = vmatpush.bf16.msra.mxu0 %v1917
    %2643 = vmatmul.bf16.gmra.mxu0 %v103
    %v2644 = vpop.f32.mrf.mxu0
    %v2645 = vadd.f32 %v2632, %v2644
    %v2646 = vpop.f32.mrf.mxu0
    %2647 = vdwg.mxu0
    %2648 = vmatpush.bf16.msra.mxu0 %v2037
    %2649 = vmatpush.bf16.msra.mxu0 %v2029
    %2650 = vmatpush.bf16.msra.mxu0 %v2021
    %2651 = vmatpush.bf16.msra.mxu0 %v2013
    %2652 = vmatpush.bf16.msra.mxu0 %v2005
    %2653 = vmatpush.bf16.msra.mxu0 %v1997
    %2654 = vmatpush.bf16.msra.mxu0 %v1989
    %2655 = vmatpush.bf16.msra.mxu0 %v1981
    %2656 = vmatmul.bf16.gmra.mxu0 %v104
    %v2657 = vpop.f32.mrf.mxu0
    %v2658 = vadd.f32 %v2645, %v2657
    %v2659 = vpop.f32.mrf.mxu0
    %2660 = vdwg.mxu0
    %2661 = vmatpush.bf16.msra.mxu0 %v1718
    %2662 = vmatpush.bf16.msra.mxu0 %v1710
    %2663 = vmatpush.bf16.msra.mxu0 %v1702
    %2664 = vmatpush.bf16.msra.mxu0 %v1694
    %2665 = vmatpush.bf16.msra.mxu0 %v1686
    %2666 = vmatpush.bf16.msra.mxu0 %v1678
    %2667 = vmatpush.bf16.msra.mxu0 %v1670
    %2668 = vmatpush.bf16.msra.mxu0 %v1662
    %2669 = vmatmul.bf16.gmra.mxu0 %v99
    %v2670 = vpop.f32.mrf.mxu0
    %v2671 = vadd.f32 %v494, %v2670
    %v2672 = vpop.f32.mrf.mxu0
    %2673 = vdwg.mxu0
    %2674 = vmatpush.bf16.msra.mxu0 %v1782
    %2675 = vmatpush.bf16.msra.mxu0 %v1774
    %2676 = vmatpush.bf16.msra.mxu0 %v1766
    %2677 = vmatpush.bf16.msra.mxu0 %v1758
    %2678 = vmatpush.bf16.msra.mxu0 %v1750
    %2679 = vmatpush.bf16.msra.mxu0 %v1742
    %2680 = vmatpush.bf16.msra.mxu0 %v1734
    %2681 = vmatpush.bf16.msra.mxu0 %v1726
    %2682 = vmatmul.bf16.gmra.mxu0 %v100
    %v2683 = vpop.f32.mrf.mxu0
    %v2684 = vadd.f32 %v2671, %v2683
    %v2685 = vpop.f32.mrf.mxu0
    %2686 = vdwg.mxu0
    %2687 = vmatpush.bf16.msra.mxu0 %v1846
    %2688 = vmatpush.bf16.msra.mxu0 %v1838
    %2689 = vmatpush.bf16.msra.mxu0 %v1830
    %2690 = vmatpush.bf16.msra.mxu0 %v1822
    %2691 = vmatpush.bf16.msra.mxu0 %v1814
    %2692 = vmatpush.bf16.msra.mxu0 %v1806
    %2693 = vmatpush.bf16.msra.mxu0 %v1798
    %2694 = vmatpush.bf16.msra.mxu0 %v1790
    %2695 = vmatmul.bf16.gmra.mxu0 %v101
    %v2696 = vpop.f32.mrf.mxu0
    %v2697 = vadd.f32 %v2684, %v2696
    %v2698 = vpop.f32.mrf.mxu0
    %2699 = vdwg.mxu0
    %2700 = vmatpush.bf16.msra.mxu0 %v1910
    %2701 = vmatpush.bf16.msra.mxu0 %v1902
    %2702 = vmatpush.bf16.msra.mxu0 %v1894
    %2703 = vmatpush.bf16.msra.mxu0 %v1886
    %2704 = vmatpush.bf16.msra.mxu0 %v1878
    %2705 = vmatpush.bf16.msra.mxu0 %v1870
    %2706 = vmatpush.bf16.msra.mxu0 %v1862
    %2707 = vmatpush.bf16.msra.mxu0 %v1854
    %2708 = vmatmul.bf16.gmra.mxu0 %v102
    %v2709 = vpop.f32.mrf.mxu0
    %v2710 = vadd.f32 %v2697, %v2709
    %v2711 = vpop.f32.mrf.mxu0
    %2712 = vdwg.mxu0
    %2713 = vmatpush.bf16.msra.mxu0 %v1974
    %2714 = vmatpush.bf16.msra.mxu0 %v1966
    %2715 = vmatpush.bf16.msra.mxu0 %v1958
    %2716 = vmatpush.bf16.msra.mxu0 %v1950
    %2717 = vmatpush.bf16.msra.mxu0 %v1942
    %2718 = vmatpush.bf16.msra.mxu0 %v1934
    %2719 = vmatpush.bf16.msra.mxu0 %v1926
    %2720 = vmatpush.bf16.msra.mxu0 %v1918
    %2721 = vmatmul.bf16.gmra.mxu0 %v103
    %v2722 = vpop.f32.mrf.mxu0
    %v2723 = vadd.f32 %v2710, %v2722
    %v2724 = vpop.f32.mrf.mxu0
    %2725 = vdwg.mxu0
    %2726 = vmatpush.bf16.msra.mxu0 %v2038
    %2727 = vmatpush.bf16.msra.mxu0 %v2030
    %2728 = vmatpush.bf16.msra.mxu0 %v2022
    %2729 = vmatpush.bf16.msra.mxu0 %v2014
    %2730 = vmatpush.bf16.msra.mxu0 %v2006
    %2731 = vmatpush.bf16.msra.mxu0 %v1998
    %2732 = vmatpush.bf16.msra.mxu0 %v1990
    %2733 = vmatpush.bf16.msra.mxu0 %v1982
    %2734 = vmatmul.bf16.gmra.mxu0 %v104
    %v2735 = vpop.f32.mrf.mxu0
    %v2736 = vadd.f32 %v2723, %v2735
    %v2737 = vpop.f32.mrf.mxu0
    %2738 = vdwg.mxu0
    %2739 = vmatpush.bf16.msra.mxu0 %v1719
    %2740 = vmatpush.bf16.msra.mxu0 %v1711
    %2741 = vmatpush.bf16.msra.mxu0 %v1703
    %2742 = vmatpush.bf16.msra.mxu0 %v1695
    %2743 = vmatpush.bf16.msra.mxu0 %v1687
    %2744 = vmatpush.bf16.msra.mxu0 %v1679
    %2745 = vmatpush.bf16.msra.mxu0 %v1671
    %2746 = vmatpush.bf16.msra.mxu0 %v1663
    %2747 = vmatmul.bf16.gmra.mxu0 %v99
    %v2748 = vpop.f32.mrf.mxu0
    %v2749 = vadd.f32 %v495, %v2748
    %v2750 = vpop.f32.mrf.mxu0
    %2751 = vdwg.mxu0
    %2752 = vmatpush.bf16.msra.mxu0 %v1783
    %2753 = vmatpush.bf16.msra.mxu0 %v1775
    %2754 = vmatpush.bf16.msra.mxu0 %v1767
    %2755 = vmatpush.bf16.msra.mxu0 %v1759
    %2756 = vmatpush.bf16.msra.mxu0 %v1751
    %2757 = vmatpush.bf16.msra.mxu0 %v1743
    %2758 = vmatpush.bf16.msra.mxu0 %v1735
    %2759 = vmatpush.bf16.msra.mxu0 %v1727
    %2760 = vmatmul.bf16.gmra.mxu0 %v100
    %v2761 = vpop.f32.mrf.mxu0
    %v2762 = vadd.f32 %v2749, %v2761
    %v2763 = vpop.f32.mrf.mxu0
    %2764 = vdwg.mxu0
    %2765 = vmatpush.bf16.msra.mxu0 %v1847
    %2766 = vmatpush.bf16.msra.mxu0 %v1839
    %2767 = vmatpush.bf16.msra.mxu0 %v1831
    %2768 = vmatpush.bf16.msra.mxu0 %v1823
    %2769 = vmatpush.bf16.msra.mxu0 %v1815
    %2770 = vmatpush.bf16.msra.mxu0 %v1807
    %2771 = vmatpush.bf16.msra.mxu0 %v1799
    %2772 = vmatpush.bf16.msra.mxu0 %v1791
    %2773 = vmatmul.bf16.gmra.mxu0 %v101
    %v2774 = vpop.f32.mrf.mxu0
    %v2775 = vadd.f32 %v2762, %v2774
    %v2776 = vpop.f32.mrf.mxu0
    %2777 = vdwg.mxu0
    %2778 = vmatpush.bf16.msra.mxu0 %v1911
    %2779 = vmatpush.bf16.msra.mxu0 %v1903
    %2780 = vmatpush.bf16.msra.mxu0 %v1895
    %2781 = vmatpush.bf16.msra.mxu0 %v1887
    %2782 = vmatpush.bf16.msra.mxu0 %v1879
    %2783 = vmatpush.bf16.msra.mxu0 %v1871
    %2784 = vmatpush.bf16.msra.mxu0 %v1863
    %2785 = vmatpush.bf16.msra.mxu0 %v1855
    %2786 = vmatmul.bf16.gmra.mxu0 %v102
    %v2787 = vpop.f32.mrf.mxu0
    %v2788 = vadd.f32 %v2775, %v2787
    %v2789 = vpop.f32.mrf.mxu0
    %2790 = vdwg.mxu0
    %2791 = vmatpush.bf16.msra.mxu0 %v1975
    %2792 = vmatpush.bf16.msra.mxu0 %v1967
    %2793 = vmatpush.bf16.msra.mxu0 %v1959
    %2794 = vmatpush.bf16.msra.mxu0 %v1951
    %2795 = vmatpush.bf16.msra.mxu0 %v1943
    %2796 = vmatpush.bf16.msra.mxu0 %v1935
    %2797 = vmatpush.bf16.msra.mxu0 %v1927
    %2798 = vmatpush.bf16.msra.mxu0 %v1919
    %2799 = vmatmul.bf16.gmra.mxu0 %v103
    %v2800 = vpop.f32.mrf.mxu0
    %v2801 = vadd.f32 %v2788, %v2800
    %v2802 = vpop.f32.mrf.mxu0
    %2803 = vdwg.mxu0
    %2804 = vmatpush.bf16.msra.mxu0 %v2039
    %2805 = vmatpush.bf16.msra.mxu0 %v2031
    %2806 = vmatpush.bf16.msra.mxu0 %v2023
    %2807 = vmatpush.bf16.msra.mxu0 %v2015
    %2808 = vmatpush.bf16.msra.mxu0 %v2007
    %2809 = vmatpush.bf16.msra.mxu0 %v1999
    %2810 = vmatpush.bf16.msra.mxu0 %v1991
    %2811 = vmatpush.bf16.msra.mxu0 %v1983
    %2812 = vmatmul.bf16.gmra.mxu0 %v104
    %v2813 = vpop.f32.mrf.mxu0
    %v2814 = vadd.f32 %v2801, %v2813
    %v2815 = vpop.f32.mrf.mxu0
    %2816 = vdwg.mxu0
    %2817 = vmatpush.bf16.msra.mxu0 %v1720
    %2818 = vmatpush.bf16.msra.mxu0 %v1712
    %2819 = vmatpush.bf16.msra.mxu0 %v1704
    %2820 = vmatpush.bf16.msra.mxu0 %v1696
    %2821 = vmatpush.bf16.msra.mxu0 %v1688
    %2822 = vmatpush.bf16.msra.mxu0 %v1680
    %2823 = vmatpush.bf16.msra.mxu0 %v1672
    %2824 = vmatpush.bf16.msra.mxu0 %v1664
    %2825 = vmatmul.bf16.gmra.mxu0 %v99
    %v2826 = vpop.f32.mrf.mxu0
    %v2827 = vadd.f32 %v496, %v2826
    %v2828 = vpop.f32.mrf.mxu0
    %2829 = vdwg.mxu0
    %2830 = vmatpush.bf16.msra.mxu0 %v1784
    %2831 = vmatpush.bf16.msra.mxu0 %v1776
    %2832 = vmatpush.bf16.msra.mxu0 %v1768
    %2833 = vmatpush.bf16.msra.mxu0 %v1760
    %2834 = vmatpush.bf16.msra.mxu0 %v1752
    %2835 = vmatpush.bf16.msra.mxu0 %v1744
    %2836 = vmatpush.bf16.msra.mxu0 %v1736
    %2837 = vmatpush.bf16.msra.mxu0 %v1728
    %2838 = vmatmul.bf16.gmra.mxu0 %v100
    %v2839 = vpop.f32.mrf.mxu0
    %v2840 = vadd.f32 %v2827, %v2839
    %v2841 = vpop.f32.mrf.mxu0
    %2842 = vdwg.mxu0
    %2843 = vmatpush.bf16.msra.mxu0 %v1848
    %2844 = vmatpush.bf16.msra.mxu0 %v1840
    %2845 = vmatpush.bf16.msra.mxu0 %v1832
    %2846 = vmatpush.bf16.msra.mxu0 %v1824
    %2847 = vmatpush.bf16.msra.mxu0 %v1816
    %2848 = vmatpush.bf16.msra.mxu0 %v1808
    %2849 = vmatpush.bf16.msra.mxu0 %v1800
    %2850 = vmatpush.bf16.msra.mxu0 %v1792
    %2851 = vmatmul.bf16.gmra.mxu0 %v101
    %v2852 = vpop.f32.mrf.mxu0
    %v2853 = vadd.f32 %v2840, %v2852
    %v2854 = vpop.f32.mrf.mxu0
    %2855 = vdwg.mxu0
    %2856 = vmatpush.bf16.msra.mxu0 %v1912
    %2857 = vmatpush.bf16.msra.mxu0 %v1904
    %2858 = vmatpush.bf16.msra.mxu0 %v1896
    %2859 = vmatpush.bf16.msra.mxu0 %v1888
    %2860 = vmatpush.bf16.msra.mxu0 %v1880
    %2861 = vmatpush.bf16.msra.mxu0 %v1872
    %2862 = vmatpush.bf16.msra.mxu0 %v1864
    %2863 = vmatpush.bf16.msra.mxu0 %v1856
    %2864 = vmatmul.bf16.gmra.mxu0 %v102
    %v2865 = vpop.f32.mrf.mxu0
    %v2866 = vadd.f32 %v2853, %v2865
    %v2867 = vpop.f32.mrf.mxu0
    %2868 = vdwg.mxu0
    %2869 = vmatpush.bf16.msra.mxu0 %v1976
    %2870 = vmatpush.bf16.msra.mxu0 %v1968
    %2871 = vmatpush.bf16.msra.mxu0 %v1960
    %2872 = vmatpush.bf16.msra.mxu0 %v1952
    %2873 = vmatpush.bf16.msra.mxu0 %v1944
    %2874 = vmatpush.bf16.msra.mxu0 %v1936
    %2875 = vmatpush.bf16.msra.mxu0 %v1928
    %2876 = vmatpush.bf16.msra.mxu0 %v1920
    %2877 = vmatmul.bf16.gmra.mxu0 %v103
    %v2878 = vpop.f32.mrf.mxu0
    %v2879 = vadd.f32 %v2866, %v2878
    %v2880 = vpop.f32.mrf.mxu0
    %2881 = vdwg.mxu0
    %2882 = vmatpush.bf16.msra.mxu0 %v2040
    %2883 = vmatpush.bf16.msra.mxu0 %v2032
    %2884 = vmatpush.bf16.msra.mxu0 %v2024
    %2885 = vmatpush.bf16.msra.mxu0 %v2016
    %2886 = vmatpush.bf16.msra.mxu0 %v2008
    %2887 = vmatpush.bf16.msra.mxu0 %v2000
    %2888 = vmatpush.bf16.msra.mxu0 %v1992
    %2889 = vmatpush.bf16.msra.mxu0 %v1984
    %2890 = vmatmul.bf16.gmra.mxu0 %v104
    %v2891 = vpop.f32.mrf.mxu0
    %v2892 = vadd.f32 %v2879, %v2891
    %v2893 = vpop.f32.mrf.mxu0
    %2894 = vdwg.mxu0
    %2895 = vmatpush.bf16.msra.mxu0 %v1721
    %2896 = vmatpush.bf16.msra.mxu0 %v1713
    %2897 = vmatpush.bf16.msra.mxu0 %v1705
    %2898 = vmatpush.bf16.msra.mxu0 %v1697
    %2899 = vmatpush.bf16.msra.mxu0 %v1689
    %2900 = vmatpush.bf16.msra.mxu0 %v1681
    %2901 = vmatpush.bf16.msra.mxu0 %v1673
    %2902 = vmatpush.bf16.msra.mxu0 %v1665
    %2903 = vmatmul.bf16.gmra.mxu0 %v99
    %v2904 = vpop.f32.mrf.mxu0
    %v2905 = vadd.f32 %v497, %v2904
    %v2906 = vpop.f32.mrf.mxu0
    %2907 = vdwg.mxu0
    %2908 = vmatpush.bf16.msra.mxu0 %v1785
    %2909 = vmatpush.bf16.msra.mxu0 %v1777
    %2910 = vmatpush.bf16.msra.mxu0 %v1769
    %2911 = vmatpush.bf16.msra.mxu0 %v1761
    %2912 = vmatpush.bf16.msra.mxu0 %v1753
    %2913 = vmatpush.bf16.msra.mxu0 %v1745
    %2914 = vmatpush.bf16.msra.mxu0 %v1737
    %2915 = vmatpush.bf16.msra.mxu0 %v1729
    %2916 = vmatmul.bf16.gmra.mxu0 %v100
    %v2917 = vpop.f32.mrf.mxu0
    %v2918 = vadd.f32 %v2905, %v2917
    %v2919 = vpop.f32.mrf.mxu0
    %2920 = vdwg.mxu0
    %2921 = vmatpush.bf16.msra.mxu0 %v1849
    %2922 = vmatpush.bf16.msra.mxu0 %v1841
    %2923 = vmatpush.bf16.msra.mxu0 %v1833
    %2924 = vmatpush.bf16.msra.mxu0 %v1825
    %2925 = vmatpush.bf16.msra.mxu0 %v1817
    %2926 = vmatpush.bf16.msra.mxu0 %v1809
    %2927 = vmatpush.bf16.msra.mxu0 %v1801
    %2928 = vmatpush.bf16.msra.mxu0 %v1793
    %2929 = vmatmul.bf16.gmra.mxu0 %v101
    %v2930 = vpop.f32.mrf.mxu0
    %v2931 = vadd.f32 %v2918, %v2930
    %v2932 = vpop.f32.mrf.mxu0
    %2933 = vdwg.mxu0
    %2934 = vmatpush.bf16.msra.mxu0 %v1913
    %2935 = vmatpush.bf16.msra.mxu0 %v1905
    %2936 = vmatpush.bf16.msra.mxu0 %v1897
    %2937 = vmatpush.bf16.msra.mxu0 %v1889
    %2938 = vmatpush.bf16.msra.mxu0 %v1881
    %2939 = vmatpush.bf16.msra.mxu0 %v1873
    %2940 = vmatpush.bf16.msra.mxu0 %v1865
    %2941 = vmatpush.bf16.msra.mxu0 %v1857
    %2942 = vmatmul.bf16.gmra.mxu0 %v102
    %v2943 = vpop.f32.mrf.mxu0
    %v2944 = vadd.f32 %v2931, %v2943
    %v2945 = vpop.f32.mrf.mxu0
    %2946 = vdwg.mxu0
    %2947 = vmatpush.bf16.msra.mxu0 %v1977
    %2948 = vmatpush.bf16.msra.mxu0 %v1969
    %2949 = vmatpush.bf16.msra.mxu0 %v1961
    %2950 = vmatpush.bf16.msra.mxu0 %v1953
    %2951 = vmatpush.bf16.msra.mxu0 %v1945
    %2952 = vmatpush.bf16.msra.mxu0 %v1937
    %2953 = vmatpush.bf16.msra.mxu0 %v1929
    %2954 = vmatpush.bf16.msra.mxu0 %v1921
    %2955 = vmatmul.bf16.gmra.mxu0 %v103
    %v2956 = vpop.f32.mrf.mxu0
    %v2957 = vadd.f32 %v2944, %v2956
    %v2958 = vpop.f32.mrf.mxu0
    %2959 = vdwg.mxu0
    %2960 = vmatpush.bf16.msra.mxu0 %v2041
    %2961 = vmatpush.bf16.msra.mxu0 %v2033
    %2962 = vmatpush.bf16.msra.mxu0 %v2025
    %2963 = vmatpush.bf16.msra.mxu0 %v2017
    %2964 = vmatpush.bf16.msra.mxu0 %v2009
    %2965 = vmatpush.bf16.msra.mxu0 %v2001
    %2966 = vmatpush.bf16.msra.mxu0 %v1993
    %2967 = vmatpush.bf16.msra.mxu0 %v1985
    %2968 = vmatmul.bf16.gmra.mxu0 %v104
    %v2969 = vpop.f32.mrf.mxu0
    %v2970 = vadd.f32 %v2957, %v2969
    %v2971 = vpop.f32.mrf.mxu0
    %2972 = vdwg.mxu0
    %2973 = vmatpush.bf16.msra.mxu0 %v1722
    %2974 = vmatpush.bf16.msra.mxu0 %v1714
    %2975 = vmatpush.bf16.msra.mxu0 %v1706
    %2976 = vmatpush.bf16.msra.mxu0 %v1698
    %2977 = vmatpush.bf16.msra.mxu0 %v1690
    %2978 = vmatpush.bf16.msra.mxu0 %v1682
    %2979 = vmatpush.bf16.msra.mxu0 %v1674
    %2980 = vmatpush.bf16.msra.mxu0 %v1666
    %2981 = vmatmul.bf16.gmra.mxu0 %v99
    %v2982 = vpop.f32.mrf.mxu0
    %v2983 = vadd.f32 %v498, %v2982
    %v2984 = vpop.f32.mrf.mxu0
    %2985 = vdwg.mxu0
    %2986 = vmatpush.bf16.msra.mxu0 %v1786
    %2987 = vmatpush.bf16.msra.mxu0 %v1778
    %2988 = vmatpush.bf16.msra.mxu0 %v1770
    %2989 = vmatpush.bf16.msra.mxu0 %v1762
    %2990 = vmatpush.bf16.msra.mxu0 %v1754
    %2991 = vmatpush.bf16.msra.mxu0 %v1746
    %2992 = vmatpush.bf16.msra.mxu0 %v1738
    %2993 = vmatpush.bf16.msra.mxu0 %v1730
    %2994 = vmatmul.bf16.gmra.mxu0 %v100
    %v2995 = vpop.f32.mrf.mxu0
    %v2996 = vadd.f32 %v2983, %v2995
    %v2997 = vpop.f32.mrf.mxu0
    %2998 = vdwg.mxu0
    %2999 = vmatpush.bf16.msra.mxu0 %v1850
    %3000 = vmatpush.bf16.msra.mxu0 %v1842
    %3001 = vmatpush.bf16.msra.mxu0 %v1834
    %3002 = vmatpush.bf16.msra.mxu0 %v1826
    %3003 = vmatpush.bf16.msra.mxu0 %v1818
    %3004 = vmatpush.bf16.msra.mxu0 %v1810
    %3005 = vmatpush.bf16.msra.mxu0 %v1802
    %3006 = vmatpush.bf16.msra.mxu0 %v1794
    %3007 = vmatmul.bf16.gmra.mxu0 %v101
    %v3008 = vpop.f32.mrf.mxu0
    %v3009 = vadd.f32 %v2996, %v3008
    %v3010 = vpop.f32.mrf.mxu0
    %3011 = vdwg.mxu0
    %3012 = vmatpush.bf16.msra.mxu0 %v1914
    %3013 = vmatpush.bf16.msra.mxu0 %v1906
    %3014 = vmatpush.bf16.msra.mxu0 %v1898
    %3015 = vmatpush.bf16.msra.mxu0 %v1890
    %3016 = vmatpush.bf16.msra.mxu0 %v1882
    %3017 = vmatpush.bf16.msra.mxu0 %v1874
    %3018 = vmatpush.bf16.msra.mxu0 %v1866
    %3019 = vmatpush.bf16.msra.mxu0 %v1858
    %3020 = vmatmul.bf16.gmra.mxu0 %v102
    %v3021 = vpop.f32.mrf.mxu0
    %v3022 = vadd.f32 %v3009, %v3021
    %v3023 = vpop.f32.mrf.mxu0
    %3024 = vdwg.mxu0
    %3025 = vmatpush.bf16.msra.mxu0 %v1978
    %3026 = vmatpush.bf16.msra.mxu0 %v1970
    %3027 = vmatpush.bf16.msra.mxu0 %v1962
    %3028 = vmatpush.bf16.msra.mxu0 %v1954
    %3029 = vmatpush.bf16.msra.mxu0 %v1946
    %3030 = vmatpush.bf16.msra.mxu0 %v1938
    %3031 = vmatpush.bf16.msra.mxu0 %v1930
    %3032 = vmatpush.bf16.msra.mxu0 %v1922
    %3033 = vmatmul.bf16.gmra.mxu0 %v103
    %v3034 = vpop.f32.mrf.mxu0
    %v3035 = vadd.f32 %v3022, %v3034
    %v3036 = vpop.f32.mrf.mxu0
    %3037 = vdwg.mxu0
    %3038 = vmatpush.bf16.msra.mxu0 %v2042
    %3039 = vmatpush.bf16.msra.mxu0 %v2034
    %3040 = vmatpush.bf16.msra.mxu0 %v2026
    %3041 = vmatpush.bf16.msra.mxu0 %v2018
    %3042 = vmatpush.bf16.msra.mxu0 %v2010
    %3043 = vmatpush.bf16.msra.mxu0 %v2002
    %3044 = vmatpush.bf16.msra.mxu0 %v1994
    %3045 = vmatpush.bf16.msra.mxu0 %v1986
    %3046 = vmatmul.bf16.gmra.mxu0 %v104
    %v3047 = vpop.f32.mrf.mxu0
    %v3048 = vadd.f32 %v3035, %v3047
    %v3049 = vpop.f32.mrf.mxu0
    %3050 = vdwg.mxu0
    %v3051 = vmax.f32 %v2502, 0.0
    %v3052 = vmax.f32 %v2580, 0.0
    %v3053 = vmax.f32 %v2658, 0.0
    %v3054 = vmax.f32 %v2736, 0.0
    %v3055 = vmax.f32 %v2814, 0.0
    %v3056 = vmax.f32 %v2892, 0.0
    %v3057 = vmax.f32 %v2970, 0.0
    %v3058 = vmax.f32 %v3048, 0.0
    %v3059 = vpack.c.bf16 %v3051, %v3051
    %v3060 = vpack.c.bf16 %v3052, %v3052
    %v3061 = vpack.c.bf16 %v3053, %v3053
    %v3062 = vpack.c.bf16 %v3054, %v3054
    %v3063 = vpack.c.bf16 %v3055, %v3055
    %v3064 = vpack.c.bf16 %v3056, %v3056
    %v3065 = vpack.c.bf16 %v3057, %v3057
    %v3066 = vpack.c.bf16 %v3058, %v3058
    %v3067 = vld [vmem:[#allocation8] sm:$0xff]
    %v3068 = vld [vmem:[#allocation8 + $0x8] sm:$0xff]
    %v3069 = vld [vmem:[#allocation8 + $0x10] sm:$0xff]
    %v3070 = vld [vmem:[#allocation8 + $0x18] sm:$0xff]
    %v3071 = vld [vmem:[#allocation8 + $0x20] sm:$0xff]
    %v3072 = vld [vmem:[#allocation8 + $0x28] sm:$0xff]
    %v3073 = vld [vmem:[#allocation8 + $0x30] sm:$0xff]
    %v3074 = vld [vmem:[#allocation8 + $0x38] sm:$0xff]
    %v3075 = vld [vmem:[#allocation8 + $0x40] sm:$0xff]
    %v3076 = vld [vmem:[#allocation8 + $0x48] sm:$0xff]
    %v3077 = vld [vmem:[#allocation8 + $0x50] sm:$0xff]
    %v3078 = vld [vmem:[#allocation8 + $0x58] sm:$0xff]
    %v3079 = vld [vmem:[#allocation8 + $0x60] sm:$0xff]
    %v3080 = vld [vmem:[#allocation8 + $0x68] sm:$0xff]
    %v3081 = vld [vmem:[#allocation8 + $0x70] sm:$0xff]
    %v3082 = vld [vmem:[#allocation8 + $0x78] sm:$0xff]
    %v3083 = vld [vmem:[#allocation8 + $0x80] sm:$0xff]
    %v3084 = vld [vmem:[#allocation8 + $0x88] sm:$0xff]
    %v3085 = vld [vmem:[#allocation8 + $0x90] sm:$0xff]
    %v3086 = vld [vmem:[#allocation8 + $0x98] sm:$0xff]
    %v3087 = vld [vmem:[#allocation8 + $0xa0] sm:$0xff]
    %v3088 = vld [vmem:[#allocation8 + $0xa8] sm:$0xff]
    %v3089 = vld [vmem:[#allocation8 + $0xb0] sm:$0xff]
    %v3090 = vld [vmem:[#allocation8 + $0xb8] sm:$0xff]
    %v3091 = vld [vmem:[#allocation8 + $0xc0] sm:$0xff]
    %v3092 = vld [vmem:[#allocation8 + $0xc8] sm:$0xff]
    %v3093 = vld [vmem:[#allocation8 + $0xd0] sm:$0xff]
    %v3094 = vld [vmem:[#allocation8 + $0xd8] sm:$0xff]
    %v3095 = vld [vmem:[#allocation8 + $0xe0] sm:$0xff]
    %v3096 = vld [vmem:[#allocation8 + $0xe8] sm:$0xff]
    %v3097 = vld [vmem:[#allocation8 + $0xf0] sm:$0xff]
    %v3098 = vld [vmem:[#allocation8 + $0xf8] sm:$0xff]
    %v3099 = vld [vmem:[#allocation8 + $0x100] sm:$0xff]
    %v3100 = vld [vmem:[#allocation8 + $0x108] sm:$0xff]
    %v3101 = vld [vmem:[#allocation8 + $0x110] sm:$0xff]
    %v3102 = vld [vmem:[#allocation8 + $0x118] sm:$0xff]
    %v3103 = vld [vmem:[#allocation8 + $0x120] sm:$0xff]
    %v3104 = vld [vmem:[#allocation8 + $0x128] sm:$0xff]
    %v3105 = vld [vmem:[#allocation8 + $0x130] sm:$0xff]
    %v3106 = vld [vmem:[#allocation8 + $0x138] sm:$0xff]
    %v3107 = vld [vmem:[#allocation8 + $0x140] sm:$0xff]
    %v3108 = vld [vmem:[#allocation8 + $0x148] sm:$0xff]
    %v3109 = vld [vmem:[#allocation8 + $0x150] sm:$0xff]
    %v3110 = vld [vmem:[#allocation8 + $0x158] sm:$0xff]
    %v3111 = vld [vmem:[#allocation8 + $0x160] sm:$0xff]
    %v3112 = vld [vmem:[#allocation8 + $0x168] sm:$0xff]
    %v3113 = vld [vmem:[#allocation8 + $0x170] sm:$0xff]
    %v3114 = vld [vmem:[#allocation8 + $0x178] sm:$0xff]
    %v3115 = vld [vmem:[#allocation8 + $0x180] sm:$0xff]
    %v3116 = vld [vmem:[#allocation8 + $0x188] sm:$0xff]
    %v3117 = vld [vmem:[#allocation8 + $0x190] sm:$0xff]
    %v3118 = vld [vmem:[#allocation8 + $0x198] sm:$0xff]
    %v3119 = vld [vmem:[#allocation8 + $0x1a0] sm:$0xff]
    %v3120 = vld [vmem:[#allocation8 + $0x1a8] sm:$0xff]
    %v3121 = vld [vmem:[#allocation8 + $0x1b0] sm:$0xff]
    %v3122 = vld [vmem:[#allocation8 + $0x1b8] sm:$0xff]
    %v3123 = vld [vmem:[#allocation8 + $0x1c0] sm:$0xff]
    %v3124 = vld [vmem:[#allocation8 + $0x1c8] sm:$0xff]
    %v3125 = vld [vmem:[#allocation8 + $0x1d0] sm:$0xff]
    %v3126 = vld [vmem:[#allocation8 + $0x1d8] sm:$0xff]
    %v3127 = vld [vmem:[#allocation8 + $0x1e0] sm:$0xff]
    %v3128 = vld [vmem:[#allocation8 + $0x1e8] sm:$0xff]
    %v3129 = vld [vmem:[#allocation8 + $0x1f0] sm:$0xff]
    %v3130 = vld [vmem:[#allocation8 + $0x1f8] sm:$0xff]
    %v3131 = vld [vmem:[#allocation8 + $0x200] sm:$0xff]
    %v3132 = vld [vmem:[#allocation8 + $0x208] sm:$0xff]
    %v3133 = vld [vmem:[#allocation8 + $0x210] sm:$0xff]
    %v3134 = vld [vmem:[#allocation8 + $0x218] sm:$0xff]
    %v3135 = vld [vmem:[#allocation8 + $0x220] sm:$0xff]
    %v3136 = vld [vmem:[#allocation8 + $0x228] sm:$0xff]
    %v3137 = vld [vmem:[#allocation8 + $0x230] sm:$0xff]
    %v3138 = vld [vmem:[#allocation8 + $0x238] sm:$0xff]
    %v3139 = vld [vmem:[#allocation8 + $0x240] sm:$0xff]
    %v3140 = vld [vmem:[#allocation8 + $0x248] sm:$0xff]
    %v3141 = vld [vmem:[#allocation8 + $0x250] sm:$0xff]
    %v3142 = vld [vmem:[#allocation8 + $0x258] sm:$0xff]
    %v3143 = vld [vmem:[#allocation8 + $0x260] sm:$0xff]
    %v3144 = vld [vmem:[#allocation8 + $0x268] sm:$0xff]
    %v3145 = vld [vmem:[#allocation8 + $0x270] sm:$0xff]
    %v3146 = vld [vmem:[#allocation8 + $0x278] sm:$0xff]
    %v3147 = vld [vmem:[#allocation8 + $0x280] sm:$0xff]
    %v3148 = vld [vmem:[#allocation8 + $0x288] sm:$0xff]
    %v3149 = vld [vmem:[#allocation8 + $0x290] sm:$0xff]
    %v3150 = vld [vmem:[#allocation8 + $0x298] sm:$0xff]
    %v3151 = vld [vmem:[#allocation8 + $0x2a0] sm:$0xff]
    %v3152 = vld [vmem:[#allocation8 + $0x2a8] sm:$0xff]
    %v3153 = vld [vmem:[#allocation8 + $0x2b0] sm:$0xff]
    %v3154 = vld [vmem:[#allocation8 + $0x2b8] sm:$0xff]
    %v3155 = vld [vmem:[#allocation8 + $0x2c0] sm:$0xff]
    %v3156 = vld [vmem:[#allocation8 + $0x2c8] sm:$0xff]
    %v3157 = vld [vmem:[#allocation8 + $0x2d0] sm:$0xff]
    %v3158 = vld [vmem:[#allocation8 + $0x2d8] sm:$0xff]
    %v3159 = vld [vmem:[#allocation8 + $0x2e0] sm:$0xff]
    %v3160 = vld [vmem:[#allocation8 + $0x2e8] sm:$0xff]
    %v3161 = vld [vmem:[#allocation8 + $0x2f0] sm:$0xff]
    %v3162 = vld [vmem:[#allocation8 + $0x2f8] sm:$0xff]
    %v3163 = vld [vmem:[#allocation8 + $0x300] sm:$0xff]
    %v3164 = vld [vmem:[#allocation8 + $0x308] sm:$0xff]
    %v3165 = vld [vmem:[#allocation8 + $0x310] sm:$0xff]
    %v3166 = vld [vmem:[#allocation8 + $0x318] sm:$0xff]
    %v3167 = vld [vmem:[#allocation8 + $0x320] sm:$0xff]
    %v3168 = vld [vmem:[#allocation8 + $0x328] sm:$0xff]
    %v3169 = vld [vmem:[#allocation8 + $0x330] sm:$0xff]
    %v3170 = vld [vmem:[#allocation8 + $0x338] sm:$0xff]
    %v3171 = vld [vmem:[#allocation8 + $0x340] sm:$0xff]
    %v3172 = vld [vmem:[#allocation8 + $0x348] sm:$0xff]
    %v3173 = vld [vmem:[#allocation8 + $0x350] sm:$0xff]
    %v3174 = vld [vmem:[#allocation8 + $0x358] sm:$0xff]
    %v3175 = vld [vmem:[#allocation8 + $0x360] sm:$0xff]
    %v3176 = vld [vmem:[#allocation8 + $0x368] sm:$0xff]
    %v3177 = vld [vmem:[#allocation8 + $0x370] sm:$0xff]
    %v3178 = vld [vmem:[#allocation8 + $0x378] sm:$0xff]
    %v3179 = vld [vmem:[#allocation8 + $0x380] sm:$0xff]
    %v3180 = vld [vmem:[#allocation8 + $0x388] sm:$0xff]
    %v3181 = vld [vmem:[#allocation8 + $0x390] sm:$0xff]
    %v3182 = vld [vmem:[#allocation8 + $0x398] sm:$0xff]
    %v3183 = vld [vmem:[#allocation8 + $0x3a0] sm:$0xff]
    %v3184 = vld [vmem:[#allocation8 + $0x3a8] sm:$0xff]
    %v3185 = vld [vmem:[#allocation8 + $0x3b0] sm:$0xff]
    %v3186 = vld [vmem:[#allocation8 + $0x3b8] sm:$0xff]
    %v3187 = vld [vmem:[#allocation8 + $0x3c0] sm:$0xff]
    %v3188 = vld [vmem:[#allocation8 + $0x3c8] sm:$0xff]
    %v3189 = vld [vmem:[#allocation8 + $0x3d0] sm:$0xff]
    %v3190 = vld [vmem:[#allocation8 + $0x3d8] sm:$0xff]
    %v3191 = vld [vmem:[#allocation8 + $0x3e0] sm:$0xff]
    %v3192 = vld [vmem:[#allocation8 + $0x3e8] sm:$0xff]
    %v3193 = vld [vmem:[#allocation8 + $0x3f0] sm:$0xff]
    %v3194 = vld [vmem:[#allocation8 + $0x3f8] sm:$0xff]
    %v3195 = vld [vmem:[#allocation8 + $0x400] sm:$0xff]
    %v3196 = vld [vmem:[#allocation8 + $0x408] sm:$0xff]
    %v3197 = vld [vmem:[#allocation8 + $0x410] sm:$0xff]
    %v3198 = vld [vmem:[#allocation8 + $0x418] sm:$0xff]
    %v3199 = vld [vmem:[#allocation8 + $0x420] sm:$0xff]
    %v3200 = vld [vmem:[#allocation8 + $0x428] sm:$0xff]
    %v3201 = vld [vmem:[#allocation8 + $0x430] sm:$0xff]
    %v3202 = vld [vmem:[#allocation8 + $0x438] sm:$0xff]
    %v3203 = vld [vmem:[#allocation8 + $0x440] sm:$0xff]
    %v3204 = vld [vmem:[#allocation8 + $0x448] sm:$0xff]
    %v3205 = vld [vmem:[#allocation8 + $0x450] sm:$0xff]
    %v3206 = vld [vmem:[#allocation8 + $0x458] sm:$0xff]
    %v3207 = vld [vmem:[#allocation8 + $0x460] sm:$0xff]
    %v3208 = vld [vmem:[#allocation8 + $0x468] sm:$0xff]
    %v3209 = vld [vmem:[#allocation8 + $0x470] sm:$0xff]
    %v3210 = vld [vmem:[#allocation8 + $0x478] sm:$0xff]
    %v3211 = vld [vmem:[#allocation8 + $0x480] sm:$0xff]
    %v3212 = vld [vmem:[#allocation8 + $0x488] sm:$0xff]
    %v3213 = vld [vmem:[#allocation8 + $0x490] sm:$0xff]
    %v3214 = vld [vmem:[#allocation8 + $0x498] sm:$0xff]
    %v3215 = vld [vmem:[#allocation8 + $0x4a0] sm:$0xff]
    %v3216 = vld [vmem:[#allocation8 + $0x4a8] sm:$0xff]
    %v3217 = vld [vmem:[#allocation8 + $0x4b0] sm:$0xff]
    %v3218 = vld [vmem:[#allocation8 + $0x4b8] sm:$0xff]
    %v3219 = vld [vmem:[#allocation8 + $0x4c0] sm:$0xff]
    %v3220 = vld [vmem:[#allocation8 + $0x4c8] sm:$0xff]
    %v3221 = vld [vmem:[#allocation8 + $0x4d0] sm:$0xff]
    %v3222 = vld [vmem:[#allocation8 + $0x4d8] sm:$0xff]
    %v3223 = vld [vmem:[#allocation8 + $0x4e0] sm:$0xff]
    %v3224 = vld [vmem:[#allocation8 + $0x4e8] sm:$0xff]
    %v3225 = vld [vmem:[#allocation8 + $0x4f0] sm:$0xff]
    %v3226 = vld [vmem:[#allocation8 + $0x4f8] sm:$0xff]
    %v3227 = vld [vmem:[#allocation8 + $0x500] sm:$0xff]
    %v3228 = vld [vmem:[#allocation8 + $0x508] sm:$0xff]
    %v3229 = vld [vmem:[#allocation8 + $0x510] sm:$0xff]
    %v3230 = vld [vmem:[#allocation8 + $0x518] sm:$0xff]
    %v3231 = vld [vmem:[#allocation8 + $0x520] sm:$0xff]
    %v3232 = vld [vmem:[#allocation8 + $0x528] sm:$0xff]
    %v3233 = vld [vmem:[#allocation8 + $0x530] sm:$0xff]
    %v3234 = vld [vmem:[#allocation8 + $0x538] sm:$0xff]
    %v3235 = vld [vmem:[#allocation8 + $0x540] sm:$0xff]
    %v3236 = vld [vmem:[#allocation8 + $0x548] sm:$0xff]
    %v3237 = vld [vmem:[#allocation8 + $0x550] sm:$0xff]
    %v3238 = vld [vmem:[#allocation8 + $0x558] sm:$0xff]
    %v3239 = vld [vmem:[#allocation8 + $0x560] sm:$0xff]
    %v3240 = vld [vmem:[#allocation8 + $0x568] sm:$0xff]
    %v3241 = vld [vmem:[#allocation8 + $0x570] sm:$0xff]
    %v3242 = vld [vmem:[#allocation8 + $0x578] sm:$0xff]
    %v3243 = vld [vmem:[#allocation8 + $0x580] sm:$0xff]
    %v3244 = vld [vmem:[#allocation8 + $0x588] sm:$0xff]
    %v3245 = vld [vmem:[#allocation8 + $0x590] sm:$0xff]
    %v3246 = vld [vmem:[#allocation8 + $0x598] sm:$0xff]
    %v3247 = vld [vmem:[#allocation8 + $0x5a0] sm:$0xff]
    %v3248 = vld [vmem:[#allocation8 + $0x5a8] sm:$0xff]
    %v3249 = vld [vmem:[#allocation8 + $0x5b0] sm:$0xff]
    %v3250 = vld [vmem:[#allocation8 + $0x5b8] sm:$0xff]
    %v3251 = vld [vmem:[#allocation8 + $0x5c0] sm:$0xff]
    %v3252 = vld [vmem:[#allocation8 + $0x5c8] sm:$0xff]
    %v3253 = vld [vmem:[#allocation8 + $0x5d0] sm:$0xff]
    %v3254 = vld [vmem:[#allocation8 + $0x5d8] sm:$0xff]
    %v3255 = vld [vmem:[#allocation8 + $0x5e0] sm:$0xff]
    %v3256 = vld [vmem:[#allocation8 + $0x5e8] sm:$0xff]
    %v3257 = vld [vmem:[#allocation8 + $0x5f0] sm:$0xff]
    %v3258 = vld [vmem:[#allocation8 + $0x5f8] sm:$0xff]
    %v3259 = vld [vmem:[#allocation8 + $0x600] sm:$0xff]
    %v3260 = vld [vmem:[#allocation8 + $0x608] sm:$0xff]
    %v3261 = vld [vmem:[#allocation8 + $0x610] sm:$0xff]
    %v3262 = vld [vmem:[#allocation8 + $0x618] sm:$0xff]
    %v3263 = vld [vmem:[#allocation8 + $0x620] sm:$0xff]
    %v3264 = vld [vmem:[#allocation8 + $0x628] sm:$0xff]
    %v3265 = vld [vmem:[#allocation8 + $0x630] sm:$0xff]
    %v3266 = vld [vmem:[#allocation8 + $0x638] sm:$0xff]
    %v3267 = vld [vmem:[#allocation8 + $0x640] sm:$0xff]
    %v3268 = vld [vmem:[#allocation8 + $0x648] sm:$0xff]
    %v3269 = vld [vmem:[#allocation8 + $0x650] sm:$0xff]
    %v3270 = vld [vmem:[#allocation8 + $0x658] sm:$0xff]
    %v3271 = vld [vmem:[#allocation8 + $0x660] sm:$0xff]
    %v3272 = vld [vmem:[#allocation8 + $0x668] sm:$0xff]
    %v3273 = vld [vmem:[#allocation8 + $0x670] sm:$0xff]
    %v3274 = vld [vmem:[#allocation8 + $0x678] sm:$0xff]
    %v3275 = vld [vmem:[#allocation8 + $0x680] sm:$0xff]
    %v3276 = vld [vmem:[#allocation8 + $0x688] sm:$0xff]
    %v3277 = vld [vmem:[#allocation8 + $0x690] sm:$0xff]
    %v3278 = vld [vmem:[#allocation8 + $0x698] sm:$0xff]
    %v3279 = vld [vmem:[#allocation8 + $0x6a0] sm:$0xff]
    %v3280 = vld [vmem:[#allocation8 + $0x6a8] sm:$0xff]
    %v3281 = vld [vmem:[#allocation8 + $0x6b0] sm:$0xff]
    %v3282 = vld [vmem:[#allocation8 + $0x6b8] sm:$0xff]
    %v3283 = vld [vmem:[#allocation8 + $0x6c0] sm:$0xff]
    %v3284 = vld [vmem:[#allocation8 + $0x6c8] sm:$0xff]
    %v3285 = vld [vmem:[#allocation8 + $0x6d0] sm:$0xff]
    %v3286 = vld [vmem:[#allocation8 + $0x6d8] sm:$0xff]
    %v3287 = vld [vmem:[#allocation8 + $0x6e0] sm:$0xff]
    %v3288 = vld [vmem:[#allocation8 + $0x6e8] sm:$0xff]
    %v3289 = vld [vmem:[#allocation8 + $0x6f0] sm:$0xff]
    %v3290 = vld [vmem:[#allocation8 + $0x6f8] sm:$0xff]
    %v3291 = vld [vmem:[#allocation8 + $0x700] sm:$0xff]
    %v3292 = vld [vmem:[#allocation8 + $0x708] sm:$0xff]
    %v3293 = vld [vmem:[#allocation8 + $0x710] sm:$0xff]
    %v3294 = vld [vmem:[#allocation8 + $0x718] sm:$0xff]
    %v3295 = vld [vmem:[#allocation8 + $0x720] sm:$0xff]
    %v3296 = vld [vmem:[#allocation8 + $0x728] sm:$0xff]
    %v3297 = vld [vmem:[#allocation8 + $0x730] sm:$0xff]
    %v3298 = vld [vmem:[#allocation8 + $0x738] sm:$0xff]
    %v3299 = vld [vmem:[#allocation8 + $0x740] sm:$0xff]
    %v3300 = vld [vmem:[#allocation8 + $0x748] sm:$0xff]
    %v3301 = vld [vmem:[#allocation8 + $0x750] sm:$0xff]
    %v3302 = vld [vmem:[#allocation8 + $0x758] sm:$0xff]
    %v3303 = vld [vmem:[#allocation8 + $0x760] sm:$0xff]
    %v3304 = vld [vmem:[#allocation8 + $0x768] sm:$0xff]
    %v3305 = vld [vmem:[#allocation8 + $0x770] sm:$0xff]
    %v3306 = vld [vmem:[#allocation8 + $0x778] sm:$0xff]
    %v3307 = vld [vmem:[#allocation8 + $0x780] sm:$0xff]
    %v3308 = vld [vmem:[#allocation8 + $0x788] sm:$0xff]
    %v3309 = vld [vmem:[#allocation8 + $0x790] sm:$0xff]
    %v3310 = vld [vmem:[#allocation8 + $0x798] sm:$0xff]
    %v3311 = vld [vmem:[#allocation8 + $0x7a0] sm:$0xff]
    %v3312 = vld [vmem:[#allocation8 + $0x7a8] sm:$0xff]
    %v3313 = vld [vmem:[#allocation8 + $0x7b0] sm:$0xff]
    %v3314 = vld [vmem:[#allocation8 + $0x7b8] sm:$0xff]
    %v3315 = vld [vmem:[#allocation8 + $0x7c0] sm:$0xff]
    %v3316 = vld [vmem:[#allocation8 + $0x7c8] sm:$0xff]
    %v3317 = vld [vmem:[#allocation8 + $0x7d0] sm:$0xff]
    %v3318 = vld [vmem:[#allocation8 + $0x7d8] sm:$0xff]
    %v3319 = vld [vmem:[#allocation8 + $0x7e0] sm:$0xff]
    %v3320 = vld [vmem:[#allocation8 + $0x7e8] sm:$0xff]
    %v3321 = vld [vmem:[#allocation8 + $0x7f0] sm:$0xff]
    %v3322 = vld [vmem:[#allocation8 + $0x7f8] sm:$0xff]
    %v3323 = vld [vmem:[#allocation10] sm:$0xf]
    %v3325 = vperm.slane %v3323, 0
    %v3326 = vperm.slane %v3323, 1
    %v3327 = vperm.slane %v3323, 2
    %v3328 = vperm.slane %v3323, 3
    %v3589 = vunpack.c.l.b16 %v3067
    %v3590 = vunpack.c.h.b16 %v3067
    %v3591 = vunpack.c.l.b16 %v3068
    %v3592 = vunpack.c.h.b16 %v3068
    %v3593 = vunpack.c.l.b16 %v3069
    %v3594 = vunpack.c.h.b16 %v3069
    %v3595 = vunpack.c.l.b16 %v3070
    %v3596 = vunpack.c.h.b16 %v3070
    %v3597 = vunpack.c.l.b16 %v3071
    %v3598 = vunpack.c.h.b16 %v3071
    %v3599 = vunpack.c.l.b16 %v3072
    %v3600 = vunpack.c.h.b16 %v3072
    %v3601 = vunpack.c.l.b16 %v3073
    %v3602 = vunpack.c.h.b16 %v3073
    %v3603 = vunpack.c.l.b16 %v3074
    %v3604 = vunpack.c.h.b16 %v3074
    %v3605 = vunpack.c.l.b16 %v3075
    %v3606 = vunpack.c.h.b16 %v3075
    %v3607 = vunpack.c.l.b16 %v3076
    %v3608 = vunpack.c.h.b16 %v3076
    %v3609 = vunpack.c.l.b16 %v3077
    %v3610 = vunpack.c.h.b16 %v3077
    %v3611 = vunpack.c.l.b16 %v3078
    %v3612 = vunpack.c.h.b16 %v3078
    %v3613 = vunpack.c.l.b16 %v3079
    %v3614 = vunpack.c.h.b16 %v3079
    %v3615 = vunpack.c.l.b16 %v3080
    %v3616 = vunpack.c.h.b16 %v3080
    %v3617 = vunpack.c.l.b16 %v3081
    %v3618 = vunpack.c.h.b16 %v3081
    %v3619 = vunpack.c.l.b16 %v3082
    %v3620 = vunpack.c.h.b16 %v3082
    %v3621 = vunpack.c.l.b16 %v3083
    %v3622 = vunpack.c.h.b16 %v3083
    %v3623 = vunpack.c.l.b16 %v3084
    %v3624 = vunpack.c.h.b16 %v3084
    %v3625 = vunpack.c.l.b16 %v3085
    %v3626 = vunpack.c.h.b16 %v3085
    %v3627 = vunpack.c.l.b16 %v3086
    %v3628 = vunpack.c.h.b16 %v3086
    %v3629 = vunpack.c.l.b16 %v3087
    %v3630 = vunpack.c.h.b16 %v3087
    %v3631 = vunpack.c.l.b16 %v3088
    %v3632 = vunpack.c.h.b16 %v3088
    %v3633 = vunpack.c.l.b16 %v3089
    %v3634 = vunpack.c.h.b16 %v3089
    %v3635 = vunpack.c.l.b16 %v3090
    %v3636 = vunpack.c.h.b16 %v3090
    %v3637 = vunpack.c.l.b16 %v3091
    %v3638 = vunpack.c.h.b16 %v3091
    %v3639 = vunpack.c.l.b16 %v3092
    %v3640 = vunpack.c.h.b16 %v3092
    %v3641 = vunpack.c.l.b16 %v3093
    %v3642 = vunpack.c.h.b16 %v3093
    %v3643 = vunpack.c.l.b16 %v3094
    %v3644 = vunpack.c.h.b16 %v3094
    %v3645 = vunpack.c.l.b16 %v3095
    %v3646 = vunpack.c.h.b16 %v3095
    %v3647 = vunpack.c.l.b16 %v3096
    %v3648 = vunpack.c.h.b16 %v3096
    %v3649 = vunpack.c.l.b16 %v3097
    %v3650 = vunpack.c.h.b16 %v3097
    %v3651 = vunpack.c.l.b16 %v3098
    %v3652 = vunpack.c.h.b16 %v3098
    %v3653 = vunpack.c.l.b16 %v3099
    %v3654 = vunpack.c.h.b16 %v3099
    %v3655 = vunpack.c.l.b16 %v3100
    %v3656 = vunpack.c.h.b16 %v3100
    %v3657 = vunpack.c.l.b16 %v3101
    %v3658 = vunpack.c.h.b16 %v3101
    %v3659 = vunpack.c.l.b16 %v3102
    %v3660 = vunpack.c.h.b16 %v3102
    %v3661 = vunpack.c.l.b16 %v3103
    %v3662 = vunpack.c.h.b16 %v3103
    %v3663 = vunpack.c.l.b16 %v3104
    %v3664 = vunpack.c.h.b16 %v3104
    %v3665 = vunpack.c.l.b16 %v3105
    %v3666 = vunpack.c.h.b16 %v3105
    %v3667 = vunpack.c.l.b16 %v3106
    %v3668 = vunpack.c.h.b16 %v3106
    %v3669 = vunpack.c.l.b16 %v3107
    %v3670 = vunpack.c.h.b16 %v3107
    %v3671 = vunpack.c.l.b16 %v3108
    %v3672 = vunpack.c.h.b16 %v3108
    %v3673 = vunpack.c.l.b16 %v3109
    %v3674 = vunpack.c.h.b16 %v3109
    %v3675 = vunpack.c.l.b16 %v3110
    %v3676 = vunpack.c.h.b16 %v3110
    %v3677 = vunpack.c.l.b16 %v3111
    %v3678 = vunpack.c.h.b16 %v3111
    %v3679 = vunpack.c.l.b16 %v3112
    %v3680 = vunpack.c.h.b16 %v3112
    %v3681 = vunpack.c.l.b16 %v3113
    %v3682 = vunpack.c.h.b16 %v3113
    %v3683 = vunpack.c.l.b16 %v3114
    %v3684 = vunpack.c.h.b16 %v3114
    %v3685 = vunpack.c.l.b16 %v3115
    %v3686 = vunpack.c.h.b16 %v3115
    %v3687 = vunpack.c.l.b16 %v3116
    %v3688 = vunpack.c.h.b16 %v3116
    %v3689 = vunpack.c.l.b16 %v3117
    %v3690 = vunpack.c.h.b16 %v3117
    %v3691 = vunpack.c.l.b16 %v3118
    %v3692 = vunpack.c.h.b16 %v3118
    %v3693 = vunpack.c.l.b16 %v3119
    %v3694 = vunpack.c.h.b16 %v3119
    %v3695 = vunpack.c.l.b16 %v3120
    %v3696 = vunpack.c.h.b16 %v3120
    %v3697 = vunpack.c.l.b16 %v3121
    %v3698 = vunpack.c.h.b16 %v3121
    %v3699 = vunpack.c.l.b16 %v3122
    %v3700 = vunpack.c.h.b16 %v3122
    %v3701 = vunpack.c.l.b16 %v3123
    %v3702 = vunpack.c.h.b16 %v3123
    %v3703 = vunpack.c.l.b16 %v3124
    %v3704 = vunpack.c.h.b16 %v3124
    %v3705 = vunpack.c.l.b16 %v3125
    %v3706 = vunpack.c.h.b16 %v3125
    %v3707 = vunpack.c.l.b16 %v3126
    %v3708 = vunpack.c.h.b16 %v3126
    %v3709 = vunpack.c.l.b16 %v3127
    %v3710 = vunpack.c.h.b16 %v3127
    %v3711 = vunpack.c.l.b16 %v3128
    %v3712 = vunpack.c.h.b16 %v3128
    %v3713 = vunpack.c.l.b16 %v3129
    %v3714 = vunpack.c.h.b16 %v3129
    %v3715 = vunpack.c.l.b16 %v3130
    %v3716 = vunpack.c.h.b16 %v3130
    %v3717 = vunpack.c.l.b16 %v3131
    %v3718 = vunpack.c.h.b16 %v3131
    %v3719 = vunpack.c.l.b16 %v3132
    %v3720 = vunpack.c.h.b16 %v3132
    %v3721 = vunpack.c.l.b16 %v3133
    %v3722 = vunpack.c.h.b16 %v3133
    %v3723 = vunpack.c.l.b16 %v3134
    %v3724 = vunpack.c.h.b16 %v3134
    %v3725 = vunpack.c.l.b16 %v3135
    %v3726 = vunpack.c.h.b16 %v3135
    %v3727 = vunpack.c.l.b16 %v3136
    %v3728 = vunpack.c.h.b16 %v3136
    %v3729 = vunpack.c.l.b16 %v3137
    %v3730 = vunpack.c.h.b16 %v3137
    %v3731 = vunpack.c.l.b16 %v3138
    %v3732 = vunpack.c.h.b16 %v3138
    %v3733 = vunpack.c.l.b16 %v3139
    %v3734 = vunpack.c.h.b16 %v3139
    %v3735 = vunpack.c.l.b16 %v3140
    %v3736 = vunpack.c.h.b16 %v3140
    %v3737 = vunpack.c.l.b16 %v3141
    %v3738 = vunpack.c.h.b16 %v3141
    %v3739 = vunpack.c.l.b16 %v3142
    %v3740 = vunpack.c.h.b16 %v3142
    %v3741 = vunpack.c.l.b16 %v3143
    %v3742 = vunpack.c.h.b16 %v3143
    %v3743 = vunpack.c.l.b16 %v3144
    %v3744 = vunpack.c.h.b16 %v3144
    %v3745 = vunpack.c.l.b16 %v3145
    %v3746 = vunpack.c.h.b16 %v3145
    %v3747 = vunpack.c.l.b16 %v3146
    %v3748 = vunpack.c.h.b16 %v3146
    %v3749 = vunpack.c.l.b16 %v3147
    %v3750 = vunpack.c.h.b16 %v3147
    %v3751 = vunpack.c.l.b16 %v3148
    %v3752 = vunpack.c.h.b16 %v3148
    %v3753 = vunpack.c.l.b16 %v3149
    %v3754 = vunpack.c.h.b16 %v3149
    %v3755 = vunpack.c.l.b16 %v3150
    %v3756 = vunpack.c.h.b16 %v3150
    %v3757 = vunpack.c.l.b16 %v3151
    %v3758 = vunpack.c.h.b16 %v3151
    %v3759 = vunpack.c.l.b16 %v3152
    %v3760 = vunpack.c.h.b16 %v3152
    %v3761 = vunpack.c.l.b16 %v3153
    %v3762 = vunpack.c.h.b16 %v3153
    %v3763 = vunpack.c.l.b16 %v3154
    %v3764 = vunpack.c.h.b16 %v3154
    %v3765 = vunpack.c.l.b16 %v3155
    %v3766 = vunpack.c.h.b16 %v3155
    %v3767 = vunpack.c.l.b16 %v3156
    %v3768 = vunpack.c.h.b16 %v3156
    %v3769 = vunpack.c.l.b16 %v3157
    %v3770 = vunpack.c.h.b16 %v3157
    %v3771 = vunpack.c.l.b16 %v3158
    %v3772 = vunpack.c.h.b16 %v3158
    %v3773 = vunpack.c.l.b16 %v3159
    %v3774 = vunpack.c.h.b16 %v3159
    %v3775 = vunpack.c.l.b16 %v3160
    %v3776 = vunpack.c.h.b16 %v3160
    %v3777 = vunpack.c.l.b16 %v3161
    %v3778 = vunpack.c.h.b16 %v3161
    %v3779 = vunpack.c.l.b16 %v3162
    %v3780 = vunpack.c.h.b16 %v3162
    %v3781 = vunpack.c.l.b16 %v3163
    %v3782 = vunpack.c.h.b16 %v3163
    %v3783 = vunpack.c.l.b16 %v3164
    %v3784 = vunpack.c.h.b16 %v3164
    %v3785 = vunpack.c.l.b16 %v3165
    %v3786 = vunpack.c.h.b16 %v3165
    %v3787 = vunpack.c.l.b16 %v3166
    %v3788 = vunpack.c.h.b16 %v3166
    %v3789 = vunpack.c.l.b16 %v3167
    %v3790 = vunpack.c.h.b16 %v3167
    %v3791 = vunpack.c.l.b16 %v3168
    %v3792 = vunpack.c.h.b16 %v3168
    %v3793 = vunpack.c.l.b16 %v3169
    %v3794 = vunpack.c.h.b16 %v3169
    %v3795 = vunpack.c.l.b16 %v3170
    %v3796 = vunpack.c.h.b16 %v3170
    %v3797 = vunpack.c.l.b16 %v3171
    %v3798 = vunpack.c.h.b16 %v3171
    %v3799 = vunpack.c.l.b16 %v3172
    %v3800 = vunpack.c.h.b16 %v3172
    %v3801 = vunpack.c.l.b16 %v3173
    %v3802 = vunpack.c.h.b16 %v3173
    %v3803 = vunpack.c.l.b16 %v3174
    %v3804 = vunpack.c.h.b16 %v3174
    %v3805 = vunpack.c.l.b16 %v3175
    %v3806 = vunpack.c.h.b16 %v3175
    %v3807 = vunpack.c.l.b16 %v3176
    %v3808 = vunpack.c.h.b16 %v3176
    %v3809 = vunpack.c.l.b16 %v3177
    %v3810 = vunpack.c.h.b16 %v3177
    %v3811 = vunpack.c.l.b16 %v3178
    %v3812 = vunpack.c.h.b16 %v3178
    %v3813 = vunpack.c.l.b16 %v3179
    %v3814 = vunpack.c.h.b16 %v3179
    %v3815 = vunpack.c.l.b16 %v3180
    %v3816 = vunpack.c.h.b16 %v3180
    %v3817 = vunpack.c.l.b16 %v3181
    %v3818 = vunpack.c.h.b16 %v3181
    %v3819 = vunpack.c.l.b16 %v3182
    %v3820 = vunpack.c.h.b16 %v3182
    %v3821 = vunpack.c.l.b16 %v3183
    %v3822 = vunpack.c.h.b16 %v3183
    %v3823 = vunpack.c.l.b16 %v3184
    %v3824 = vunpack.c.h.b16 %v3184
    %v3825 = vunpack.c.l.b16 %v3185
    %v3826 = vunpack.c.h.b16 %v3185
    %v3827 = vunpack.c.l.b16 %v3186
    %v3828 = vunpack.c.h.b16 %v3186
    %v3829 = vunpack.c.l.b16 %v3187
    %v3830 = vunpack.c.h.b16 %v3187
    %v3831 = vunpack.c.l.b16 %v3188
    %v3832 = vunpack.c.h.b16 %v3188
    %v3833 = vunpack.c.l.b16 %v3189
    %v3834 = vunpack.c.h.b16 %v3189
    %v3835 = vunpack.c.l.b16 %v3190
    %v3836 = vunpack.c.h.b16 %v3190
    %v3837 = vunpack.c.l.b16 %v3191
    %v3838 = vunpack.c.h.b16 %v3191
    %v3839 = vunpack.c.l.b16 %v3192
    %v3840 = vunpack.c.h.b16 %v3192
    %v3841 = vunpack.c.l.b16 %v3193
    %v3842 = vunpack.c.h.b16 %v3193
    %v3843 = vunpack.c.l.b16 %v3194
    %v3844 = vunpack.c.h.b16 %v3194
    %v3845 = vunpack.c.l.b16 %v3195
    %v3846 = vunpack.c.h.b16 %v3195
    %v3847 = vunpack.c.l.b16 %v3196
    %v3848 = vunpack.c.h.b16 %v3196
    %v3849 = vunpack.c.l.b16 %v3197
    %v3850 = vunpack.c.h.b16 %v3197
    %v3851 = vunpack.c.l.b16 %v3198
    %v3852 = vunpack.c.h.b16 %v3198
    %v3853 = vunpack.c.l.b16 %v3199
    %v3854 = vunpack.c.h.b16 %v3199
    %v3855 = vunpack.c.l.b16 %v3200
    %v3856 = vunpack.c.h.b16 %v3200
    %v3857 = vunpack.c.l.b16 %v3201
    %v3858 = vunpack.c.h.b16 %v3201
    %v3859 = vunpack.c.l.b16 %v3202
    %v3860 = vunpack.c.h.b16 %v3202
    %v3861 = vunpack.c.l.b16 %v3203
    %v3862 = vunpack.c.h.b16 %v3203
    %v3863 = vunpack.c.l.b16 %v3204
    %v3864 = vunpack.c.h.b16 %v3204
    %v3865 = vunpack.c.l.b16 %v3205
    %v3866 = vunpack.c.h.b16 %v3205
    %v3867 = vunpack.c.l.b16 %v3206
    %v3868 = vunpack.c.h.b16 %v3206
    %v3869 = vunpack.c.l.b16 %v3207
    %v3870 = vunpack.c.h.b16 %v3207
    %v3871 = vunpack.c.l.b16 %v3208
    %v3872 = vunpack.c.h.b16 %v3208
    %v3873 = vunpack.c.l.b16 %v3209
    %v3874 = vunpack.c.h.b16 %v3209
    %v3875 = vunpack.c.l.b16 %v3210
    %v3876 = vunpack.c.h.b16 %v3210
    %v3877 = vunpack.c.l.b16 %v3211
    %v3878 = vunpack.c.h.b16 %v3211
    %v3879 = vunpack.c.l.b16 %v3212
    %v3880 = vunpack.c.h.b16 %v3212
    %v3881 = vunpack.c.l.b16 %v3213
    %v3882 = vunpack.c.h.b16 %v3213
    %v3883 = vunpack.c.l.b16 %v3214
    %v3884 = vunpack.c.h.b16 %v3214
    %v3885 = vunpack.c.l.b16 %v3215
    %v3886 = vunpack.c.h.b16 %v3215
    %v3887 = vunpack.c.l.b16 %v3216
    %v3888 = vunpack.c.h.b16 %v3216
    %v3889 = vunpack.c.l.b16 %v3217
    %v3890 = vunpack.c.h.b16 %v3217
    %v3891 = vunpack.c.l.b16 %v3218
    %v3892 = vunpack.c.h.b16 %v3218
    %v3893 = vunpack.c.l.b16 %v3219
    %v3894 = vunpack.c.h.b16 %v3219
    %v3895 = vunpack.c.l.b16 %v3220
    %v3896 = vunpack.c.h.b16 %v3220
    %v3897 = vunpack.c.l.b16 %v3221
    %v3898 = vunpack.c.h.b16 %v3221
    %v3899 = vunpack.c.l.b16 %v3222
    %v3900 = vunpack.c.h.b16 %v3222
    %v3901 = vunpack.c.l.b16 %v3223
    %v3902 = vunpack.c.h.b16 %v3223
    %v3903 = vunpack.c.l.b16 %v3224
    %v3904 = vunpack.c.h.b16 %v3224
    %v3905 = vunpack.c.l.b16 %v3225
    %v3906 = vunpack.c.h.b16 %v3225
    %v3907 = vunpack.c.l.b16 %v3226
    %v3908 = vunpack.c.h.b16 %v3226
    %v3909 = vunpack.c.l.b16 %v3227
    %v3910 = vunpack.c.h.b16 %v3227
    %v3911 = vunpack.c.l.b16 %v3228
    %v3912 = vunpack.c.h.b16 %v3228
    %v3913 = vunpack.c.l.b16 %v3229
    %v3914 = vunpack.c.h.b16 %v3229
    %v3915 = vunpack.c.l.b16 %v3230
    %v3916 = vunpack.c.h.b16 %v3230
    %v3917 = vunpack.c.l.b16 %v3231
    %v3918 = vunpack.c.h.b16 %v3231
    %v3919 = vunpack.c.l.b16 %v3232
    %v3920 = vunpack.c.h.b16 %v3232
    %v3921 = vunpack.c.l.b16 %v3233
    %v3922 = vunpack.c.h.b16 %v3233
    %v3923 = vunpack.c.l.b16 %v3234
    %v3924 = vunpack.c.h.b16 %v3234
    %v3925 = vunpack.c.l.b16 %v3235
    %v3926 = vunpack.c.h.b16 %v3235
    %v3927 = vunpack.c.l.b16 %v3236
    %v3928 = vunpack.c.h.b16 %v3236
    %v3929 = vunpack.c.l.b16 %v3237
    %v3930 = vunpack.c.h.b16 %v3237
    %v3931 = vunpack.c.l.b16 %v3238
    %v3932 = vunpack.c.h.b16 %v3238
    %v3933 = vunpack.c.l.b16 %v3239
    %v3934 = vunpack.c.h.b16 %v3239
    %v3935 = vunpack.c.l.b16 %v3240
    %v3936 = vunpack.c.h.b16 %v3240
    %v3937 = vunpack.c.l.b16 %v3241
    %v3938 = vunpack.c.h.b16 %v3241
    %v3939 = vunpack.c.l.b16 %v3242
    %v3940 = vunpack.c.h.b16 %v3242
    %v3941 = vunpack.c.l.b16 %v3243
    %v3942 = vunpack.c.h.b16 %v3243
    %v3943 = vunpack.c.l.b16 %v3244
    %v3944 = vunpack.c.h.b16 %v3244
    %v3945 = vunpack.c.l.b16 %v3245
    %v3946 = vunpack.c.h.b16 %v3245
    %v3947 = vunpack.c.l.b16 %v3246
    %v3948 = vunpack.c.h.b16 %v3246
    %v3949 = vunpack.c.l.b16 %v3247
    %v3950 = vunpack.c.h.b16 %v3247
    %v3951 = vunpack.c.l.b16 %v3248
    %v3952 = vunpack.c.h.b16 %v3248
    %v3953 = vunpack.c.l.b16 %v3249
    %v3954 = vunpack.c.h.b16 %v3249
    %v3955 = vunpack.c.l.b16 %v3250
    %v3956 = vunpack.c.h.b16 %v3250
    %v3957 = vunpack.c.l.b16 %v3251
    %v3958 = vunpack.c.h.b16 %v3251
    %v3959 = vunpack.c.l.b16 %v3252
    %v3960 = vunpack.c.h.b16 %v3252
    %v3961 = vunpack.c.l.b16 %v3253
    %v3962 = vunpack.c.h.b16 %v3253
    %v3963 = vunpack.c.l.b16 %v3254
    %v3964 = vunpack.c.h.b16 %v3254
    %v3965 = vunpack.c.l.b16 %v3255
    %v3966 = vunpack.c.h.b16 %v3255
    %v3967 = vunpack.c.l.b16 %v3256
    %v3968 = vunpack.c.h.b16 %v3256
    %v3969 = vunpack.c.l.b16 %v3257
    %v3970 = vunpack.c.h.b16 %v3257
    %v3971 = vunpack.c.l.b16 %v3258
    %v3972 = vunpack.c.h.b16 %v3258
    %v3973 = vunpack.c.l.b16 %v3259
    %v3974 = vunpack.c.h.b16 %v3259
    %v3975 = vunpack.c.l.b16 %v3260
    %v3976 = vunpack.c.h.b16 %v3260
    %v3977 = vunpack.c.l.b16 %v3261
    %v3978 = vunpack.c.h.b16 %v3261
    %v3979 = vunpack.c.l.b16 %v3262
    %v3980 = vunpack.c.h.b16 %v3262
    %v3981 = vunpack.c.l.b16 %v3263
    %v3982 = vunpack.c.h.b16 %v3263
    %v3983 = vunpack.c.l.b16 %v3264
    %v3984 = vunpack.c.h.b16 %v3264
    %v3985 = vunpack.c.l.b16 %v3265
    %v3986 = vunpack.c.h.b16 %v3265
    %v3987 = vunpack.c.l.b16 %v3266
    %v3988 = vunpack.c.h.b16 %v3266
    %v3989 = vunpack.c.l.b16 %v3267
    %v3990 = vunpack.c.h.b16 %v3267
    %v3991 = vunpack.c.l.b16 %v3268
    %v3992 = vunpack.c.h.b16 %v3268
    %v3993 = vunpack.c.l.b16 %v3269
    %v3994 = vunpack.c.h.b16 %v3269
    %v3995 = vunpack.c.l.b16 %v3270
    %v3996 = vunpack.c.h.b16 %v3270
    %v3997 = vunpack.c.l.b16 %v3271
    %v3998 = vunpack.c.h.b16 %v3271
    %v3999 = vunpack.c.l.b16 %v3272
    %v4000 = vunpack.c.h.b16 %v3272
    %v4001 = vunpack.c.l.b16 %v3273
    %v4002 = vunpack.c.h.b16 %v3273
    %v4003 = vunpack.c.l.b16 %v3274
    %v4004 = vunpack.c.h.b16 %v3274
    %v4005 = vunpack.c.l.b16 %v3275
    %v4006 = vunpack.c.h.b16 %v3275
    %v4007 = vunpack.c.l.b16 %v3276
    %v4008 = vunpack.c.h.b16 %v3276
    %v4009 = vunpack.c.l.b16 %v3277
    %v4010 = vunpack.c.h.b16 %v3277
    %v4011 = vunpack.c.l.b16 %v3278
    %v4012 = vunpack.c.h.b16 %v3278
    %v4013 = vunpack.c.l.b16 %v3279
    %v4014 = vunpack.c.h.b16 %v3279
    %v4015 = vunpack.c.l.b16 %v3280
    %v4016 = vunpack.c.h.b16 %v3280
    %v4017 = vunpack.c.l.b16 %v3281
    %v4018 = vunpack.c.h.b16 %v3281
    %v4019 = vunpack.c.l.b16 %v3282
    %v4020 = vunpack.c.h.b16 %v3282
    %v4021 = vunpack.c.l.b16 %v3283
    %v4022 = vunpack.c.h.b16 %v3283
    %v4023 = vunpack.c.l.b16 %v3284
    %v4024 = vunpack.c.h.b16 %v3284
    %v4025 = vunpack.c.l.b16 %v3285
    %v4026 = vunpack.c.h.b16 %v3285
    %v4027 = vunpack.c.l.b16 %v3286
    %v4028 = vunpack.c.h.b16 %v3286
    %v4029 = vunpack.c.l.b16 %v3287
    %v4030 = vunpack.c.h.b16 %v3287
    %v4031 = vunpack.c.l.b16 %v3288
    %v4032 = vunpack.c.h.b16 %v3288
    %v4033 = vunpack.c.l.b16 %v3289
    %v4034 = vunpack.c.h.b16 %v3289
    %v4035 = vunpack.c.l.b16 %v3290
    %v4036 = vunpack.c.h.b16 %v3290
    %v4037 = vunpack.c.l.b16 %v3291
    %v4038 = vunpack.c.h.b16 %v3291
    %v4039 = vunpack.c.l.b16 %v3292
    %v4040 = vunpack.c.h.b16 %v3292
    %v4041 = vunpack.c.l.b16 %v3293
    %v4042 = vunpack.c.h.b16 %v3293
    %v4043 = vunpack.c.l.b16 %v3294
    %v4044 = vunpack.c.h.b16 %v3294
    %v4045 = vunpack.c.l.b16 %v3295
    %v4046 = vunpack.c.h.b16 %v3295
    %v4047 = vunpack.c.l.b16 %v3296
    %v4048 = vunpack.c.h.b16 %v3296
    %v4049 = vunpack.c.l.b16 %v3297
    %v4050 = vunpack.c.h.b16 %v3297
    %v4051 = vunpack.c.l.b16 %v3298
    %v4052 = vunpack.c.h.b16 %v3298
    %v4053 = vunpack.c.l.b16 %v3299
    %v4054 = vunpack.c.h.b16 %v3299
    %v4055 = vunpack.c.l.b16 %v3300
    %v4056 = vunpack.c.h.b16 %v3300
    %v4057 = vunpack.c.l.b16 %v3301
    %v4058 = vunpack.c.h.b16 %v3301
    %v4059 = vunpack.c.l.b16 %v3302
    %v4060 = vunpack.c.h.b16 %v3302
    %v4061 = vunpack.c.l.b16 %v3303
    %v4062 = vunpack.c.h.b16 %v3303
    %v4063 = vunpack.c.l.b16 %v3304
    %v4064 = vunpack.c.h.b16 %v3304
    %v4065 = vunpack.c.l.b16 %v3305
    %v4066 = vunpack.c.h.b16 %v3305
    %v4067 = vunpack.c.l.b16 %v3306
    %v4068 = vunpack.c.h.b16 %v3306
    %v4069 = vunpack.c.l.b16 %v3307
    %v4070 = vunpack.c.h.b16 %v3307
    %v4071 = vunpack.c.l.b16 %v3308
    %v4072 = vunpack.c.h.b16 %v3308
    %v4073 = vunpack.c.l.b16 %v3309
    %v4074 = vunpack.c.h.b16 %v3309
    %v4075 = vunpack.c.l.b16 %v3310
    %v4076 = vunpack.c.h.b16 %v3310
    %v4077 = vunpack.c.l.b16 %v3311
    %v4078 = vunpack.c.h.b16 %v3311
    %v4079 = vunpack.c.l.b16 %v3312
    %v4080 = vunpack.c.h.b16 %v3312
    %v4081 = vunpack.c.l.b16 %v3313
    %v4082 = vunpack.c.h.b16 %v3313
    %v4083 = vunpack.c.l.b16 %v3314
    %v4084 = vunpack.c.h.b16 %v3314
    %v4085 = vunpack.c.l.b16 %v3315
    %v4086 = vunpack.c.h.b16 %v3315
    %v4087 = vunpack.c.l.b16 %v3316
    %v4088 = vunpack.c.h.b16 %v3316
    %v4089 = vunpack.c.l.b16 %v3317
    %v4090 = vunpack.c.h.b16 %v3317
    %v4091 = vunpack.c.l.b16 %v3318
    %v4092 = vunpack.c.h.b16 %v3318
    %v4093 = vunpack.c.l.b16 %v3319
    %v4094 = vunpack.c.h.b16 %v3319
    %v4095 = vunpack.c.l.b16 %v3320
    %v4096 = vunpack.c.h.b16 %v3320
    %v4097 = vunpack.c.l.b16 %v3321
    %v4098 = vunpack.c.h.b16 %v3321
    %v4099 = vunpack.c.l.b16 %v3322
    %v4100 = vunpack.c.h.b16 %v3322
    %v4101 = vpack.c.b16 %v3593, %v3589
    %v4102 = vpack.c.b16 %v3594, %v3590
    %v4103 = vpack.c.b16 %v3595, %v3591
    %v4104 = vpack.c.b16 %v3596, %v3592
    %v4105 = vpack.c.b16 %v3601, %v3597
    %v4106 = vpack.c.b16 %v3602, %v3598
    %v4107 = vpack.c.b16 %v3603, %v3599
    %v4108 = vpack.c.b16 %v3604, %v3600
    %v4109 = vpack.c.b16 %v3609, %v3605
    %v4110 = vpack.c.b16 %v3610, %v3606
    %v4111 = vpack.c.b16 %v3611, %v3607
    %v4112 = vpack.c.b16 %v3612, %v3608
    %v4113 = vpack.c.b16 %v3617, %v3613
    %v4114 = vpack.c.b16 %v3618, %v3614
    %v4115 = vpack.c.b16 %v3619, %v3615
    %v4116 = vpack.c.b16 %v3620, %v3616
    %v4117 = vpack.c.b16 %v3625, %v3621
    %v4118 = vpack.c.b16 %v3626, %v3622
    %v4119 = vpack.c.b16 %v3627, %v3623
    %v4120 = vpack.c.b16 %v3628, %v3624
    %v4121 = vpack.c.b16 %v3633, %v3629
    %v4122 = vpack.c.b16 %v3634, %v3630
    %v4123 = vpack.c.b16 %v3635, %v3631
    %v4124 = vpack.c.b16 %v3636, %v3632
    %v4125 = vpack.c.b16 %v3641, %v3637
    %v4126 = vpack.c.b16 %v3642, %v3638
    %v4127 = vpack.c.b16 %v3643, %v3639
    %v4128 = vpack.c.b16 %v3644, %v3640
    %v4129 = vpack.c.b16 %v3649, %v3645
    %v4130 = vpack.c.b16 %v3650, %v3646
    %v4131 = vpack.c.b16 %v3651, %v3647
    %v4132 = vpack.c.b16 %v3652, %v3648
    %v4133 = vpack.c.b16 %v3657, %v3653
    %v4134 = vpack.c.b16 %v3658, %v3654
    %v4135 = vpack.c.b16 %v3659, %v3655
    %v4136 = vpack.c.b16 %v3660, %v3656
    %v4137 = vpack.c.b16 %v3665, %v3661
    %v4138 = vpack.c.b16 %v3666, %v3662
    %v4139 = vpack.c.b16 %v3667, %v3663
    %v4140 = vpack.c.b16 %v3668, %v3664
    %v4141 = vpack.c.b16 %v3673, %v3669
    %v4142 = vpack.c.b16 %v3674, %v3670
    %v4143 = vpack.c.b16 %v3675, %v3671
    %v4144 = vpack.c.b16 %v3676, %v3672
    %v4145 = vpack.c.b16 %v3681, %v3677
    %v4146 = vpack.c.b16 %v3682, %v3678
    %v4147 = vpack.c.b16 %v3683, %v3679
    %v4148 = vpack.c.b16 %v3684, %v3680
    %v4149 = vpack.c.b16 %v3689, %v3685
    %v4150 = vpack.c.b16 %v3690, %v3686
    %v4151 = vpack.c.b16 %v3691, %v3687
    %v4152 = vpack.c.b16 %v3692, %v3688
    %v4153 = vpack.c.b16 %v3697, %v3693
    %v4154 = vpack.c.b16 %v3698, %v3694
    %v4155 = vpack.c.b16 %v3699, %v3695
    %v4156 = vpack.c.b16 %v3700, %v3696
    %v4157 = vpack.c.b16 %v3705, %v3701
    %v4158 = vpack.c.b16 %v3706, %v3702
    %v4159 = vpack.c.b16 %v3707, %v3703
    %v4160 = vpack.c.b16 %v3708, %v3704
    %v4161 = vpack.c.b16 %v3713, %v3709
    %v4162 = vpack.c.b16 %v3714, %v3710
    %v4163 = vpack.c.b16 %v3715, %v3711
    %v4164 = vpack.c.b16 %v3716, %v3712
    %v4165 = vpack.c.b16 %v3721, %v3717
    %v4166 = vpack.c.b16 %v3722, %v3718
    %v4167 = vpack.c.b16 %v3723, %v3719
    %v4168 = vpack.c.b16 %v3724, %v3720
    %v4169 = vpack.c.b16 %v3729, %v3725
    %v4170 = vpack.c.b16 %v3730, %v3726
    %v4171 = vpack.c.b16 %v3731, %v3727
    %v4172 = vpack.c.b16 %v3732, %v3728
    %v4173 = vpack.c.b16 %v3737, %v3733
    %v4174 = vpack.c.b16 %v3738, %v3734
    %v4175 = vpack.c.b16 %v3739, %v3735
    %v4176 = vpack.c.b16 %v3740, %v3736
    %v4177 = vpack.c.b16 %v3745, %v3741
    %v4178 = vpack.c.b16 %v3746, %v3742
    %v4179 = vpack.c.b16 %v3747, %v3743
    %v4180 = vpack.c.b16 %v3748, %v3744
    %v4181 = vpack.c.b16 %v3753, %v3749
    %v4182 = vpack.c.b16 %v3754, %v3750
    %v4183 = vpack.c.b16 %v3755, %v3751
    %v4184 = vpack.c.b16 %v3756, %v3752
    %v4185 = vpack.c.b16 %v3761, %v3757
    %v4186 = vpack.c.b16 %v3762, %v3758
    %v4187 = vpack.c.b16 %v3763, %v3759
    %v4188 = vpack.c.b16 %v3764, %v3760
    %v4189 = vpack.c.b16 %v3769, %v3765
    %v4190 = vpack.c.b16 %v3770, %v3766
    %v4191 = vpack.c.b16 %v3771, %v3767
    %v4192 = vpack.c.b16 %v3772, %v3768
    %v4193 = vpack.c.b16 %v3777, %v3773
    %v4194 = vpack.c.b16 %v3778, %v3774
    %v4195 = vpack.c.b16 %v3779, %v3775
    %v4196 = vpack.c.b16 %v3780, %v3776
    %v4197 = vpack.c.b16 %v3785, %v3781
    %v4198 = vpack.c.b16 %v3786, %v3782
    %v4199 = vpack.c.b16 %v3787, %v3783
    %v4200 = vpack.c.b16 %v3788, %v3784
    %v4201 = vpack.c.b16 %v3793, %v3789
    %v4202 = vpack.c.b16 %v3794, %v3790
    %v4203 = vpack.c.b16 %v3795, %v3791
    %v4204 = vpack.c.b16 %v3796, %v3792
    %v4205 = vpack.c.b16 %v3801, %v3797
    %v4206 = vpack.c.b16 %v3802, %v3798
    %v4207 = vpack.c.b16 %v3803, %v3799
    %v4208 = vpack.c.b16 %v3804, %v3800
    %v4209 = vpack.c.b16 %v3809, %v3805
    %v4210 = vpack.c.b16 %v3810, %v3806
    %v4211 = vpack.c.b16 %v3811, %v3807
    %v4212 = vpack.c.b16 %v3812, %v3808
    %v4213 = vpack.c.b16 %v3817, %v3813
    %v4214 = vpack.c.b16 %v3818, %v3814
    %v4215 = vpack.c.b16 %v3819, %v3815
    %v4216 = vpack.c.b16 %v3820, %v3816
    %v4217 = vpack.c.b16 %v3825, %v3821
    %v4218 = vpack.c.b16 %v3826, %v3822
    %v4219 = vpack.c.b16 %v3827, %v3823
    %v4220 = vpack.c.b16 %v3828, %v3824
    %v4221 = vpack.c.b16 %v3833, %v3829
    %v4222 = vpack.c.b16 %v3834, %v3830
    %v4223 = vpack.c.b16 %v3835, %v3831
    %v4224 = vpack.c.b16 %v3836, %v3832
    %v4225 = vpack.c.b16 %v3841, %v3837
    %v4226 = vpack.c.b16 %v3842, %v3838
    %v4227 = vpack.c.b16 %v3843, %v3839
    %v4228 = vpack.c.b16 %v3844, %v3840
    %v4229 = vpack.c.b16 %v3849, %v3845
    %v4230 = vpack.c.b16 %v3850, %v3846
    %v4231 = vpack.c.b16 %v3851, %v3847
    %v4232 = vpack.c.b16 %v3852, %v3848
    %v4233 = vpack.c.b16 %v3857, %v3853
    %v4234 = vpack.c.b16 %v3858, %v3854
    %v4235 = vpack.c.b16 %v3859, %v3855
    %v4236 = vpack.c.b16 %v3860, %v3856
    %v4237 = vpack.c.b16 %v3865, %v3861
    %v4238 = vpack.c.b16 %v3866, %v3862
    %v4239 = vpack.c.b16 %v3867, %v3863
    %v4240 = vpack.c.b16 %v3868, %v3864
    %v4241 = vpack.c.b16 %v3873, %v3869
    %v4242 = vpack.c.b16 %v3874, %v3870
    %v4243 = vpack.c.b16 %v3875, %v3871
    %v4244 = vpack.c.b16 %v3876, %v3872
    %v4245 = vpack.c.b16 %v3881, %v3877
    %v4246 = vpack.c.b16 %v3882, %v3878
    %v4247 = vpack.c.b16 %v3883, %v3879
    %v4248 = vpack.c.b16 %v3884, %v3880
    %v4249 = vpack.c.b16 %v3889, %v3885
    %v4250 = vpack.c.b16 %v3890, %v3886
    %v4251 = vpack.c.b16 %v3891, %v3887
    %v4252 = vpack.c.b16 %v3892, %v3888
    %v4253 = vpack.c.b16 %v3897, %v3893
    %v4254 = vpack.c.b16 %v3898, %v3894
    %v4255 = vpack.c.b16 %v3899, %v3895
    %v4256 = vpack.c.b16 %v3900, %v3896
    %v4257 = vpack.c.b16 %v3905, %v3901
    %v4258 = vpack.c.b16 %v3906, %v3902
    %v4259 = vpack.c.b16 %v3907, %v3903
    %v4260 = vpack.c.b16 %v3908, %v3904
    %v4261 = vpack.c.b16 %v3913, %v3909
    %v4262 = vpack.c.b16 %v3914, %v3910
    %v4263 = vpack.c.b16 %v3915, %v3911
    %v4264 = vpack.c.b16 %v3916, %v3912
    %v4265 = vpack.c.b16 %v3921, %v3917
    %v4266 = vpack.c.b16 %v3922, %v3918
    %v4267 = vpack.c.b16 %v3923, %v3919
    %v4268 = vpack.c.b16 %v3924, %v3920
    %v4269 = vpack.c.b16 %v3929, %v3925
    %v4270 = vpack.c.b16 %v3930, %v3926
    %v4271 = vpack.c.b16 %v3931, %v3927
    %v4272 = vpack.c.b16 %v3932, %v3928
    %v4273 = vpack.c.b16 %v3937, %v3933
    %v4274 = vpack.c.b16 %v3938, %v3934
    %v4275 = vpack.c.b16 %v3939, %v3935
    %v4276 = vpack.c.b16 %v3940, %v3936
    %v4277 = vpack.c.b16 %v3945, %v3941
    %v4278 = vpack.c.b16 %v3946, %v3942
    %v4279 = vpack.c.b16 %v3947, %v3943
    %v4280 = vpack.c.b16 %v3948, %v3944
    %v4281 = vpack.c.b16 %v3953, %v3949
    %v4282 = vpack.c.b16 %v3954, %v3950
    %v4283 = vpack.c.b16 %v3955, %v3951
    %v4284 = vpack.c.b16 %v3956, %v3952
    %v4285 = vpack.c.b16 %v3961, %v3957
    %v4286 = vpack.c.b16 %v3962, %v3958
    %v4287 = vpack.c.b16 %v3963, %v3959
    %v4288 = vpack.c.b16 %v3964, %v3960
    %v4289 = vpack.c.b16 %v3969, %v3965
    %v4290 = vpack.c.b16 %v3970, %v3966
    %v4291 = vpack.c.b16 %v3971, %v3967
    %v4292 = vpack.c.b16 %v3972, %v3968
    %v4293 = vpack.c.b16 %v3977, %v3973
    %v4294 = vpack.c.b16 %v3978, %v3974
    %v4295 = vpack.c.b16 %v3979, %v3975
    %v4296 = vpack.c.b16 %v3980, %v3976
    %v4297 = vpack.c.b16 %v3985, %v3981
    %v4298 = vpack.c.b16 %v3986, %v3982
    %v4299 = vpack.c.b16 %v3987, %v3983
    %v4300 = vpack.c.b16 %v3988, %v3984
    %v4301 = vpack.c.b16 %v3993, %v3989
    %v4302 = vpack.c.b16 %v3994, %v3990
    %v4303 = vpack.c.b16 %v3995, %v3991
    %v4304 = vpack.c.b16 %v3996, %v3992
    %v4305 = vpack.c.b16 %v4001, %v3997
    %v4306 = vpack.c.b16 %v4002, %v3998
    %v4307 = vpack.c.b16 %v4003, %v3999
    %v4308 = vpack.c.b16 %v4004, %v4000
    %v4309 = vpack.c.b16 %v4009, %v4005
    %v4310 = vpack.c.b16 %v4010, %v4006
    %v4311 = vpack.c.b16 %v4011, %v4007
    %v4312 = vpack.c.b16 %v4012, %v4008
    %v4313 = vpack.c.b16 %v4017, %v4013
    %v4314 = vpack.c.b16 %v4018, %v4014
    %v4315 = vpack.c.b16 %v4019, %v4015
    %v4316 = vpack.c.b16 %v4020, %v4016
    %v4317 = vpack.c.b16 %v4025, %v4021
    %v4318 = vpack.c.b16 %v4026, %v4022
    %v4319 = vpack.c.b16 %v4027, %v4023
    %v4320 = vpack.c.b16 %v4028, %v4024
    %v4321 = vpack.c.b16 %v4033, %v4029
    %v4322 = vpack.c.b16 %v4034, %v4030
    %v4323 = vpack.c.b16 %v4035, %v4031
    %v4324 = vpack.c.b16 %v4036, %v4032
    %v4325 = vpack.c.b16 %v4041, %v4037
    %v4326 = vpack.c.b16 %v4042, %v4038
    %v4327 = vpack.c.b16 %v4043, %v4039
    %v4328 = vpack.c.b16 %v4044, %v4040
    %v4329 = vpack.c.b16 %v4049, %v4045
    %v4330 = vpack.c.b16 %v4050, %v4046
    %v4331 = vpack.c.b16 %v4051, %v4047
    %v4332 = vpack.c.b16 %v4052, %v4048
    %v4333 = vpack.c.b16 %v4057, %v4053
    %v4334 = vpack.c.b16 %v4058, %v4054
    %v4335 = vpack.c.b16 %v4059, %v4055
    %v4336 = vpack.c.b16 %v4060, %v4056
    %v4337 = vpack.c.b16 %v4065, %v4061
    %v4338 = vpack.c.b16 %v4066, %v4062
    %v4339 = vpack.c.b16 %v4067, %v4063
    %v4340 = vpack.c.b16 %v4068, %v4064
    %v4341 = vpack.c.b16 %v4073, %v4069
    %v4342 = vpack.c.b16 %v4074, %v4070
    %v4343 = vpack.c.b16 %v4075, %v4071
    %v4344 = vpack.c.b16 %v4076, %v4072
    %v4345 = vpack.c.b16 %v4081, %v4077
    %v4346 = vpack.c.b16 %v4082, %v4078
    %v4347 = vpack.c.b16 %v4083, %v4079
    %v4348 = vpack.c.b16 %v4084, %v4080
    %v4349 = vpack.c.b16 %v4089, %v4085
    %v4350 = vpack.c.b16 %v4090, %v4086
    %v4351 = vpack.c.b16 %v4091, %v4087
    %v4352 = vpack.c.b16 %v4092, %v4088
    %v4353 = vpack.c.b16 %v4097, %v4093
    %v4354 = vpack.c.b16 %v4098, %v4094
    %v4355 = vpack.c.b16 %v4099, %v4095
    %v4356 = vpack.c.b16 %v4100, %v4096
    %4613 = vmatpush.bf16.msra.mxu0 %v4129
    %4614 = vmatpush.bf16.msra.mxu0 %v4125
    %4615 = vmatpush.bf16.msra.mxu0 %v4121
    %4616 = vmatpush.bf16.msra.mxu0 %v4117
    %4617 = vmatpush.bf16.msra.mxu0 %v4113
    %4618 = vmatpush.bf16.msra.mxu0 %v4109
    %4619 = vmatpush.bf16.msra.mxu0 %v4105
    %4620 = vmatpush.bf16.msra.mxu0 %v4101
    %4621 = vmatmul.bf16.gmra.mxu0 %v3059
    %v4622 = vpop.f32.mrf.mxu0
    %v4623 = vadd.f32 %v3325, %v4622
    %v4624 = vpop.f32.mrf.mxu0
    %4625 = vdwg.mxu0
    %4626 = vmatpush.bf16.msra.mxu0 %v4161
    %4627 = vmatpush.bf16.msra.mxu0 %v4157
    %4628 = vmatpush.bf16.msra.mxu0 %v4153
    %4629 = vmatpush.bf16.msra.mxu0 %v4149
    %4630 = vmatpush.bf16.msra.mxu0 %v4145
    %4631 = vmatpush.bf16.msra.mxu0 %v4141
    %4632 = vmatpush.bf16.msra.mxu0 %v4137
    %4633 = vmatpush.bf16.msra.mxu0 %v4133
    %4634 = vmatmul.bf16.gmra.mxu0 %v3060
    %v4635 = vpop.f32.mrf.mxu0
    %v4636 = vadd.f32 %v4623, %v4635
    %v4637 = vpop.f32.mrf.mxu0
    %4638 = vdwg.mxu0
    %4639 = vmatpush.bf16.msra.mxu0 %v4193
    %4640 = vmatpush.bf16.msra.mxu0 %v4189
    %4641 = vmatpush.bf16.msra.mxu0 %v4185
    %4642 = vmatpush.bf16.msra.mxu0 %v4181
    %4643 = vmatpush.bf16.msra.mxu0 %v4177
    %4644 = vmatpush.bf16.msra.mxu0 %v4173
    %4645 = vmatpush.bf16.msra.mxu0 %v4169
    %4646 = vmatpush.bf16.msra.mxu0 %v4165
    %4647 = vmatmul.bf16.gmra.mxu0 %v3061
    %v4648 = vpop.f32.mrf.mxu0
    %v4649 = vadd.f32 %v4636, %v4648
    %v4650 = vpop.f32.mrf.mxu0
    %4651 = vdwg.mxu0
    %4652 = vmatpush.bf16.msra.mxu0 %v4225
    %4653 = vmatpush.bf16.msra.mxu0 %v4221
    %4654 = vmatpush.bf16.msra.mxu0 %v4217
    %4655 = vmatpush.bf16.msra.mxu0 %v4213
    %4656 = vmatpush.bf16.msra.mxu0 %v4209
    %4657 = vmatpush.bf16.msra.mxu0 %v4205
    %4658 = vmatpush.bf16.msra.mxu0 %v4201
    %4659 = vmatpush.bf16.msra.mxu0 %v4197
    %4660 = vmatmul.bf16.gmra.mxu0 %v3062
    %v4661 = vpop.f32.mrf.mxu0
    %v4662 = vadd.f32 %v4649, %v4661
    %v4663 = vpop.f32.mrf.mxu0
    %4664 = vdwg.mxu0
    %4665 = vmatpush.bf16.msra.mxu0 %v4257
    %4666 = vmatpush.bf16.msra.mxu0 %v4253
    %4667 = vmatpush.bf16.msra.mxu0 %v4249
    %4668 = vmatpush.bf16.msra.mxu0 %v4245
    %4669 = vmatpush.bf16.msra.mxu0 %v4241
    %4670 = vmatpush.bf16.msra.mxu0 %v4237
    %4671 = vmatpush.bf16.msra.mxu0 %v4233
    %4672 = vmatpush.bf16.msra.mxu0 %v4229
    %4673 = vmatmul.bf16.gmra.mxu0 %v3063
    %v4674 = vpop.f32.mrf.mxu0
    %v4675 = vadd.f32 %v4662, %v4674
    %v4676 = vpop.f32.mrf.mxu0
    %4677 = vdwg.mxu0
    %4678 = vmatpush.bf16.msra.mxu0 %v4289
    %4679 = vmatpush.bf16.msra.mxu0 %v4285
    %4680 = vmatpush.bf16.msra.mxu0 %v4281
    %4681 = vmatpush.bf16.msra.mxu0 %v4277
    %4682 = vmatpush.bf16.msra.mxu0 %v4273
    %4683 = vmatpush.bf16.msra.mxu0 %v4269
    %4684 = vmatpush.bf16.msra.mxu0 %v4265
    %4685 = vmatpush.bf16.msra.mxu0 %v4261
    %4686 = vmatmul.bf16.gmra.mxu0 %v3064
    %v4687 = vpop.f32.mrf.mxu0
    %v4688 = vadd.f32 %v4675, %v4687
    %v4689 = vpop.f32.mrf.mxu0
    %4690 = vdwg.mxu0
    %4691 = vmatpush.bf16.msra.mxu0 %v4321
    %4692 = vmatpush.bf16.msra.mxu0 %v4317
    %4693 = vmatpush.bf16.msra.mxu0 %v4313
    %4694 = vmatpush.bf16.msra.mxu0 %v4309
    %4695 = vmatpush.bf16.msra.mxu0 %v4305
    %4696 = vmatpush.bf16.msra.mxu0 %v4301
    %4697 = vmatpush.bf16.msra.mxu0 %v4297
    %4698 = vmatpush.bf16.msra.mxu0 %v4293
    %4699 = vmatmul.bf16.gmra.mxu0 %v3065
    %v4700 = vpop.f32.mrf.mxu0
    %v4701 = vadd.f32 %v4688, %v4700
    %v4702 = vpop.f32.mrf.mxu0
    %4703 = vdwg.mxu0
    %4704 = vmatpush.bf16.msra.mxu0 %v4353
    %4705 = vmatpush.bf16.msra.mxu0 %v4349
    %4706 = vmatpush.bf16.msra.mxu0 %v4345
    %4707 = vmatpush.bf16.msra.mxu0 %v4341
    %4708 = vmatpush.bf16.msra.mxu0 %v4337
    %4709 = vmatpush.bf16.msra.mxu0 %v4333
    %4710 = vmatpush.bf16.msra.mxu0 %v4329
    %4711 = vmatpush.bf16.msra.mxu0 %v4325
    %4712 = vmatmul.bf16.gmra.mxu0 %v3066
    %v4713 = vpop.f32.mrf.mxu0
    %v4714 = vadd.f32 %v4701, %v4713
    %v4715 = vpop.f32.mrf.mxu0
    %4716 = vdwg.mxu0
    %4717 = vmatpush.bf16.msra.mxu0 %v4130
    %4718 = vmatpush.bf16.msra.mxu0 %v4126
    %4719 = vmatpush.bf16.msra.mxu0 %v4122
    %4720 = vmatpush.bf16.msra.mxu0 %v4118
    %4721 = vmatpush.bf16.msra.mxu0 %v4114
    %4722 = vmatpush.bf16.msra.mxu0 %v4110
    %4723 = vmatpush.bf16.msra.mxu0 %v4106
    %4724 = vmatpush.bf16.msra.mxu0 %v4102
    %4725 = vmatmul.bf16.gmra.mxu0 %v3059
    %v4726 = vpop.f32.mrf.mxu0
    %v4727 = vadd.f32 %v3326, %v4726
    %v4728 = vpop.f32.mrf.mxu0
    %4729 = vdwg.mxu0
    %4730 = vmatpush.bf16.msra.mxu0 %v4162
    %4731 = vmatpush.bf16.msra.mxu0 %v4158
    %4732 = vmatpush.bf16.msra.mxu0 %v4154
    %4733 = vmatpush.bf16.msra.mxu0 %v4150
    %4734 = vmatpush.bf16.msra.mxu0 %v4146
    %4735 = vmatpush.bf16.msra.mxu0 %v4142
    %4736 = vmatpush.bf16.msra.mxu0 %v4138
    %4737 = vmatpush.bf16.msra.mxu0 %v4134
    %4738 = vmatmul.bf16.gmra.mxu0 %v3060
    %v4739 = vpop.f32.mrf.mxu0
    %v4740 = vadd.f32 %v4727, %v4739
    %v4741 = vpop.f32.mrf.mxu0
    %4742 = vdwg.mxu0
    %4743 = vmatpush.bf16.msra.mxu0 %v4194
    %4744 = vmatpush.bf16.msra.mxu0 %v4190
    %4745 = vmatpush.bf16.msra.mxu0 %v4186
    %4746 = vmatpush.bf16.msra.mxu0 %v4182
    %4747 = vmatpush.bf16.msra.mxu0 %v4178
    %4748 = vmatpush.bf16.msra.mxu0 %v4174
    %4749 = vmatpush.bf16.msra.mxu0 %v4170
    %4750 = vmatpush.bf16.msra.mxu0 %v4166
    %4751 = vmatmul.bf16.gmra.mxu0 %v3061
    %v4752 = vpop.f32.mrf.mxu0
    %v4753 = vadd.f32 %v4740, %v4752
    %v4754 = vpop.f32.mrf.mxu0
    %4755 = vdwg.mxu0
    %4756 = vmatpush.bf16.msra.mxu0 %v4226
    %4757 = vmatpush.bf16.msra.mxu0 %v4222
    %4758 = vmatpush.bf16.msra.mxu0 %v4218
    %4759 = vmatpush.bf16.msra.mxu0 %v4214
    %4760 = vmatpush.bf16.msra.mxu0 %v4210
    %4761 = vmatpush.bf16.msra.mxu0 %v4206
    %4762 = vmatpush.bf16.msra.mxu0 %v4202
    %4763 = vmatpush.bf16.msra.mxu0 %v4198
    %4764 = vmatmul.bf16.gmra.mxu0 %v3062
    %v4765 = vpop.f32.mrf.mxu0
    %v4766 = vadd.f32 %v4753, %v4765
    %v4767 = vpop.f32.mrf.mxu0
    %4768 = vdwg.mxu0
    %4769 = vmatpush.bf16.msra.mxu0 %v4258
    %4770 = vmatpush.bf16.msra.mxu0 %v4254
    %4771 = vmatpush.bf16.msra.mxu0 %v4250
    %4772 = vmatpush.bf16.msra.mxu0 %v4246
    %4773 = vmatpush.bf16.msra.mxu0 %v4242
    %4774 = vmatpush.bf16.msra.mxu0 %v4238
    %4775 = vmatpush.bf16.msra.mxu0 %v4234
    %4776 = vmatpush.bf16.msra.mxu0 %v4230
    %4777 = vmatmul.bf16.gmra.mxu0 %v3063
    %v4778 = vpop.f32.mrf.mxu0
    %v4779 = vadd.f32 %v4766, %v4778
    %v4780 = vpop.f32.mrf.mxu0
    %4781 = vdwg.mxu0
    %4782 = vmatpush.bf16.msra.mxu0 %v4290
    %4783 = vmatpush.bf16.msra.mxu0 %v4286
    %4784 = vmatpush.bf16.msra.mxu0 %v4282
    %4785 = vmatpush.bf16.msra.mxu0 %v4278
    %4786 = vmatpush.bf16.msra.mxu0 %v4274
    %4787 = vmatpush.bf16.msra.mxu0 %v4270
    %4788 = vmatpush.bf16.msra.mxu0 %v4266
    %4789 = vmatpush.bf16.msra.mxu0 %v4262
    %4790 = vmatmul.bf16.gmra.mxu0 %v3064
    %v4791 = vpop.f32.mrf.mxu0
    %v4792 = vadd.f32 %v4779, %v4791
    %v4793 = vpop.f32.mrf.mxu0
    %4794 = vdwg.mxu0
    %4795 = vmatpush.bf16.msra.mxu0 %v4322
    %4796 = vmatpush.bf16.msra.mxu0 %v4318
    %4797 = vmatpush.bf16.msra.mxu0 %v4314
    %4798 = vmatpush.bf16.msra.mxu0 %v4310
    %4799 = vmatpush.bf16.msra.mxu0 %v4306
    %4800 = vmatpush.bf16.msra.mxu0 %v4302
    %4801 = vmatpush.bf16.msra.mxu0 %v4298
    %4802 = vmatpush.bf16.msra.mxu0 %v4294
    %4803 = vmatmul.bf16.gmra.mxu0 %v3065
    %v4804 = vpop.f32.mrf.mxu0
    %v4805 = vadd.f32 %v4792, %v4804
    %v4806 = vpop.f32.mrf.mxu0
    %4807 = vdwg.mxu0
    %4808 = vmatpush.bf16.msra.mxu0 %v4354
    %4809 = vmatpush.bf16.msra.mxu0 %v4350
    %4810 = vmatpush.bf16.msra.mxu0 %v4346
    %4811 = vmatpush.bf16.msra.mxu0 %v4342
    %4812 = vmatpush.bf16.msra.mxu0 %v4338
    %4813 = vmatpush.bf16.msra.mxu0 %v4334
    %4814 = vmatpush.bf16.msra.mxu0 %v4330
    %4815 = vmatpush.bf16.msra.mxu0 %v4326
    %4816 = vmatmul.bf16.gmra.mxu0 %v3066
    %v4817 = vpop.f32.mrf.mxu0
    %v4818 = vadd.f32 %v4805, %v4817
    %v4819 = vpop.f32.mrf.mxu0
    %4820 = vdwg.mxu0
    %4821 = vmatpush.bf16.msra.mxu0 %v4131
    %4822 = vmatpush.bf16.msra.mxu0 %v4127
    %4823 = vmatpush.bf16.msra.mxu0 %v4123
    %4824 = vmatpush.bf16.msra.mxu0 %v4119
    %4825 = vmatpush.bf16.msra.mxu0 %v4115
    %4826 = vmatpush.bf16.msra.mxu0 %v4111
    %4827 = vmatpush.bf16.msra.mxu0 %v4107
    %4828 = vmatpush.bf16.msra.mxu0 %v4103
    %4829 = vmatmul.bf16.gmra.mxu0 %v3059
    %v4830 = vpop.f32.mrf.mxu0
    %v4831 = vadd.f32 %v3327, %v4830
    %v4832 = vpop.f32.mrf.mxu0
    %4833 = vdwg.mxu0
    %4834 = vmatpush.bf16.msra.mxu0 %v4163
    %4835 = vmatpush.bf16.msra.mxu0 %v4159
    %4836 = vmatpush.bf16.msra.mxu0 %v4155
    %4837 = vmatpush.bf16.msra.mxu0 %v4151
    %4838 = vmatpush.bf16.msra.mxu0 %v4147
    %4839 = vmatpush.bf16.msra.mxu0 %v4143
    %4840 = vmatpush.bf16.msra.mxu0 %v4139
    %4841 = vmatpush.bf16.msra.mxu0 %v4135
    %4842 = vmatmul.bf16.gmra.mxu0 %v3060
    %v4843 = vpop.f32.mrf.mxu0
    %v4844 = vadd.f32 %v4831, %v4843
    %v4845 = vpop.f32.mrf.mxu0
    %4846 = vdwg.mxu0
    %4847 = vmatpush.bf16.msra.mxu0 %v4195
    %4848 = vmatpush.bf16.msra.mxu0 %v4191
    %4849 = vmatpush.bf16.msra.mxu0 %v4187
    %4850 = vmatpush.bf16.msra.mxu0 %v4183
    %4851 = vmatpush.bf16.msra.mxu0 %v4179
    %4852 = vmatpush.bf16.msra.mxu0 %v4175
    %4853 = vmatpush.bf16.msra.mxu0 %v4171
    %4854 = vmatpush.bf16.msra.mxu0 %v4167
    %4855 = vmatmul.bf16.gmra.mxu0 %v3061
    %v4856 = vpop.f32.mrf.mxu0
    %v4857 = vadd.f32 %v4844, %v4856
    %v4858 = vpop.f32.mrf.mxu0
    %4859 = vdwg.mxu0
    %4860 = vmatpush.bf16.msra.mxu0 %v4227
    %4861 = vmatpush.bf16.msra.mxu0 %v4223
    %4862 = vmatpush.bf16.msra.mxu0 %v4219
    %4863 = vmatpush.bf16.msra.mxu0 %v4215
    %4864 = vmatpush.bf16.msra.mxu0 %v4211
    %4865 = vmatpush.bf16.msra.mxu0 %v4207
    %4866 = vmatpush.bf16.msra.mxu0 %v4203
    %4867 = vmatpush.bf16.msra.mxu0 %v4199
    %4868 = vmatmul.bf16.gmra.mxu0 %v3062
    %v4869 = vpop.f32.mrf.mxu0
    %v4870 = vadd.f32 %v4857, %v4869
    %v4871 = vpop.f32.mrf.mxu0
    %4872 = vdwg.mxu0
    %4873 = vmatpush.bf16.msra.mxu0 %v4259
    %4874 = vmatpush.bf16.msra.mxu0 %v4255
    %4875 = vmatpush.bf16.msra.mxu0 %v4251
    %4876 = vmatpush.bf16.msra.mxu0 %v4247
    %4877 = vmatpush.bf16.msra.mxu0 %v4243
    %4878 = vmatpush.bf16.msra.mxu0 %v4239
    %4879 = vmatpush.bf16.msra.mxu0 %v4235
    %4880 = vmatpush.bf16.msra.mxu0 %v4231
    %4881 = vmatmul.bf16.gmra.mxu0 %v3063
    %v4882 = vpop.f32.mrf.mxu0
    %v4883 = vadd.f32 %v4870, %v4882
    %v4884 = vpop.f32.mrf.mxu0
    %4885 = vdwg.mxu0
    %4886 = vmatpush.bf16.msra.mxu0 %v4291
    %4887 = vmatpush.bf16.msra.mxu0 %v4287
    %4888 = vmatpush.bf16.msra.mxu0 %v4283
    %4889 = vmatpush.bf16.msra.mxu0 %v4279
    %4890 = vmatpush.bf16.msra.mxu0 %v4275
    %4891 = vmatpush.bf16.msra.mxu0 %v4271
    %4892 = vmatpush.bf16.msra.mxu0 %v4267
    %4893 = vmatpush.bf16.msra.mxu0 %v4263
    %4894 = vmatmul.bf16.gmra.mxu0 %v3064
    %v4895 = vpop.f32.mrf.mxu0
    %v4896 = vadd.f32 %v4883, %v4895
    %v4897 = vpop.f32.mrf.mxu0
    %4898 = vdwg.mxu0
    %4899 = vmatpush.bf16.msra.mxu0 %v4323
    %4900 = vmatpush.bf16.msra.mxu0 %v4319
    %4901 = vmatpush.bf16.msra.mxu0 %v4315
    %4902 = vmatpush.bf16.msra.mxu0 %v4311
    %4903 = vmatpush.bf16.msra.mxu0 %v4307
    %4904 = vmatpush.bf16.msra.mxu0 %v4303
    %4905 = vmatpush.bf16.msra.mxu0 %v4299
    %4906 = vmatpush.bf16.msra.mxu0 %v4295
    %4907 = vmatmul.bf16.gmra.mxu0 %v3065
    %v4908 = vpop.f32.mrf.mxu0
    %v4909 = vadd.f32 %v4896, %v4908
    %v4910 = vpop.f32.mrf.mxu0
    %4911 = vdwg.mxu0
    %4912 = vmatpush.bf16.msra.mxu0 %v4355
    %4913 = vmatpush.bf16.msra.mxu0 %v4351
    %4914 = vmatpush.bf16.msra.mxu0 %v4347
    %4915 = vmatpush.bf16.msra.mxu0 %v4343
    %4916 = vmatpush.bf16.msra.mxu0 %v4339
    %4917 = vmatpush.bf16.msra.mxu0 %v4335
    %4918 = vmatpush.bf16.msra.mxu0 %v4331
    %4919 = vmatpush.bf16.msra.mxu0 %v4327
    %4920 = vmatmul.bf16.gmra.mxu0 %v3066
    %v4921 = vpop.f32.mrf.mxu0
    %v4922 = vadd.f32 %v4909, %v4921
    %v4923 = vpop.f32.mrf.mxu0
    %4924 = vdwg.mxu0
    %4925 = vmatpush.bf16.msra.mxu0 %v4132
    %4926 = vmatpush.bf16.msra.mxu0 %v4128
    %4927 = vmatpush.bf16.msra.mxu0 %v4124
    %4928 = vmatpush.bf16.msra.mxu0 %v4120
    %4929 = vmatpush.bf16.msra.mxu0 %v4116
    %4930 = vmatpush.bf16.msra.mxu0 %v4112
    %4931 = vmatpush.bf16.msra.mxu0 %v4108
    %4932 = vmatpush.bf16.msra.mxu0 %v4104
    %4933 = vmatmul.bf16.gmra.mxu0 %v3059
    %v4934 = vpop.f32.mrf.mxu0
    %v4935 = vadd.f32 %v3328, %v4934
    %v4936 = vpop.f32.mrf.mxu0
    %4937 = vdwg.mxu0
    %4938 = vmatpush.bf16.msra.mxu0 %v4164
    %4939 = vmatpush.bf16.msra.mxu0 %v4160
    %4940 = vmatpush.bf16.msra.mxu0 %v4156
    %4941 = vmatpush.bf16.msra.mxu0 %v4152
    %4942 = vmatpush.bf16.msra.mxu0 %v4148
    %4943 = vmatpush.bf16.msra.mxu0 %v4144
    %4944 = vmatpush.bf16.msra.mxu0 %v4140
    %4945 = vmatpush.bf16.msra.mxu0 %v4136
    %4946 = vmatmul.bf16.gmra.mxu0 %v3060
    %v4947 = vpop.f32.mrf.mxu0
    %v4948 = vadd.f32 %v4935, %v4947
    %v4949 = vpop.f32.mrf.mxu0
    %4950 = vdwg.mxu0
    %4951 = vmatpush.bf16.msra.mxu0 %v4196
    %4952 = vmatpush.bf16.msra.mxu0 %v4192
    %4953 = vmatpush.bf16.msra.mxu0 %v4188
    %4954 = vmatpush.bf16.msra.mxu0 %v4184
    %4955 = vmatpush.bf16.msra.mxu0 %v4180
    %4956 = vmatpush.bf16.msra.mxu0 %v4176
    %4957 = vmatpush.bf16.msra.mxu0 %v4172
    %4958 = vmatpush.bf16.msra.mxu0 %v4168
    %4959 = vmatmul.bf16.gmra.mxu0 %v3061
    %v4960 = vpop.f32.mrf.mxu0
    %v4961 = vadd.f32 %v4948, %v4960
    %v4962 = vpop.f32.mrf.mxu0
    %4963 = vdwg.mxu0
    %4964 = vmatpush.bf16.msra.mxu0 %v4228
    %4965 = vmatpush.bf16.msra.mxu0 %v4224
    %4966 = vmatpush.bf16.msra.mxu0 %v4220
    %4967 = vmatpush.bf16.msra.mxu0 %v4216
    %4968 = vmatpush.bf16.msra.mxu0 %v4212
    %4969 = vmatpush.bf16.msra.mxu0 %v4208
    %4970 = vmatpush.bf16.msra.mxu0 %v4204
    %4971 = vmatpush.bf16.msra.mxu0 %v4200
    %4972 = vmatmul.bf16.gmra.mxu0 %v3062
    %v4973 = vpop.f32.mrf.mxu0
    %v4974 = vadd.f32 %v4961, %v4973
    %v4975 = vpop.f32.mrf.mxu0
    %4976 = vdwg.mxu0
    %4977 = vmatpush.bf16.msra.mxu0 %v4260
    %4978 = vmatpush.bf16.msra.mxu0 %v4256
    %4979 = vmatpush.bf16.msra.mxu0 %v4252
    %4980 = vmatpush.bf16.msra.mxu0 %v4248
    %4981 = vmatpush.bf16.msra.mxu0 %v4244
    %4982 = vmatpush.bf16.msra.mxu0 %v4240
    %4983 = vmatpush.bf16.msra.mxu0 %v4236
    %4984 = vmatpush.bf16.msra.mxu0 %v4232
    %4985 = vmatmul.bf16.gmra.mxu0 %v3063
    %v4986 = vpop.f32.mrf.mxu0
    %v4987 = vadd.f32 %v4974, %v4986
    %v4988 = vpop.f32.mrf.mxu0
    %4989 = vdwg.mxu0
    %4990 = vmatpush.bf16.msra.mxu0 %v4292
    %4991 = vmatpush.bf16.msra.mxu0 %v4288
    %4992 = vmatpush.bf16.msra.mxu0 %v4284
    %4993 = vmatpush.bf16.msra.mxu0 %v4280
    %4994 = vmatpush.bf16.msra.mxu0 %v4276
    %4995 = vmatpush.bf16.msra.mxu0 %v4272
    %4996 = vmatpush.bf16.msra.mxu0 %v4268
    %4997 = vmatpush.bf16.msra.mxu0 %v4264
    %4998 = vmatmul.bf16.gmra.mxu0 %v3064
    %v4999 = vpop.f32.mrf.mxu0
    %v5000 = vadd.f32 %v4987, %v4999
    %v5001 = vpop.f32.mrf.mxu0
    %5002 = vdwg.mxu0
    %5003 = vmatpush.bf16.msra.mxu0 %v4324
    %5004 = vmatpush.bf16.msra.mxu0 %v4320
    %5005 = vmatpush.bf16.msra.mxu0 %v4316
    %5006 = vmatpush.bf16.msra.mxu0 %v4312
    %5007 = vmatpush.bf16.msra.mxu0 %v4308
    %5008 = vmatpush.bf16.msra.mxu0 %v4304
    %5009 = vmatpush.bf16.msra.mxu0 %v4300
    %5010 = vmatpush.bf16.msra.mxu0 %v4296
    %5011 = vmatmul.bf16.gmra.mxu0 %v3065
    %v5012 = vpop.f32.mrf.mxu0
    %v5013 = vadd.f32 %v5000, %v5012
    %v5014 = vpop.f32.mrf.mxu0
    %5015 = vdwg.mxu0
    %5016 = vmatpush.bf16.msra.mxu0 %v4356
    %5017 = vmatpush.bf16.msra.mxu0 %v4352
    %5018 = vmatpush.bf16.msra.mxu0 %v4348
    %5019 = vmatpush.bf16.msra.mxu0 %v4344
    %5020 = vmatpush.bf16.msra.mxu0 %v4340
    %5021 = vmatpush.bf16.msra.mxu0 %v4336
    %5022 = vmatpush.bf16.msra.mxu0 %v4332
    %5023 = vmatpush.bf16.msra.mxu0 %v4328
    %5024 = vmatmul.bf16.gmra.mxu0 %v3066
    %v5025 = vpop.f32.mrf.mxu0
    %v5026 = vadd.f32 %v5013, %v5025
    %v5027 = vpop.f32.mrf.mxu0
    %5028 = vdwg.mxu0
    %v5029 = vmax.f32 %v4714, 0.0
    %v5030 = vmax.f32 %v4818, 0.0
    %v5031 = vmax.f32 %v4922, 0.0
    %v5032 = vmax.f32 %v5026, 0.0
    %5033 = vst [vmem:[#allocation11] sm:$0xff] %v5029
    %5034 = vst [vmem:[#allocation11 + $0x8] sm:$0xff] %v5030
    %5035 = vst [vmem:[#allocation11 + $0x10] sm:$0xff] %v5031
    %5036 = vst [vmem:[#allocation11 + $0x18] sm:$0xff] %v5032
    // Predicated region
    $region42: #{_mlp_pallas.1} parent=1 // pred_check
      _
    $region43: #{_mlp_pallas.1} parent=1 // pred_check_branch
      %5038 = sbr.rel (0) target = $region45
    $region44: #{_mlp_pallas.1} parent=1 // pred_region
      %5040 = vsyncadd [#allocation4], 0
      %s5042 = sshll.u32 [#allocation11], 4
      %s5043 = int_to_ptr.vmem [resolvable:$true] %s5042
      %s5044 = sshll.u32 %s5, 4
      %s5045 = int_to_ptr.hbm [resolvable:$true] %s5044
      %5047 = dma.vmem_to_hbm [thread:$0]  %s5043, 512, %s5045, [#allocation4]
    $region45: #{_mlp_pallas.1} parent=1 // pred_fallthru
      _
    // Predicated region
    $region46: #{_mlp_pallas.1} parent=1 // pred_check
      _
    $region47: #{_mlp_pallas.1} parent=1 // pred_check_branch
      %5049 = sbr.rel (0) target = $region49
    $region48: #{_mlp_pallas.1} parent=1 // pred_region
      %5051 = dma.done [#allocation4], 512
    $region49: #{_mlp_pallas.1} parent=1 // pred_fallthru
      _
    %5052 = vsyncpa [#allocation3], 1
    %5053 = vsyncpa [#allocation6], 1
    %5054 = vsyncpa [#allocation9], 1
    %5055 = vsyncpa [#allocation4], 1

</llo_original>
